<compile_context>
chip_gen: v7x
topology: tpu7x:2x2x1
jax: 0.10.0
libtpu: 0.0.40
codegen_flags: <defaults>
</compile_context>

<pallas_src>
import functools
import math

import jax
import jax.numpy as jnp
from jax.experimental import pallas as pl
from jax.experimental.pallas import tpu as pltpu

DIM = 64            # embedding dim (divisible by 8 heads -> head_dim = 8)
HEADS = 8           # hard-wired to 8 by the PyTorch defaults
NUM_FEATURES = 8    # clinical tokens (excluding global token)
NUM_PATCHES = 16    # image tokens   (excluding global token)
BATCH = 2
LN_EPS = 1e-5


# --------------------------------------------------------------------------- #
# elementwise helpers (f32, VPU/EUP only)
# --------------------------------------------------------------------------- #
def _erf(x):
    # torch nn.GELU() is the exact (erf) form. Mosaic has no guaranteed erf
    # primitive, so compute erf with the Numerical-Recipes erfc polynomial
    # (abs. error < 1.2e-7, i.e. float32-exact). Uses only exp/mul/add/where.
    a = jnp.abs(x)
    t = 1.0 / (1.0 + 0.5 * a)
    poly = -1.26551223 + t * (1.00002368 + t * (0.37409196 + t * (0.09678418 +
           t * (-0.18628806 + t * (0.27886807 + t * (-1.13520398 + t * (1.48851587 +
           t * (-0.82215223 + t * 0.17087277))))))))
    erfc_a = t * jnp.exp(-a * a + poly)
    erf_a = 1.0 - erfc_a
    return jnp.where(x >= 0.0, erf_a, -erf_a)


def _gelu_exact(x):
    return 0.5 * x * (1.0 + _erf(x * (1.0 / math.sqrt(2.0))))


# --------------------------------------------------------------------------- #
# Fused block kernel: one program per batch element, everything VMEM-resident.
# --------------------------------------------------------------------------- #
def _block_kernel(x_ref, clin_ref,
                  ln_g_ref, ln_b_ref,
                  q_w_ref, q_b_ref, kv_w_ref, kv_b_ref,
                  proj_w_ref, proj_b_ref,
                  f1_w_ref, f1_b_ref, f2_w_ref, f2_b_ref,
                  g_w_ref, g_b_ref,
                  o_ref,
                  att_ref,
                  *, num_features, heads, eps):
    x = x_ref[0]                          # (N0, C)  all image tokens
    clin = clin_ref[0]                    # (Nc, C)  all clinical tokens
    C = x.shape[1]
    hd = C // heads

    xt = x[1:, :]                         # drop token 0 -> (N, C)
    gimg = x[1:2, :]                      # "global image" = original token 1
    gclin = clin[0:1, :]                  # global clinical token
    fclin = clin[1:1 + num_features, :]   # (F, C)

    ln_g = ln_g_ref[...]                  # (1, C)
    ln_b = ln_b_ref[...]

    def layernorm(t):
        mu = jnp.mean(t, axis=-1, keepdims=True)
        tc = t - mu
        var = jnp.mean(tc * tc, axis=-1, keepdims=True)
        return tc * jax.lax.rsqrt(var + eps) * ln_g + ln_b

    # --- gating coefficients: fc1(cat([g_clin, g_img], dim=2)) -> alpha, beta
    # (split the (2C,2C) weight instead of concatenating the two tokens)
    g_w = g_w_ref[...]                    # (2C, 2C)
    ba = (jnp.dot(gclin, g_w[:C, :], preferred_element_type=jnp.float32)
          + jnp.dot(gimg, g_w[C:, :], preferred_element_type=jnp.float32)
          + g_b_ref[...])                 # (1, 2C)
    alpha = ba[:, :C]
    beta = ba[:, C:]

    # --- InterMultiHeadAttention: q from image tokens, k/v from clinical -----
    xn = layernorm(xt)
    # qk scale already folded into q_w / q_b by the wrapper
    q = jnp.dot(xn, q_w_ref[...], preferred_element_type=jnp.float32) + q_b_ref[...]    # (N, C)
    kv = jnp.dot(fclin, kv_w_ref[...], preferred_element_type=jnp.float32) + kv_b_ref[...]  # (F, 2C)
    k = kv[:, :C]
    v = kv[:, C:]

    for h in range(heads):                # static unroll: all heads in one program
        lo = h * hd
        qh = q[:, lo:lo + hd]             # (N, hd)
        kh = k[:, lo:lo + hd]             # (F, hd)
        vh = v[:, lo:lo + hd]             # (F, hd)
        s = jax.lax.dot_general(qh, kh, (((1,), (1,)), ((), ())),
                                preferred_element_type=jnp.float32)   # (N, F)
        s = s - jnp.max(s, axis=-1, keepdims=True)
        e = jnp.exp(s)
        probs = e * pl.reciprocal(jnp.sum(e, axis=-1, keepdims=True), approx=True)
        att_ref[:, lo:lo + hd] = jnp.dot(probs, vh,
                                         preferred_element_type=jnp.float32)

    att = (jnp.dot(att_ref[...], proj_w_ref[...],
                   preferred_element_type=jnp.float32) + proj_b_ref[...])     # (N, C)
    x1 = xt * att                         # multiplicative residual gate (per spec)

    # --- FeedForwardBlock (same LN weights reused, per spec) -----------------
    xn2 = layernorm(x1)
    hid = jnp.dot(xn2, f1_w_ref[...], preferred_element_type=jnp.float32) + f1_b_ref[...]
    hid = _gelu_exact(hid)
    ff = jnp.dot(hid, f2_w_ref[...], preferred_element_type=jnp.float32) + f2_b_ref[...]
    x2 = ff + x1
    x3 = x2 * alpha + beta

    # --- re-attach global image token ----------------------------------------
    o_ref[0, 0:1, :] = gimg
    o_ref[0, 1:, :] = x3


def inter_transformer_encoder_block(x, clinical, params, num_features):
    B, N0, C = x.shape
    Nc = clinical.shape[1]
    scale = (C // HEADS) ** (-0.5)

    # fold the qk scale into the q projection (removes in-kernel multiplies)
    q_w = params["q_w"] * scale
    q_b = (params["q_b"] * scale).reshape(1, C)

    weights = [
        params["ln_g"].reshape(1, C), params["ln_b"].reshape(1, C),
        q_w, q_b,
        params["kv_w"], params["kv_b"].reshape(1, 2 * C),
        params["proj_w"], params["proj_b"].reshape(1, C),
        params["ffn1_w"], params["ffn1_b"].reshape(1, 4 * C),
        params["ffn2_w"], params["ffn2_b"].reshape(1, C),
        params["gate_w"], params["gate_b"].reshape(1, 2 * C),
    ]
    w_specs = [pl.BlockSpec(w.shape, lambda b: (0, 0)) for w in weights]

    kernel = functools.partial(_block_kernel, num_features=num_features,
                               heads=HEADS, eps=LN_EPS)
    return pl.pallas_call(
        kernel,
        out_shape=jax.ShapeDtypeStruct((B, N0, C), jnp.float32),
        grid=(B,),
        in_specs=[pl.BlockSpec((1, N0, C), lambda b: (b, 0, 0)),
                  pl.BlockSpec((1, Nc, C), lambda b: (b, 0, 0))] + w_specs,
        out_specs=pl.BlockSpec((1, N0, C), lambda b: (b, 0, 0)),
        scratch_shapes=[pltpu.VMEM((N0 - 1, C), jnp.float32)],   # lane-dense attn out
        compiler_params=pltpu.CompilerParams(
            dimension_semantics=("parallel",)),
    )(x, clinical, *weights)


# --------------------------------------------------------------------------- #
# Pure-JAX reference (mirrors the PyTorch forward) for a correctness check.
# --------------------------------------------------------------------------- #
def reference_block(x, clinical, p, num_features):
    B, N0, C = x.shape
    hd = C // HEADS
    scale = hd ** (-0.5)
    full_clin = clinical[:, 1:num_features + 1, :]
    gclin = clinical[:, 0:1, :]
    xt = x[:, 1:, :]
    gimg = xt[:, 0:1, :]
    gva = jnp.concatenate([gclin, gimg], axis=2)            # (B, 1, 2C)
    ba = (gva @ p["gate_w"] + p["gate_b"]).reshape(B, 2, C)
    alpha = ba[:, 0:1, :]
    beta = ba[:, 1:2, :]

    def ln(t):
        mu = t.mean(-1, keepdims=True)
        var = ((t - mu) ** 2).mean(-1, keepdims=True)
        return (t - mu) * jax.lax.rsqrt(var + LN_EPS) * p["ln_g"] + p["ln_b"]

    xn = ln(xt)
    q = (xn @ p["q_w"] + p["q_b"]) * scale
    kv = full_clin @ p["kv_w"] + p["kv_b"]
    kv = kv.reshape(B, num_features, 2, HEADS, hd).transpose(2, 0, 3, 1, 4)
    k, v = kv[0], kv[1]
    qh = q.reshape(B, -1, HEADS, hd).transpose(0, 2, 1, 3)
    attn = jnp.einsum("bhnd,bhfd->bhnf", qh, k)
    attn = jax.nn.softmax(attn, axis=-1)
    o = jnp.einsum("bhnf,bhfd->bhnd", attn, v).transpose(0, 2, 1, 3).reshape(B, -1, C)
    o = o @ p["proj_w"] + p["proj_b"]
    x1 = xt * o
    h = jax.nn.gelu(ln(x1) @ p["ffn1_w"] + p["ffn1_b"], approximate=False)
    ff = h @ p["ffn2_w"] + p["ffn2_b"]
    x3 = (ff + x1) * alpha + beta
    return jnp.concatenate([gimg, x3], axis=1)


# --------------------------------------------------------------------------- #
# Deterministic parameter init (synthetic weights; torch shapes respected)
# --------------------------------------------------------------------------- #
def _init_linear(key, d_in, d_out):
    kw, kb = jax.random.split(key)
    w = 0.05 * jax.random.normal(kw, (d_in, d_out), jnp.float32)
    b = 0.01 * jax.random.normal(kb, (d_out,), jnp.float32)
    return w, b


def init_params(key, dim):
    ks = jax.random.split(key, 8)
    q_w, q_b = _init_linear(ks[0], dim, dim)
    kv_w, kv_b = _init_linear(ks[1], dim, 2 * dim)
    pr_w, pr_b = _init_linear(ks[2], dim, dim)
    f1_w, f1_b = _init_linear(ks[3], dim, 4 * dim)
    f2_w, f2_b = _init_linear(ks[4], 4 * dim, dim)
    g_w, g_b = _init_linear(ks[5], 2 * dim, 2 * dim)
    return {
        "ln_g": 1.0 + 0.01 * jax.random.normal(ks[6], (dim,), jnp.float32),
        "ln_b": 0.01 * jax.random.normal(ks[7], (dim,), jnp.float32),
        "q_w": q_w, "q_b": q_b, "kv_w": kv_w, "kv_b": kv_b,
        "proj_w": pr_w, "proj_b": pr_b,
        "ffn1_w": f1_w, "ffn1_b": f1_b, "ffn2_w": f2_w, "ffn2_b": f2_b,
        "gate_w": g_w, "gate_b": g_b,
    }


if __name__ == "__main__":
    root = jax.random.PRNGKey(0)
    k_params, k_x, k_c = jax.random.split(root, 3)
    params = init_params(k_params, DIM)
    # x needs num_patches+1 tokens, clinical needs num_features+1 tokens
    x = jax.random.normal(k_x, (BATCH, NUM_PATCHES + 1, DIM), jnp.float32)
    clinical = jax.random.normal(k_c, (BATCH, NUM_FEATURES + 1, DIM), jnp.float32)

    fwd = jax.jit(functools.partial(inter_transformer_encoder_block,
                                    num_features=NUM_FEATURES))
    out = fwd(x, clinical, params)
    jax.block_until_ready(out)
    assert out.shape == (BATCH, NUM_PATCHES + 1, DIM)

    ref = reference_block(x, clinical, params, NUM_FEATURES)
    # loose tolerance only because of pl.reciprocal(approx=True) in softmax
    assert jnp.allclose(out, ref, atol=5e-2, rtol=5e-2), \
        float(jnp.max(jnp.abs(out - ref)))
    print("KERNEL_OK")
</pallas_src>

<mosaic_0001>
module attributes {stable_mosaic.version = 11 : i64} {
  func.func @_block_kernel(%arg0: i32, %arg1: memref<1x17x64xf32, #tpu.memory_space<vmem>>, %arg2: memref<1x9x64xf32, #tpu.memory_space<vmem>>, %arg3: memref<1x64xf32, #tpu.memory_space<vmem>>, %arg4: memref<1x64xf32, #tpu.memory_space<vmem>>, %arg5: memref<64x64xf32, #tpu.memory_space<vmem>>, %arg6: memref<1x64xf32, #tpu.memory_space<vmem>>, %arg7: memref<64x128xf32, #tpu.memory_space<vmem>>, %arg8: memref<1x128xf32, #tpu.memory_space<vmem>>, %arg9: memref<64x64xf32, #tpu.memory_space<vmem>>, %arg10: memref<1x64xf32, #tpu.memory_space<vmem>>, %arg11: memref<64x256xf32, #tpu.memory_space<vmem>>, %arg12: memref<1x256xf32, #tpu.memory_space<vmem>>, %arg13: memref<256x64xf32, #tpu.memory_space<vmem>>, %arg14: memref<1x64xf32, #tpu.memory_space<vmem>>, %arg15: memref<128x128xf32, #tpu.memory_space<vmem>>, %arg16: memref<1x128xf32, #tpu.memory_space<vmem>>, %arg17: memref<1x17x64xf32, #tpu.memory_space<vmem>>, %arg18: memref<16x64xf32, #tpu.memory_space<vmem>>) attributes {dimension_semantics = [#tpu.dimension_semantics<parallel>], iteration_bounds = array<i64: 2>, scalar_prefetch = 0 : i64, scratch_operands = 1 : i64, tpu.core_type = #tpu.core_type<tc>, window_params = [{transform_indices = @transform_0, window_bounds = array<i64: 1, 17, 64>}, {transform_indices = @transform_1, window_bounds = array<i64: 1, 9, 64>}, {pipeline_mode = #tpu.pipeline_mode<synchronous>, transform_indices = @transform_2, window_bounds = array<i64: 1, 64>}, {pipeline_mode = #tpu.pipeline_mode<synchronous>, transform_indices = @transform_3, window_bounds = array<i64: 1, 64>}, {pipeline_mode = #tpu.pipeline_mode<synchronous>, transform_indices = @transform_4, window_bounds = array<i64: 64, 64>}, {pipeline_mode = #tpu.pipeline_mode<synchronous>, transform_indices = @transform_5, window_bounds = array<i64: 1, 64>}, {pipeline_mode = #tpu.pipeline_mode<synchronous>, transform_indices = @transform_6, window_bounds = array<i64: 64, 128>}, {pipeline_mode = #tpu.pipeline_mode<synchronous>, transform_indices = @transform_7, window_bounds = array<i64: 1, 128>}, {pipeline_mode = #tpu.pipeline_mode<synchronous>, transform_indices = @transform_8, window_bounds = array<i64: 64, 64>}, {pipeline_mode = #tpu.pipeline_mode<synchronous>, transform_indices = @transform_9, window_bounds = array<i64: 1, 64>}, {pipeline_mode = #tpu.pipeline_mode<synchronous>, transform_indices = @transform_10, window_bounds = array<i64: 64, 256>}, {pipeline_mode = #tpu.pipeline_mode<synchronous>, transform_indices = @transform_11, window_bounds = array<i64: 1, 256>}, {pipeline_mode = #tpu.pipeline_mode<synchronous>, transform_indices = @transform_12, window_bounds = array<i64: 256, 64>}, {pipeline_mode = #tpu.pipeline_mode<synchronous>, transform_indices = @transform_13, window_bounds = array<i64: 1, 64>}, {pipeline_mode = #tpu.pipeline_mode<synchronous>, transform_indices = @transform_14, window_bounds = array<i64: 128, 128>}, {pipeline_mode = #tpu.pipeline_mode<synchronous>, transform_indices = @transform_15, window_bounds = array<i64: 1, 128>}, {transform_indices = @transform_16, window_bounds = array<i64: 1, 17, 64>}]} {
    %c0 = arith.constant 0 : index
    %c0_0 = arith.constant 0 : index
    %c0_1 = arith.constant 0 : index
    %0 = vector.load %arg1[%c0, %c0_0, %c0_1] : memref<1x17x64xf32, #tpu.memory_space<vmem>>, vector<1x17x64xf32>
    %1 = vector.shape_cast %0 : vector<1x17x64xf32> to vector<17x64xf32>
    %c0_2 = arith.constant 0 : index
    %c0_3 = arith.constant 0 : index
    %c0_4 = arith.constant 0 : index
    %2 = vector.load %arg2[%c0_2, %c0_3, %c0_4] : memref<1x9x64xf32, #tpu.memory_space<vmem>>, vector<1x9x64xf32>
    %3 = vector.shape_cast %2 : vector<1x9x64xf32> to vector<9x64xf32>
    %4 = vector.extract_strided_slice %1 {offsets = [1, 0], sizes = [16, 64], strides = [1, 1]} : vector<17x64xf32> to vector<16x64xf32>
    %5 = vector.extract_strided_slice %1 {offsets = [1, 0], sizes = [1, 64], strides = [1, 1]} : vector<17x64xf32> to vector<1x64xf32>
    %6 = vector.extract_strided_slice %3 {offsets = [0, 0], sizes = [1, 64], strides = [1, 1]} : vector<9x64xf32> to vector<1x64xf32>
    %7 = vector.extract_strided_slice %3 {offsets = [1, 0], sizes = [8, 64], strides = [1, 1]} : vector<9x64xf32> to vector<8x64xf32>
    %c0_5 = arith.constant 0 : index
    %c0_6 = arith.constant 0 : index
    %8 = vector.load %arg3[%c0_5, %c0_6] : memref<1x64xf32, #tpu.memory_space<vmem>>, vector<1x64xf32>
    %c0_7 = arith.constant 0 : index
    %c0_8 = arith.constant 0 : index
    %9 = vector.load %arg4[%c0_7, %c0_8] : memref<1x64xf32, #tpu.memory_space<vmem>>, vector<1x64xf32>
    %c0_9 = arith.constant 0 : index
    %c0_10 = arith.constant 0 : index
    %10 = vector.load %arg15[%c0_9, %c0_10] : memref<128x128xf32, #tpu.memory_space<vmem>>, vector<128x128xf32>
    %11 = vector.extract_strided_slice %10 {offsets = [0, 0], sizes = [64, 128], strides = [1, 1]} : vector<128x128xf32> to vector<64x128xf32>
    %cst = arith.constant dense<0.000000e+00> : vector<1x128xf32>
    %12 = tpu.matmul %6, %11, %cst {dimension_numbers = #tpu.dot_dimension_numbers<[1], [0], [0], [1], [0, 0, 1, 1], [], []>} : vector<1x64xf32>, vector<64x128xf32>, vector<1x128xf32> -> vector<1x128xf32>
    %13 = vector.extract_strided_slice %10 {offsets = [64, 0], sizes = [64, 128], strides = [1, 1]} : vector<128x128xf32> to vector<64x128xf32>
    %cst_11 = arith.constant dense<0.000000e+00> : vector<1x128xf32>
    %14 = tpu.matmul %5, %13, %cst_11 {dimension_numbers = #tpu.dot_dimension_numbers<[1], [0], [0], [1], [0, 0, 1, 1], [], []>} : vector<1x64xf32>, vector<64x128xf32>, vector<1x128xf32> -> vector<1x128xf32>
    %15 = arith.addf %12, %14 : vector<1x128xf32>
    %c0_12 = arith.constant 0 : index
    %c0_13 = arith.constant 0 : index
    %16 = vector.load %arg16[%c0_12, %c0_13] : memref<1x128xf32, #tpu.memory_space<vmem>>, vector<1x128xf32>
    %17 = arith.addf %15, %16 : vector<1x128xf32>
    %18 = vector.extract_strided_slice %17 {offsets = [0, 0], sizes = [1, 64], strides = [1, 1]} : vector<1x128xf32> to vector<1x64xf32>
    %19 = vector.extract_strided_slice %17 {offsets = [0, 64], sizes = [1, 64], strides = [1, 1]} : vector<1x128xf32> to vector<1x64xf32>
    %cst_14 = arith.constant dense<0.000000e+00> : vector<16xf32>
    %20 = vector.multi_reduction <add>, %4, %cst_14 [1] : vector<16x64xf32> to vector<16xf32>
    %21 = vector.shape_cast %20 : vector<16xf32> to vector<16x1xf32>
    %cst_15 = arith.constant 6.400000e+01 : f32
    %22 = vector.broadcast %cst_15 : f32 to vector<16x1xf32>
    %23 = arith.divf %21, %22 : vector<16x1xf32>
    %24 = vector.broadcast %23 : vector<16x1xf32> to vector<16x64xf32>
    %25 = arith.subf %4, %24 : vector<16x64xf32>
    %26 = arith.mulf %25, %25 : vector<16x64xf32>
    %cst_16 = arith.constant dense<0.000000e+00> : vector<16xf32>
    %27 = vector.multi_reduction <add>, %26, %cst_16 [1] : vector<16x64xf32> to vector<16xf32>
    %28 = vector.shape_cast %27 : vector<16xf32> to vector<16x1xf32>
    %cst_17 = arith.constant 6.400000e+01 : f32
    %29 = vector.broadcast %cst_17 : f32 to vector<16x1xf32>
    %30 = arith.divf %28, %29 : vector<16x1xf32>
    %cst_18 = arith.constant 9.99999974E-6 : f32
    %31 = vector.broadcast %cst_18 : f32 to vector<16x1xf32>
    %32 = arith.addf %30, %31 : vector<16x1xf32>
    %33 = math.rsqrt %32 : vector<16x1xf32>
    %34 = vector.broadcast %33 : vector<16x1xf32> to vector<16x64xf32>
    %35 = arith.mulf %25, %34 : vector<16x64xf32>
    %36 = vector.broadcast %8 : vector<1x64xf32> to vector<16x64xf32>
    %37 = arith.mulf %35, %36 : vector<16x64xf32>
    %38 = vector.broadcast %9 : vector<1x64xf32> to vector<16x64xf32>
    %39 = arith.addf %37, %38 : vector<16x64xf32>
    %c0_19 = arith.constant 0 : index
    %c0_20 = arith.constant 0 : index
    %40 = vector.load %arg5[%c0_19, %c0_20] : memref<64x64xf32, #tpu.memory_space<vmem>>, vector<64x64xf32>
    %cst_21 = arith.constant dense<0.000000e+00> : vector<16x64xf32>
    %41 = tpu.matmul %39, %40, %cst_21 {dimension_numbers = #tpu.dot_dimension_numbers<[1], [0], [0], [1], [0, 0, 1, 1], [], []>} : vector<16x64xf32>, vector<64x64xf32>, vector<16x64xf32> -> vector<16x64xf32>
    %c0_22 = arith.constant 0 : index
    %c0_23 = arith.constant 0 : index
    %42 = vector.load %arg6[%c0_22, %c0_23] : memref<1x64xf32, #tpu.memory_space<vmem>>, vector<1x64xf32>
    %43 = vector.broadcast %42 : vector<1x64xf32> to vector<16x64xf32>
    %44 = arith.addf %41, %43 : vector<16x64xf32>
    %c0_24 = arith.constant 0 : index
    %c0_25 = arith.constant 0 : index
    %45 = vector.load %arg7[%c0_24, %c0_25] : memref<64x128xf32, #tpu.memory_space<vmem>>, vector<64x128xf32>
    %cst_26 = arith.constant dense<0.000000e+00> : vector<8x128xf32>
    %46 = tpu.matmul %7, %45, %cst_26 {dimension_numbers = #tpu.dot_dimension_numbers<[1], [0], [0], [1], [0, 0, 1, 1], [], []>} : vector<8x64xf32>, vector<64x128xf32>, vector<8x128xf32> -> vector<8x128xf32>
    %c0_27 = arith.constant 0 : index
    %c0_28 = arith.constant 0 : index
    %47 = vector.load %arg8[%c0_27, %c0_28] : memref<1x128xf32, #tpu.memory_space<vmem>>, vector<1x128xf32>
    %48 = vector.broadcast %47 : vector<1x128xf32> to vector<8x128xf32>
    %49 = arith.addf %46, %48 : vector<8x128xf32>
    %50 = vector.extract_strided_slice %49 {offsets = [0, 0], sizes = [8, 64], strides = [1, 1]} : vector<8x128xf32> to vector<8x64xf32>
    %51 = vector.extract_strided_slice %49 {offsets = [0, 64], sizes = [8, 64], strides = [1, 1]} : vector<8x128xf32> to vector<8x64xf32>
    %52 = vector.extract_strided_slice %44 {offsets = [0, 0], sizes = [16, 8], strides = [1, 1]} : vector<16x64xf32> to vector<16x8xf32>
    %53 = vector.extract_strided_slice %50 {offsets = [0, 0], sizes = [8, 8], strides = [1, 1]} : vector<8x64xf32> to vector<8x8xf32>
    %54 = vector.extract_strided_slice %51 {offsets = [0, 0], sizes = [8, 8], strides = [1, 1]} : vector<8x64xf32> to vector<8x8xf32>
    %cst_29 = arith.constant dense<0.000000e+00> : vector<16x8xf32>
    %55 = tpu.matmul %52, %53, %cst_29 {dimension_numbers = #tpu.dot_dimension_numbers<[1], [1], [0], [0], [0, 0, 1, 0], [], []>} : vector<16x8xf32>, vector<8x8xf32>, vector<16x8xf32> -> vector<16x8xf32>
    %cst_30 = arith.constant dense<0xFF800000> : vector<16xf32>
    %56 = vector.multi_reduction <maximumf>, %55, %cst_30 [1] : vector<16x8xf32> to vector<16xf32>
    %57 = vector.shape_cast %56 : vector<16xf32> to vector<16x1xf32>
    %58 = vector.broadcast %57 : vector<16x1xf32> to vector<16x8xf32>
    %59 = arith.subf %55, %58 : vector<16x8xf32>
    %60 = math.exp %59 : vector<16x8xf32>
    %cst_31 = arith.constant dense<0.000000e+00> : vector<16xf32>
    %61 = vector.multi_reduction <add>, %60, %cst_31 [1] : vector<16x8xf32> to vector<16xf32>
    %62 = vector.shape_cast %61 : vector<16xf32> to vector<16x1xf32>
    %63 = tpu.reciprocal %62 {approx = true} : vector<16x1xf32> -> vector<16x1xf32>
    %64 = vector.broadcast %63 : vector<16x1xf32> to vector<16x8xf32>
    %65 = arith.mulf %60, %64 : vector<16x8xf32>
    %cst_32 = arith.constant dense<0.000000e+00> : vector<16x8xf32>
    %66 = tpu.matmul %65, %54, %cst_32 {dimension_numbers = #tpu.dot_dimension_numbers<[1], [0], [0], [1], [0, 0, 1, 1], [], []>} : vector<16x8xf32>, vector<8x8xf32>, vector<16x8xf32> -> vector<16x8xf32>
    %c0_33 = arith.constant 0 : index
    %c0_34 = arith.constant 0 : index
    %67 = vector.load %arg18[%c0_33, %c0_34] : memref<16x64xf32, #tpu.memory_space<vmem>>, vector<16x8xf32>
    tpu.vector_store %arg18[%c0_33, %c0_34], %66 {strides = array<i32>} : memref<16x64xf32, #tpu.memory_space<vmem>>, vector<16x8xf32>,
    %68 = vector.extract_strided_slice %44 {offsets = [0, 8], sizes = [16, 8], strides = [1, 1]} : vector<16x64xf32> to vector<16x8xf32>
    %69 = vector.extract_strided_slice %50 {offsets = [0, 8], sizes = [8, 8], strides = [1, 1]} : vector<8x64xf32> to vector<8x8xf32>
    %70 = vector.extract_strided_slice %51 {offsets = [0, 8], sizes = [8, 8], strides = [1, 1]} : vector<8x64xf32> to vector<8x8xf32>
    %cst_35 = arith.constant dense<0.000000e+00> : vector<16x8xf32>
    %71 = tpu.matmul %68, %69, %cst_35 {dimension_numbers = #tpu.dot_dimension_numbers<[1], [1], [0], [0], [0, 0, 1, 0], [], []>} : vector<16x8xf32>, vector<8x8xf32>, vector<16x8xf32> -> vector<16x8xf32>
    %cst_36 = arith.constant dense<0xFF800000> : vector<16xf32>
    %72 = vector.multi_reduction <maximumf>, %71, %cst_36 [1] : vector<16x8xf32> to vector<16xf32>
    %73 = vector.shape_cast %72 : vector<16xf32> to vector<16x1xf32>
    %74 = vector.broadcast %73 : vector<16x1xf32> to vector<16x8xf32>
    %75 = arith.subf %71, %74 : vector<16x8xf32>
    %76 = math.exp %75 : vector<16x8xf32>
    %cst_37 = arith.constant dense<0.000000e+00> : vector<16xf32>
    %77 = vector.multi_reduction <add>, %76, %cst_37 [1] : vector<16x8xf32> to vector<16xf32>
    %78 = vector.shape_cast %77 : vector<16xf32> to vector<16x1xf32>
    %79 = tpu.reciprocal %78 {approx = true} : vector<16x1xf32> -> vector<16x1xf32>
    %80 = vector.broadcast %79 : vector<16x1xf32> to vector<16x8xf32>
    %81 = arith.mulf %76, %80 : vector<16x8xf32>
    %cst_38 = arith.constant dense<0.000000e+00> : vector<16x8xf32>
    %82 = tpu.matmul %81, %70, %cst_38 {dimension_numbers = #tpu.dot_dimension_numbers<[1], [0], [0], [1], [0, 0, 1, 1], [], []>} : vector<16x8xf32>, vector<8x8xf32>, vector<16x8xf32> -> vector<16x8xf32>
    %c0_39 = arith.constant 0 : index
    %c8 = arith.constant 8 : index
    %83 = vector.load %arg18[%c0_39, %c8] : memref<16x64xf32, #tpu.memory_space<vmem>>, vector<16x8xf32>
    tpu.vector_store %arg18[%c0_39, %c8], %82 {strides = array<i32>} : memref<16x64xf32, #tpu.memory_space<vmem>>, vector<16x8xf32>,
    %84 = vector.extract_strided_slice %44 {offsets = [0, 16], sizes = [16, 8], strides = [1, 1]} : vector<16x64xf32> to vector<16x8xf32>
    %85 = vector.extract_strided_slice %50 {offsets = [0, 16], sizes = [8, 8], strides = [1, 1]} : vector<8x64xf32> to vector<8x8xf32>
    %86 = vector.extract_strided_slice %51 {offsets = [0, 16], sizes = [8, 8], strides = [1, 1]} : vector<8x64xf32> to vector<8x8xf32>
    %cst_40 = arith.constant dense<0.000000e+00> : vector<16x8xf32>
    %87 = tpu.matmul %84, %85, %cst_40 {dimension_numbers = #tpu.dot_dimension_numbers<[1], [1], [0], [0], [0, 0, 1, 0], [], []>} : vector<16x8xf32>, vector<8x8xf32>, vector<16x8xf32> -> vector<16x8xf32>
    %cst_41 = arith.constant dense<0xFF800000> : vector<16xf32>
    %88 = vector.multi_reduction <maximumf>, %87, %cst_41 [1] : vector<16x8xf32> to vector<16xf32>
    %89 = vector.shape_cast %88 : vector<16xf32> to vector<16x1xf32>
    %90 = vector.broadcast %89 : vector<16x1xf32> to vector<16x8xf32>
    %91 = arith.subf %87, %90 : vector<16x8xf32>
    %92 = math.exp %91 : vector<16x8xf32>
    %cst_42 = arith.constant dense<0.000000e+00> : vector<16xf32>
    %93 = vector.multi_reduction <add>, %92, %cst_42 [1] : vector<16x8xf32> to vector<16xf32>
    %94 = vector.shape_cast %93 : vector<16xf32> to vector<16x1xf32>
    %95 = tpu.reciprocal %94 {approx = true} : vector<16x1xf32> -> vector<16x1xf32>
    %96 = vector.broadcast %95 : vector<16x1xf32> to vector<16x8xf32>
    %97 = arith.mulf %92, %96 : vector<16x8xf32>
    %cst_43 = arith.constant dense<0.000000e+00> : vector<16x8xf32>
    %98 = tpu.matmul %97, %86, %cst_43 {dimension_numbers = #tpu.dot_dimension_numbers<[1], [0], [0], [1], [0, 0, 1, 1], [], []>} : vector<16x8xf32>, vector<8x8xf32>, vector<16x8xf32> -> vector<16x8xf32>
    %c0_44 = arith.constant 0 : index
    %c16 = arith.constant 16 : index
    %99 = vector.load %arg18[%c0_44, %c16] : memref<16x64xf32, #tpu.memory_space<vmem>>, vector<16x8xf32>
    tpu.vector_store %arg18[%c0_44, %c16], %98 {strides = array<i32>} : memref<16x64xf32, #tpu.memory_space<vmem>>, vector<16x8xf32>,
    %100 = vector.extract_strided_slice %44 {offsets = [0, 24], sizes = [16, 8], strides = [1, 1]} : vector<16x64xf32> to vector<16x8xf32>
    %101 = vector.extract_strided_slice %50 {offsets = [0, 24], sizes = [8, 8], strides = [1, 1]} : vector<8x64xf32> to vector<8x8xf32>
    %102 = vector.extract_strided_slice %51 {offsets = [0, 24], sizes = [8, 8], strides = [1, 1]} : vector<8x64xf32> to vector<8x8xf32>
    %cst_45 = arith.constant dense<0.000000e+00> : vector<16x8xf32>
    %103 = tpu.matmul %100, %101, %cst_45 {dimension_numbers = #tpu.dot_dimension_numbers<[1], [1], [0], [0], [0, 0, 1, 0], [], []>} : vector<16x8xf32>, vector<8x8xf32>, vector<16x8xf32> -> vector<16x8xf32>
    %cst_46 = arith.constant dense<0xFF800000> : vector<16xf32>
    %104 = vector.multi_reduction <maximumf>, %103, %cst_46 [1] : vector<16x8xf32> to vector<16xf32>
    %105 = vector.shape_cast %104 : vector<16xf32> to vector<16x1xf32>
    %106 = vector.broadcast %105 : vector<16x1xf32> to vector<16x8xf32>
    %107 = arith.subf %103, %106 : vector<16x8xf32>
    %108 = math.exp %107 : vector<16x8xf32>
    %cst_47 = arith.constant dense<0.000000e+00> : vector<16xf32>
    %109 = vector.multi_reduction <add>, %108, %cst_47 [1] : vector<16x8xf32> to vector<16xf32>
    %110 = vector.shape_cast %109 : vector<16xf32> to vector<16x1xf32>
    %111 = tpu.reciprocal %110 {approx = true} : vector<16x1xf32> -> vector<16x1xf32>
    %112 = vector.broadcast %111 : vector<16x1xf32> to vector<16x8xf32>
    %113 = arith.mulf %108, %112 : vector<16x8xf32>
    %cst_48 = arith.constant dense<0.000000e+00> : vector<16x8xf32>
    %114 = tpu.matmul %113, %102, %cst_48 {dimension_numbers = #tpu.dot_dimension_numbers<[1], [0], [0], [1], [0, 0, 1, 1], [], []>} : vector<16x8xf32>, vector<8x8xf32>, vector<16x8xf32> -> vector<16x8xf32>
    %c0_49 = arith.constant 0 : index
    %c24 = arith.constant 24 : index
    %115 = vector.load %arg18[%c0_49, %c24] : memref<16x64xf32, #tpu.memory_space<vmem>>, vector<16x8xf32>
    tpu.vector_store %arg18[%c0_49, %c24], %114 {strides = array<i32>} : memref<16x64xf32, #tpu.memory_space<vmem>>, vector<16x8xf32>,
    %116 = vector.extract_strided_slice %44 {offsets = [0, 32], sizes = [16, 8], strides = [1, 1]} : vector<16x64xf32> to vector<16x8xf32>
    %117 = vector.extract_strided_slice %50 {offsets = [0, 32], sizes = [8, 8], strides = [1, 1]} : vector<8x64xf32> to vector<8x8xf32>
    %118 = vector.extract_strided_slice %51 {offsets = [0, 32], sizes = [8, 8], strides = [1, 1]} : vector<8x64xf32> to vector<8x8xf32>
    %cst_50 = arith.constant dense<0.000000e+00> : vector<16x8xf32>
    %119 = tpu.matmul %116, %117, %cst_50 {dimension_numbers = #tpu.dot_dimension_numbers<[1], [1], [0], [0], [0, 0, 1, 0], [], []>} : vector<16x8xf32>, vector<8x8xf32>, vector<16x8xf32> -> vector<16x8xf32>
    %cst_51 = arith.constant dense<0xFF800000> : vector<16xf32>
    %120 = vector.multi_reduction <maximumf>, %119, %cst_51 [1] : vector<16x8xf32> to vector<16xf32>
    %121 = vector.shape_cast %120 : vector<16xf32> to vector<16x1xf32>
    %122 = vector.broadcast %121 : vector<16x1xf32> to vector<16x8xf32>
    %123 = arith.subf %119, %122 : vector<16x8xf32>
    %124 = math.exp %123 : vector<16x8xf32>
    %cst_52 = arith.constant dense<0.000000e+00> : vector<16xf32>
    %125 = vector.multi_reduction <add>, %124, %cst_52 [1] : vector<16x8xf32> to vector<16xf32>
    %126 = vector.shape_cast %125 : vector<16xf32> to vector<16x1xf32>
    %127 = tpu.reciprocal %126 {approx = true} : vector<16x1xf32> -> vector<16x1xf32>
    %128 = vector.broadcast %127 : vector<16x1xf32> to vector<16x8xf32>
    %129 = arith.mulf %124, %128 : vector<16x8xf32>
    %cst_53 = arith.constant dense<0.000000e+00> : vector<16x8xf32>
    %130 = tpu.matmul %129, %118, %cst_53 {dimension_numbers = #tpu.dot_dimension_numbers<[1], [0], [0], [1], [0, 0, 1, 1], [], []>} : vector<16x8xf32>, vector<8x8xf32>, vector<16x8xf32> -> vector<16x8xf32>
    %c0_54 = arith.constant 0 : index
    %c32 = arith.constant 32 : index
    %131 = vector.load %arg18[%c0_54, %c32] : memref<16x64xf32, #tpu.memory_space<vmem>>, vector<16x8xf32>
    tpu.vector_store %arg18[%c0_54, %c32], %130 {strides = array<i32>} : memref<16x64xf32, #tpu.memory_space<vmem>>, vector<16x8xf32>,
    %132 = vector.extract_strided_slice %44 {offsets = [0, 40], sizes = [16, 8], strides = [1, 1]} : vector<16x64xf32> to vector<16x8xf32>
    %133 = vector.extract_strided_slice %50 {offsets = [0, 40], sizes = [8, 8], strides = [1, 1]} : vector<8x64xf32> to vector<8x8xf32>
    %134 = vector.extract_strided_slice %51 {offsets = [0, 40], sizes = [8, 8], strides = [1, 1]} : vector<8x64xf32> to vector<8x8xf32>
    %cst_55 = arith.constant dense<0.000000e+00> : vector<16x8xf32>
    %135 = tpu.matmul %132, %133, %cst_55 {dimension_numbers = #tpu.dot_dimension_numbers<[1], [1], [0], [0], [0, 0, 1, 0], [], []>} : vector<16x8xf32>, vector<8x8xf32>, vector<16x8xf32> -> vector<16x8xf32>
    %cst_56 = arith.constant dense<0xFF800000> : vector<16xf32>
    %136 = vector.multi_reduction <maximumf>, %135, %cst_56 [1] : vector<16x8xf32> to vector<16xf32>
    %137 = vector.shape_cast %136 : vector<16xf32> to vector<16x1xf32>
    %138 = vector.broadcast %137 : vector<16x1xf32> to vector<16x8xf32>
    %139 = arith.subf %135, %138 : vector<16x8xf32>
    %140 = math.exp %139 : vector<16x8xf32>
    %cst_57 = arith.constant dense<0.000000e+00> : vector<16xf32>
    %141 = vector.multi_reduction <add>, %140, %cst_57 [1] : vector<16x8xf32> to vector<16xf32>
    %142 = vector.shape_cast %141 : vector<16xf32> to vector<16x1xf32>
    %143 = tpu.reciprocal %142 {approx = true} : vector<16x1xf32> -> vector<16x1xf32>
    %144 = vector.broadcast %143 : vector<16x1xf32> to vector<16x8xf32>
    %145 = arith.mulf %140, %144 : vector<16x8xf32>
    %cst_58 = arith.constant dense<0.000000e+00> : vector<16x8xf32>
    %146 = tpu.matmul %145, %134, %cst_58 {dimension_numbers = #tpu.dot_dimension_numbers<[1], [0], [0], [1], [0, 0, 1, 1], [], []>} : vector<16x8xf32>, vector<8x8xf32>, vector<16x8xf32> -> vector<16x8xf32>
    %c0_59 = arith.constant 0 : index
    %c40 = arith.constant 40 : index
    %147 = vector.load %arg18[%c0_59, %c40] : memref<16x64xf32, #tpu.memory_space<vmem>>, vector<16x8xf32>
    tpu.vector_store %arg18[%c0_59, %c40], %146 {strides = array<i32>} : memref<16x64xf32, #tpu.memory_space<vmem>>, vector<16x8xf32>,
    %148 = vector.extract_strided_slice %44 {offsets = [0, 48], sizes = [16, 8], strides = [1, 1]} : vector<16x64xf32> to vector<16x8xf32>
    %149 = vector.extract_strided_slice %50 {offsets = [0, 48], sizes = [8, 8], strides = [1, 1]} : vector<8x64xf32> to vector<8x8xf32>
    %150 = vector.extract_strided_slice %51 {offsets = [0, 48], sizes = [8, 8], strides = [1, 1]} : vector<8x64xf32> to vector<8x8xf32>
    %cst_60 = arith.constant dense<0.000000e+00> : vector<16x8xf32>
    %151 = tpu.matmul %148, %149, %cst_60 {dimension_numbers = #tpu.dot_dimension_numbers<[1], [1], [0], [0], [0, 0, 1, 0], [], []>} : vector<16x8xf32>, vector<8x8xf32>, vector<16x8xf32> -> vector<16x8xf32>
    %cst_61 = arith.constant dense<0xFF800000> : vector<16xf32>
    %152 = vector.multi_reduction <maximumf>, %151, %cst_61 [1] : vector<16x8xf32> to vector<16xf32>
    %153 = vector.shape_cast %152 : vector<16xf32> to vector<16x1xf32>
    %154 = vector.broadcast %153 : vector<16x1xf32> to vector<16x8xf32>
    %155 = arith.subf %151, %154 : vector<16x8xf32>
    %156 = math.exp %155 : vector<16x8xf32>
    %cst_62 = arith.constant dense<0.000000e+00> : vector<16xf32>
    %157 = vector.multi_reduction <add>, %156, %cst_62 [1] : vector<16x8xf32> to vector<16xf32>
    %158 = vector.shape_cast %157 : vector<16xf32> to vector<16x1xf32>
    %159 = tpu.reciprocal %158 {approx = true} : vector<16x1xf32> -> vector<16x1xf32>
    %160 = vector.broadcast %159 : vector<16x1xf32> to vector<16x8xf32>
    %161 = arith.mulf %156, %160 : vector<16x8xf32>
    %cst_63 = arith.constant dense<0.000000e+00> : vector<16x8xf32>
    %162 = tpu.matmul %161, %150, %cst_63 {dimension_numbers = #tpu.dot_dimension_numbers<[1], [0], [0], [1], [0, 0, 1, 1], [], []>} : vector<16x8xf32>, vector<8x8xf32>, vector<16x8xf32> -> vector<16x8xf32>
    %c0_64 = arith.constant 0 : index
    %c48 = arith.constant 48 : index
    %163 = vector.load %arg18[%c0_64, %c48] : memref<16x64xf32, #tpu.memory_space<vmem>>, vector<16x8xf32>
    tpu.vector_store %arg18[%c0_64, %c48], %162 {strides = array<i32>} : memref<16x64xf32, #tpu.memory_space<vmem>>, vector<16x8xf32>,
    %164 = vector.extract_strided_slice %44 {offsets = [0, 56], sizes = [16, 8], strides = [1, 1]} : vector<16x64xf32> to vector<16x8xf32>
    %165 = vector.extract_strided_slice %50 {offsets = [0, 56], sizes = [8, 8], strides = [1, 1]} : vector<8x64xf32> to vector<8x8xf32>
    %166 = vector.extract_strided_slice %51 {offsets = [0, 56], sizes = [8, 8], strides = [1, 1]} : vector<8x64xf32> to vector<8x8xf32>
    %cst_65 = arith.constant dense<0.000000e+00> : vector<16x8xf32>
    %167 = tpu.matmul %164, %165, %cst_65 {dimension_numbers = #tpu.dot_dimension_numbers<[1], [1], [0], [0], [0, 0, 1, 0], [], []>} : vector<16x8xf32>, vector<8x8xf32>, vector<16x8xf32> -> vector<16x8xf32>
    %cst_66 = arith.constant dense<0xFF800000> : vector<16xf32>
    %168 = vector.multi_reduction <maximumf>, %167, %cst_66 [1] : vector<16x8xf32> to vector<16xf32>
    %169 = vector.shape_cast %168 : vector<16xf32> to vector<16x1xf32>
    %170 = vector.broadcast %169 : vector<16x1xf32> to vector<16x8xf32>
    %171 = arith.subf %167, %170 : vector<16x8xf32>
    %172 = math.exp %171 : vector<16x8xf32>
    %cst_67 = arith.constant dense<0.000000e+00> : vector<16xf32>
    %173 = vector.multi_reduction <add>, %172, %cst_67 [1] : vector<16x8xf32> to vector<16xf32>
    %174 = vector.shape_cast %173 : vector<16xf32> to vector<16x1xf32>
    %175 = tpu.reciprocal %174 {approx = true} : vector<16x1xf32> -> vector<16x1xf32>
    %176 = vector.broadcast %175 : vector<16x1xf32> to vector<16x8xf32>
    %177 = arith.mulf %172, %176 : vector<16x8xf32>
    %cst_68 = arith.constant dense<0.000000e+00> : vector<16x8xf32>
    %178 = tpu.matmul %177, %166, %cst_68 {dimension_numbers = #tpu.dot_dimension_numbers<[1], [0], [0], [1], [0, 0, 1, 1], [], []>} : vector<16x8xf32>, vector<8x8xf32>, vector<16x8xf32> -> vector<16x8xf32>
    %c0_69 = arith.constant 0 : index
    %c56 = arith.constant 56 : index
    %179 = vector.load %arg18[%c0_69, %c56] : memref<16x64xf32, #tpu.memory_space<vmem>>, vector<16x8xf32>
    tpu.vector_store %arg18[%c0_69, %c56], %178 {strides = array<i32>} : memref<16x64xf32, #tpu.memory_space<vmem>>, vector<16x8xf32>,
    %c0_70 = arith.constant 0 : index
    %c0_71 = arith.constant 0 : index
    %180 = vector.load %arg18[%c0_70, %c0_71] : memref<16x64xf32, #tpu.memory_space<vmem>>, vector<16x64xf32>
    %c0_72 = arith.constant 0 : index
    %c0_73 = arith.constant 0 : index
    %181 = vector.load %arg9[%c0_72, %c0_73] : memref<64x64xf32, #tpu.memory_space<vmem>>, vector<64x64xf32>
    %cst_74 = arith.constant dense<0.000000e+00> : vector<16x64xf32>
    %182 = tpu.matmul %180, %181, %cst_74 {dimension_numbers = #tpu.dot_dimension_numbers<[1], [0], [0], [1], [0, 0, 1, 1], [], []>} : vector<16x64xf32>, vector<64x64xf32>, vector<16x64xf32> -> vector<16x64xf32>
    %c0_75 = arith.constant 0 : index
    %c0_76 = arith.constant 0 : index
    %183 = vector.load %arg10[%c0_75, %c0_76] : memref<1x64xf32, #tpu.memory_space<vmem>>, vector<1x64xf32>
    %184 = vector.broadcast %183 : vector<1x64xf32> to vector<16x64xf32>
    %185 = arith.addf %182, %184 : vector<16x64xf32>
    %186 = arith.mulf %4, %185 : vector<16x64xf32>
    %cst_77 = arith.constant dense<0.000000e+00> : vector<16xf32>
    %187 = vector.multi_reduction <add>, %186, %cst_77 [1] : vector<16x64xf32> to vector<16xf32>
    %188 = vector.shape_cast %187 : vector<16xf32> to vector<16x1xf32>
    %cst_78 = arith.constant 6.400000e+01 : f32
    %189 = vector.broadcast %cst_78 : f32 to vector<16x1xf32>
    %190 = arith.divf %188, %189 : vector<16x1xf32>
    %191 = vector.broadcast %190 : vector<16x1xf32> to vector<16x64xf32>
    %192 = arith.subf %186, %191 : vector<16x64xf32>
    %193 = arith.mulf %192, %192 : vector<16x64xf32>
    %cst_79 = arith.constant dense<0.000000e+00> : vector<16xf32>
    %194 = vector.multi_reduction <add>, %193, %cst_79 [1] : vector<16x64xf32> to vector<16xf32>
    %195 = vector.shape_cast %194 : vector<16xf32> to vector<16x1xf32>
    %cst_80 = arith.constant 6.400000e+01 : f32
    %196 = vector.broadcast %cst_80 : f32 to vector<16x1xf32>
    %197 = arith.divf %195, %196 : vector<16x1xf32>
    %cst_81 = arith.constant 9.99999974E-6 : f32
    %198 = vector.broadcast %cst_81 : f32 to vector<16x1xf32>
    %199 = arith.addf %197, %198 : vector<16x1xf32>
    %200 = math.rsqrt %199 : vector<16x1xf32>
    %201 = vector.broadcast %200 : vector<16x1xf32> to vector<16x64xf32>
    %202 = arith.mulf %192, %201 : vector<16x64xf32>
    %203 = vector.broadcast %8 : vector<1x64xf32> to vector<16x64xf32>
    %204 = arith.mulf %202, %203 : vector<16x64xf32>
    %205 = vector.broadcast %9 : vector<1x64xf32> to vector<16x64xf32>
    %206 = arith.addf %204, %205 : vector<16x64xf32>
    %c0_82 = arith.constant 0 : index
    %c0_83 = arith.constant 0 : index
    %207 = vector.load %arg11[%c0_82, %c0_83] : memref<64x256xf32, #tpu.memory_space<vmem>>, vector<64x256xf32>
    %cst_84 = arith.constant dense<0.000000e+00> : vector<16x256xf32>
    %208 = tpu.matmul %206, %207, %cst_84 {dimension_numbers = #tpu.dot_dimension_numbers<[1], [0], [0], [1], [0, 0, 1, 1], [], []>} : vector<16x64xf32>, vector<64x256xf32>, vector<16x256xf32> -> vector<16x256xf32>
    %c0_85 = arith.constant 0 : index
    %c0_86 = arith.constant 0 : index
    %209 = vector.load %arg12[%c0_85, %c0_86] : memref<1x256xf32, #tpu.memory_space<vmem>>, vector<1x256xf32>
    %210 = vector.broadcast %209 : vector<1x256xf32> to vector<16x256xf32>
    %211 = arith.addf %208, %210 : vector<16x256xf32>
    %cst_87 = arith.constant 5.000000e-01 : f32
    %212 = vector.broadcast %cst_87 : f32 to vector<16x256xf32>
    %213 = arith.mulf %212, %211 : vector<16x256xf32>
    %cst_88 = arith.constant 0.707106769 : f32
    %214 = vector.broadcast %cst_88 : f32 to vector<16x256xf32>
    %215 = arith.mulf %211, %214 : vector<16x256xf32>
    %216 = math.absf %215 : vector<16x256xf32>
    %cst_89 = arith.constant 5.000000e-01 : f32
    %217 = vector.broadcast %cst_89 : f32 to vector<16x256xf32>
    %218 = arith.mulf %217, %216 : vector<16x256xf32>
    %cst_90 = arith.constant 1.000000e+00 : f32
    %219 = vector.broadcast %cst_90 : f32 to vector<16x256xf32>
    %220 = arith.addf %219, %218 : vector<16x256xf32>
    %cst_91 = arith.constant 1.000000e+00 : f32
    %221 = vector.broadcast %cst_91 : f32 to vector<16x256xf32>
    %222 = arith.divf %221, %220 : vector<16x256xf32>
    %cst_92 = arith.constant 0.170872763 : f32
    %223 = vector.broadcast %cst_92 : f32 to vector<16x256xf32>
    %224 = arith.mulf %222, %223 : vector<16x256xf32>
    %cst_93 = arith.constant -0.822152256 : f32
    %225 = vector.broadcast %cst_93 : f32 to vector<16x256xf32>
    %226 = arith.addf %225, %224 : vector<16x256xf32>
    %227 = arith.mulf %222, %226 : vector<16x256xf32>
    %cst_94 = arith.constant 1.48851585 : f32
    %228 = vector.broadcast %cst_94 : f32 to vector<16x256xf32>
    %229 = arith.addf %228, %227 : vector<16x256xf32>
    %230 = arith.mulf %222, %229 : vector<16x256xf32>
    %cst_95 = arith.constant -1.13520396 : f32
    %231 = vector.broadcast %cst_95 : f32 to vector<16x256xf32>
    %232 = arith.addf %231, %230 : vector<16x256xf32>
    %233 = arith.mulf %222, %232 : vector<16x256xf32>
    %cst_96 = arith.constant 0.278868079 : f32
    %234 = vector.broadcast %cst_96 : f32 to vector<16x256xf32>
    %235 = arith.addf %234, %233 : vector<16x256xf32>
    %236 = arith.mulf %222, %235 : vector<16x256xf32>
    %cst_97 = arith.constant -0.186288059 : f32
    %237 = vector.broadcast %cst_97 : f32 to vector<16x256xf32>
    %238 = arith.addf %237, %236 : vector<16x256xf32>
    %239 = arith.mulf %222, %238 : vector<16x256xf32>
    %cst_98 = arith.constant 0.0967841818 : f32
    %240 = vector.broadcast %cst_98 : f32 to vector<16x256xf32>
    %241 = arith.addf %240, %239 : vector<16x256xf32>
    %242 = arith.mulf %222, %241 : vector<16x256xf32>
    %cst_99 = arith.constant 0.374091953 : f32
    %243 = vector.broadcast %cst_99 : f32 to vector<16x256xf32>
    %244 = arith.addf %243, %242 : vector<16x256xf32>
    %245 = arith.mulf %222, %244 : vector<16x256xf32>
    %cst_100 = arith.constant 1.00002372 : f32
    %246 = vector.broadcast %cst_100 : f32 to vector<16x256xf32>
    %247 = arith.addf %246, %245 : vector<16x256xf32>
    %248 = arith.mulf %222, %247 : vector<16x256xf32>
    %cst_101 = arith.constant -1.26551223 : f32
    %249 = vector.broadcast %cst_101 : f32 to vector<16x256xf32>
    %250 = arith.addf %249, %248 : vector<16x256xf32>
    %cst_102 = arith.constant 0.000000e+00 : f32
    %251 = vector.broadcast %cst_102 : f32 to vector<16x256xf32>
    %252 = arith.subf %251, %216 : vector<16x256xf32>
    %253 = arith.mulf %252, %216 : vector<16x256xf32>
    %254 = arith.addf %253, %250 : vector<16x256xf32>
    %255 = math.exp %254 : vector<16x256xf32>
    %256 = arith.mulf %222, %255 : vector<16x256xf32>
    %cst_103 = arith.constant 1.000000e+00 : f32
    %257 = vector.broadcast %cst_103 : f32 to vector<16x256xf32>
    %258 = arith.subf %257, %256 : vector<16x256xf32>
    %cst_104 = arith.constant 0.000000e+00 : f32
    %259 = vector.broadcast %cst_104 : f32 to vector<16x256xf32>
    %260 = arith.cmpf oge, %215, %259 : vector<16x256xf32>
    %cst_105 = arith.constant 0.000000e+00 : f32
    %261 = vector.broadcast %cst_105 : f32 to vector<16x256xf32>
    %262 = arith.subf %261, %258 : vector<16x256xf32>
    %263 = arith.select %260, %258, %262 : vector<16x256xi1>, vector<16x256xf32>
    %cst_106 = arith.constant 1.000000e+00 : f32
    %264 = vector.broadcast %cst_106 : f32 to vector<16x256xf32>
    %265 = arith.addf %264, %263 : vector<16x256xf32>
    %266 = arith.mulf %213, %265 : vector<16x256xf32>
    %c0_107 = arith.constant 0 : index
    %c0_108 = arith.constant 0 : index
    %267 = vector.load %arg13[%c0_107, %c0_108] : memref<256x64xf32, #tpu.memory_space<vmem>>, vector<256x64xf32>
    %cst_109 = arith.constant dense<0.000000e+00> : vector<16x64xf32>
    %268 = tpu.matmul %266, %267, %cst_109 {dimension_numbers = #tpu.dot_dimension_numbers<[1], [0], [0], [1], [0, 0, 1, 1], [], []>} : vector<16x256xf32>, vector<256x64xf32>, vector<16x64xf32> -> vector<16x64xf32>
    %c0_110 = arith.constant 0 : index
    %c0_111 = arith.constant 0 : index
    %269 = vector.load %arg14[%c0_110, %c0_111] : memref<1x64xf32, #tpu.memory_space<vmem>>, vector<1x64xf32>
    %270 = vector.broadcast %269 : vector<1x64xf32> to vector<16x64xf32>
    %271 = arith.addf %268, %270 : vector<16x64xf32>
    %272 = arith.addf %271, %186 : vector<16x64xf32>
    %273 = vector.broadcast %18 : vector<1x64xf32> to vector<16x64xf32>
    %274 = arith.mulf %272, %273 : vector<16x64xf32>
    %275 = vector.broadcast %19 : vector<1x64xf32> to vector<16x64xf32>
    %276 = arith.addf %274, %275 : vector<16x64xf32>
    %c0_112 = arith.constant 0 : index
    %c0_113 = arith.constant 0 : index
    %c0_114 = arith.constant 0 : index
    %277 = vector.load %arg17[%c0_112, %c0_113, %c0_114] : memref<1x17x64xf32, #tpu.memory_space<vmem>>, vector<1x1x64xf32>
    %278 = vector.shape_cast %277 : vector<1x1x64xf32> to vector<1x64xf32>
    %279 = vector.shape_cast %5 : vector<1x64xf32> to vector<1x1x64xf32>
    tpu.vector_store %arg17[%c0_112, %c0_113, %c0_114], %279 {strides = array<i32>} : memref<1x17x64xf32, #tpu.memory_space<vmem>>, vector<1x1x64xf32>,
    %c0_115 = arith.constant 0 : index
    %c1 = arith.constant 1 : index
    %c0_116 = arith.constant 0 : index
    %280 = vector.load %arg17[%c0_115, %c1, %c0_116] : memref<1x17x64xf32, #tpu.memory_space<vmem>>, vector<1x16x64xf32>
    %281 = vector.shape_cast %280 : vector<1x16x64xf32> to vector<16x64xf32>
    %282 = vector.shape_cast %276 : vector<16x64xf32> to vector<1x16x64xf32>
    tpu.vector_store %arg17[%c0_115, %c1, %c0_116], %282 {strides = array<i32>} : memref<1x17x64xf32, #tpu.memory_space<vmem>>, vector<1x16x64xf32>,
    return
  }
  func.func @transform_0(%arg0: i32) -> (i32, i32, i32) {
    %c0_i32 = arith.constant 0 : i32
    %c0_i32_0 = arith.constant 0 : i32
    %c0_i32_1 = arith.constant 0 : i32
    return %arg0, %c0_i32, %c0_i32_0 : i32, i32, i32
  }
  func.func @transform_1(%arg0: i32) -> (i32, i32, i32) {
    %c0_i32 = arith.constant 0 : i32
    %c0_i32_0 = arith.constant 0 : i32
    %c0_i32_1 = arith.constant 0 : i32
    return %arg0, %c0_i32, %c0_i32_0 : i32, i32, i32
  }
  func.func @transform_2(%arg0: i32) -> (i32, i32) {
    %c0_i32 = arith.constant 0 : i32
    %c0_i32_0 = arith.constant 0 : i32
    %c0_i32_1 = arith.constant 0 : i32
    return %c0_i32, %c0_i32_0 : i32, i32
  }
  func.func @transform_3(%arg0: i32) -> (i32, i32) {
    %c0_i32 = arith.constant 0 : i32
    %c0_i32_0 = arith.constant 0 : i32
    %c0_i32_1 = arith.constant 0 : i32
    return %c0_i32, %c0_i32_0 : i32, i32
  }
  func.func @transform_4(%arg0: i32) -> (i32, i32) {
    %c0_i32 = arith.constant 0 : i32
    %c0_i32_0 = arith.constant 0 : i32
    %c0_i32_1 = arith.constant 0 : i32
    return %c0_i32, %c0_i32_0 : i32, i32
  }
  func.func @transform_5(%arg0: i32) -> (i32, i32) {
    %c0_i32 = arith.constant 0 : i32
    %c0_i32_0 = arith.constant 0 : i32
    %c0_i32_1 = arith.constant 0 : i32
    return %c0_i32, %c0_i32_0 : i32, i32
  }
  func.func @transform_6(%arg0: i32) -> (i32, i32) {
    %c0_i32 = arith.constant 0 : i32
    %c0_i32_0 = arith.constant 0 : i32
    %c0_i32_1 = arith.constant 0 : i32
    return %c0_i32, %c0_i32_0 : i32, i32
  }
  func.func @transform_7(%arg0: i32) -> (i32, i32) {
    %c0_i32 = arith.constant 0 : i32
    %c0_i32_0 = arith.constant 0 : i32
    %c0_i32_1 = arith.constant 0 : i32
    return %c0_i32, %c0_i32_0 : i32, i32
  }
  func.func @transform_8(%arg0: i32) -> (i32, i32) {
    %c0_i32 = arith.constant 0 : i32
    %c0_i32_0 = arith.constant 0 : i32
    %c0_i32_1 = arith.constant 0 : i32
    return %c0_i32, %c0_i32_0 : i32, i32
  }
  func.func @transform_9(%arg0: i32) -> (i32, i32) {
    %c0_i32 = arith.constant 0 : i32
    %c0_i32_0 = arith.constant 0 : i32
    %c0_i32_1 = arith.constant 0 : i32
    return %c0_i32, %c0_i32_0 : i32, i32
  }
  func.func @transform_10(%arg0: i32) -> (i32, i32) {
    %c0_i32 = arith.constant 0 : i32
    %c0_i32_0 = arith.constant 0 : i32
    %c0_i32_1 = arith.constant 0 : i32
    return %c0_i32, %c0_i32_0 : i32, i32
  }
  func.func @transform_11(%arg0: i32) -> (i32, i32) {
    %c0_i32 = arith.constant 0 : i32
    %c0_i32_0 = arith.constant 0 : i32
    %c0_i32_1 = arith.constant 0 : i32
    return %c0_i32, %c0_i32_0 : i32, i32
  }
  func.func @transform_12(%arg0: i32) -> (i32, i32) {
    %c0_i32 = arith.constant 0 : i32
    %c0_i32_0 = arith.constant 0 : i32
    %c0_i32_1 = arith.constant 0 : i32
    return %c0_i32, %c0_i32_0 : i32, i32
  }
  func.func @transform_13(%arg0: i32) -> (i32, i32) {
    %c0_i32 = arith.constant 0 : i32
    %c0_i32_0 = arith.constant 0 : i32
    %c0_i32_1 = arith.constant 0 : i32
    return %c0_i32, %c0_i32_0 : i32, i32
  }
  func.func @transform_14(%arg0: i32) -> (i32, i32) {
    %c0_i32 = arith.constant 0 : i32
    %c0_i32_0 = arith.constant 0 : i32
    %c0_i32_1 = arith.constant 0 : i32
    return %c0_i32, %c0_i32_0 : i32, i32
  }
  func.func @transform_15(%arg0: i32) -> (i32, i32) {
    %c0_i32 = arith.constant 0 : i32
    %c0_i32_0 = arith.constant 0 : i32
    %c0_i32_1 = arith.constant 0 : i32
    return %c0_i32, %c0_i32_0 : i32, i32
  }
  func.func @transform_16(%arg0: i32) -> (i32, i32, i32) {
    %c0_i32 = arith.constant 0 : i32
    %c0_i32_0 = arith.constant 0 : i32
    %c0_i32_1 = arith.constant 0 : i32
    return %arg0, %c0_i32, %c0_i32_0 : i32, i32, i32
  }
}

</mosaic_0001>

<llo_original>
// kernel: inter_transformer_encoder_block.1
$region0: #{inter_transformer_encoder_block.1}
  #allocation0 [shape = 'u32[]', space=smem, size = 0x4, offset = 0x4, fixed_abs, tag = 'smem constant byte address 0x4 - core index']
  #allocation1 [shape = 'u32[144,128]{1,0:T(1,128)}', space=vmem, size = 0x12000, scoped, tag = 'internal scratch']
  #allocation2 [shape = 'f32[16,64]{1,0:T(8,128)}', space=vmem, size = 0x2000, scoped, tag = 'scratch operand']
  %s0 = inlined_call_operand.vmem [shape: f32[2,17,64], index: 0, kind: input, shape index: {}]
  %s1 = inlined_call_operand.vmem [shape: f32[2,9,64], index: 1, kind: input, shape index: {}]
  %s2 = inlined_call_operand.vmem [shape: f32[1,64], index: 2, kind: input, shape index: {}]
  %s3 = inlined_call_operand.vmem [shape: f32[1,64], index: 3, kind: input, shape index: {}]
  %s4 = inlined_call_operand.vmem [shape: f32[64,64], index: 4, kind: input, shape index: {}]
  %s5 = inlined_call_operand.vmem [shape: f32[1,64], index: 5, kind: input, shape index: {}]
  %s6 = inlined_call_operand.vmem [shape: f32[64,128], index: 6, kind: input, shape index: {}]
  %s7 = inlined_call_operand.vmem [shape: f32[1,128], index: 7, kind: input, shape index: {}]
  %s8 = inlined_call_operand.vmem [shape: f32[64,64], index: 8, kind: input, shape index: {}]
  %s9 = inlined_call_operand.vmem [shape: f32[1,64], index: 9, kind: input, shape index: {}]
  %s10 = inlined_call_operand.vmem [shape: f32[64,256], index: 10, kind: input, shape index: {}]
  %s11 = inlined_call_operand.vmem [shape: f32[1,256], index: 11, kind: input, shape index: {}]
  %s12 = inlined_call_operand.vmem [shape: f32[256,64], index: 12, kind: input, shape index: {}]
  %s13 = inlined_call_operand.vmem [shape: f32[1,64], index: 13, kind: input, shape index: {}]
  %s14 = inlined_call_operand.vmem [shape: f32[128,128], index: 14, kind: input, shape index: {}]
  %s15 = inlined_call_operand.vmem [shape: f32[1,128], index: 15, kind: input, shape index: {}]
  %s16 = inlined_call_operand.vmem [shape: f32[2,17,64], index: 16, kind: output, shape index: {}]
  %s17 = sld [smem:[#allocation0]]
  $region97: #{inter_transformer_encoder_block.1} parent=0
    _
  %s19 = ssub.s32 1, %s17
  %s20 = scalar_select 0, %s19, %s17
  loop: start=0, step=1, limit=4
  $region2: #{inter_transformer_encoder_block.1} parent=0 // loop_pre_header
    _
  $region3: #{inter_transformer_encoder_block.1} parent=0 // loop_header
    %s22 = sphi 0, %s26
    %p23 = scmp.ge.s32.totalorder %s22, 4
    %s32 = sphi 0, %s34
    %s35 = sphi 0, %s32
    %s36 = sphi 0, %s35
    %s52 = sphi 0, %s36
    %s58 = sphi 0, %s60
    %s61 = sphi 0, %s58
    %s62 = sphi 0, %s61
    %s78 = sphi 0, %s62
    %s82 = sphi 0, %s82
    %s84 = sphi 0, %s82
    %s85 = sphi 0, %s84
    %s99 = sphi 0, %s85
    %s103 = sphi 0, %s103
    %s105 = sphi 0, %s103
    %s106 = sphi 0, %s105
    %s120 = sphi 0, %s106
    %s124 = sphi 0, %s124
    %s126 = sphi 0, %s124
    %s127 = sphi 0, %s126
    %s141 = sphi 0, %s127
    %s145 = sphi 0, %s145
    %s147 = sphi 0, %s145
    %s148 = sphi 0, %s147
    %s162 = sphi 0, %s148
    %s166 = sphi 0, %s166
    %s168 = sphi 0, %s166
    %s169 = sphi 0, %s168
    %s183 = sphi 0, %s169
    %s187 = sphi 0, %s187
    %s189 = sphi 0, %s187
    %s190 = sphi 0, %s189
    %s204 = sphi 0, %s190
    %s208 = sphi 0, %s208
    %s210 = sphi 0, %s208
    %s211 = sphi 0, %s210
    %s225 = sphi 0, %s211
    %s229 = sphi 0, %s229
    %s231 = sphi 0, %s229
    %s232 = sphi 0, %s231
    %s246 = sphi 0, %s232
    %s250 = sphi 0, %s250
    %s252 = sphi 0, %s250
    %s253 = sphi 0, %s252
    %s267 = sphi 0, %s253
    %s271 = sphi 0, %s271
    %s273 = sphi 0, %s271
    %s274 = sphi 0, %s273
    %s288 = sphi 0, %s274
    %s292 = sphi 0, %s292
    %s294 = sphi 0, %s292
    %s295 = sphi 0, %s294
    %s309 = sphi 0, %s295
    %s313 = sphi 0, %s313
    %s315 = sphi 0, %s313
    %s316 = sphi 0, %s315
    %s330 = sphi 0, %s316
    %s334 = sphi 0, %s334
    %s336 = sphi 0, %s334
    %s337 = sphi 0, %s336
    %s351 = sphi 0, %s337
    %s355 = sphi 0, %s355
    %s357 = sphi 0, %s355
    %s358 = sphi 0, %s357
    %s372 = sphi 0, %s358
    %s378 = sphi 0, %s380
    %s381 = sphi 0, %s378
    %s382 = sphi 0, %s381
    %s398 = sphi 0, %s382
  $region4: #{inter_transformer_encoder_block.1} parent=0 // loop_header_branch
    %25 = sbr.rel (%p23) target = $region8
  $region5: #{inter_transformer_encoder_block.1} parent=0 // loop_body
    %s27 = ssub.s32 %s22, 1
    %s28 = ssub.s32 %s22, 2
    %s29 = sadd.s32 %s22, 1
    %s30 = ssub.s32 %s22, %s29
    %p31 = scmp.eq.s32.totalorder %s30, 0
    %s33 = sadd.s32 %s32, 1
    %s34 = scalar_select %p31, %s32, %s33
    %p37 = pneg %p31
    %p38 = scmp.eq.s32.totalorder %s22, 1
    %p39 = por %p37, %p38
    %p40 = scmp.ne.s32.totalorder %s32, %s35
    %p41 = scmp.eq.s32.totalorder %s22, 0
    %p42 = por %p40, %p41
    %p43 = scmp.ne.s32.totalorder %s32, %s35
    %p44 = scmp.eq.s32.totalorder %s27, 1
    %p45 = por %p43, %p44
    %p46 = scmp.ne.s32.totalorder %s35, %s36
    %p47 = scmp.eq.s32.totalorder %s27, 0
    %p48 = por %p46, %p47
    %p49 = scmp.ne.s32.totalorder %s35, %s36
    %p50 = scmp.eq.s32.totalorder %s28, 1
    %p51 = por %p49, %p50
    %p53 = scmp.ne.s32.totalorder %s36, %s52
    %p54 = scmp.eq.s32.totalorder %s28, 0
    %p55 = por %p53, %p54
    %s56 = ssub.s32 %s22, %s29
    %p57 = scmp.eq.s32.totalorder %s56, 0
    %s59 = sadd.s32 %s58, 1
    %s60 = scalar_select %p57, %s58, %s59
    %p63 = pneg %p57
    %p64 = scmp.eq.s32.totalorder %s22, 1
    %p65 = por %p63, %p64
    %p66 = scmp.ne.s32.totalorder %s58, %s61
    %p67 = scmp.eq.s32.totalorder %s22, 0
    %p68 = por %p66, %p67
    %p69 = scmp.ne.s32.totalorder %s58, %s61
    %p70 = scmp.eq.s32.totalorder %s27, 1
    %p71 = por %p69, %p70
    %p72 = scmp.ne.s32.totalorder %s61, %s62
    %p73 = scmp.eq.s32.totalorder %s27, 0
    %p74 = por %p72, %p73
    %p75 = scmp.ne.s32.totalorder %s61, %s62
    %p76 = scmp.eq.s32.totalorder %s28, 1
    %p77 = por %p75, %p76
    %p79 = scmp.ne.s32.totalorder %s62, %s78
    %p80 = scmp.eq.s32.totalorder %s28, 0
    %p81 = por %p79, %p80
    %s83 = sadd.s32 %s82, 1
    %p86 = scmp.eq.s32.totalorder %s22, 1
    %p87 = scmp.ne.s32.totalorder %s82, %s84
    %p88 = scmp.eq.s32.totalorder %s22, 0
    %p89 = por %p87, %p88
    %p90 = scmp.ne.s32.totalorder %s82, %s84
    %p91 = scmp.eq.s32.totalorder %s27, 1
    %p92 = por %p90, %p91
    %p93 = scmp.ne.s32.totalorder %s84, %s85
    %p94 = scmp.eq.s32.totalorder %s27, 0
    %p95 = por %p93, %p94
    %p96 = scmp.ne.s32.totalorder %s84, %s85
    %p97 = scmp.eq.s32.totalorder %s28, 1
    %p98 = por %p96, %p97
    %p100 = scmp.ne.s32.totalorder %s85, %s99
    %p101 = scmp.eq.s32.totalorder %s28, 0
    %p102 = por %p100, %p101
    %s104 = sadd.s32 %s103, 1
    %p107 = scmp.eq.s32.totalorder %s22, 1
    %p108 = scmp.ne.s32.totalorder %s103, %s105
    %p109 = scmp.eq.s32.totalorder %s22, 0
    %p110 = por %p108, %p109
    %p111 = scmp.ne.s32.totalorder %s103, %s105
    %p112 = scmp.eq.s32.totalorder %s27, 1
    %p113 = por %p111, %p112
    %p114 = scmp.ne.s32.totalorder %s105, %s106
    %p115 = scmp.eq.s32.totalorder %s27, 0
    %p116 = por %p114, %p115
    %p117 = scmp.ne.s32.totalorder %s105, %s106
    %p118 = scmp.eq.s32.totalorder %s28, 1
    %p119 = por %p117, %p118
    %p121 = scmp.ne.s32.totalorder %s106, %s120
    %p122 = scmp.eq.s32.totalorder %s28, 0
    %p123 = por %p121, %p122
    %s125 = sadd.s32 %s124, 1
    %p128 = scmp.eq.s32.totalorder %s22, 1
    %p129 = scmp.ne.s32.totalorder %s124, %s126
    %p130 = scmp.eq.s32.totalorder %s22, 0
    %p131 = por %p129, %p130
    %p132 = scmp.ne.s32.totalorder %s124, %s126
    %p133 = scmp.eq.s32.totalorder %s27, 1
    %p134 = por %p132, %p133
    %p135 = scmp.ne.s32.totalorder %s126, %s127
    %p136 = scmp.eq.s32.totalorder %s27, 0
    %p137 = por %p135, %p136
    %p138 = scmp.ne.s32.totalorder %s126, %s127
    %p139 = scmp.eq.s32.totalorder %s28, 1
    %p140 = por %p138, %p139
    %p142 = scmp.ne.s32.totalorder %s127, %s141
    %p143 = scmp.eq.s32.totalorder %s28, 0
    %p144 = por %p142, %p143
    %s146 = sadd.s32 %s145, 1
    %p149 = scmp.eq.s32.totalorder %s22, 1
    %p150 = scmp.ne.s32.totalorder %s145, %s147
    %p151 = scmp.eq.s32.totalorder %s22, 0
    %p152 = por %p150, %p151
    %p153 = scmp.ne.s32.totalorder %s145, %s147
    %p154 = scmp.eq.s32.totalorder %s27, 1
    %p155 = por %p153, %p154
    %p156 = scmp.ne.s32.totalorder %s147, %s148
    %p157 = scmp.eq.s32.totalorder %s27, 0
    %p158 = por %p156, %p157
    %p159 = scmp.ne.s32.totalorder %s147, %s148
    %p160 = scmp.eq.s32.totalorder %s28, 1
    %p161 = por %p159, %p160
    %p163 = scmp.ne.s32.totalorder %s148, %s162
    %p164 = scmp.eq.s32.totalorder %s28, 0
    %p165 = por %p163, %p164
    %s167 = sadd.s32 %s166, 1
    %p170 = scmp.eq.s32.totalorder %s22, 1
    %p171 = scmp.ne.s32.totalorder %s166, %s168
    %p172 = scmp.eq.s32.totalorder %s22, 0
    %p173 = por %p171, %p172
    %p174 = scmp.ne.s32.totalorder %s166, %s168
    %p175 = scmp.eq.s32.totalorder %s27, 1
    %p176 = por %p174, %p175
    %p177 = scmp.ne.s32.totalorder %s168, %s169
    %p178 = scmp.eq.s32.totalorder %s27, 0
    %p179 = por %p177, %p178
    %p180 = scmp.ne.s32.totalorder %s168, %s169
    %p181 = scmp.eq.s32.totalorder %s28, 1
    %p182 = por %p180, %p181
    %p184 = scmp.ne.s32.totalorder %s169, %s183
    %p185 = scmp.eq.s32.totalorder %s28, 0
    %p186 = por %p184, %p185
    %s188 = sadd.s32 %s187, 1
    %p191 = scmp.eq.s32.totalorder %s22, 1
    %p192 = scmp.ne.s32.totalorder %s187, %s189
    %p193 = scmp.eq.s32.totalorder %s22, 0
    %p194 = por %p192, %p193
    %p195 = scmp.ne.s32.totalorder %s187, %s189
    %p196 = scmp.eq.s32.totalorder %s27, 1
    %p197 = por %p195, %p196
    %p198 = scmp.ne.s32.totalorder %s189, %s190
    %p199 = scmp.eq.s32.totalorder %s27, 0
    %p200 = por %p198, %p199
    %p201 = scmp.ne.s32.totalorder %s189, %s190
    %p202 = scmp.eq.s32.totalorder %s28, 1
    %p203 = por %p201, %p202
    %p205 = scmp.ne.s32.totalorder %s190, %s204
    %p206 = scmp.eq.s32.totalorder %s28, 0
    %p207 = por %p205, %p206
    %s209 = sadd.s32 %s208, 1
    %p212 = scmp.eq.s32.totalorder %s22, 1
    %p213 = scmp.ne.s32.totalorder %s208, %s210
    %p214 = scmp.eq.s32.totalorder %s22, 0
    %p215 = por %p213, %p214
    %p216 = scmp.ne.s32.totalorder %s208, %s210
    %p217 = scmp.eq.s32.totalorder %s27, 1
    %p218 = por %p216, %p217
    %p219 = scmp.ne.s32.totalorder %s210, %s211
    %p220 = scmp.eq.s32.totalorder %s27, 0
    %p221 = por %p219, %p220
    %p222 = scmp.ne.s32.totalorder %s210, %s211
    %p223 = scmp.eq.s32.totalorder %s28, 1
    %p224 = por %p222, %p223
    %p226 = scmp.ne.s32.totalorder %s211, %s225
    %p227 = scmp.eq.s32.totalorder %s28, 0
    %p228 = por %p226, %p227
    %s230 = sadd.s32 %s229, 1
    %p233 = scmp.eq.s32.totalorder %s22, 1
    %p234 = scmp.ne.s32.totalorder %s229, %s231
    %p235 = scmp.eq.s32.totalorder %s22, 0
    %p236 = por %p234, %p235
    %p237 = scmp.ne.s32.totalorder %s229, %s231
    %p238 = scmp.eq.s32.totalorder %s27, 1
    %p239 = por %p237, %p238
    %p240 = scmp.ne.s32.totalorder %s231, %s232
    %p241 = scmp.eq.s32.totalorder %s27, 0
    %p242 = por %p240, %p241
    %p243 = scmp.ne.s32.totalorder %s231, %s232
    %p244 = scmp.eq.s32.totalorder %s28, 1
    %p245 = por %p243, %p244
    %p247 = scmp.ne.s32.totalorder %s232, %s246
    %p248 = scmp.eq.s32.totalorder %s28, 0
    %p249 = por %p247, %p248
    %s251 = sadd.s32 %s250, 1
    %p254 = scmp.eq.s32.totalorder %s22, 1
    %p255 = scmp.ne.s32.totalorder %s250, %s252
    %p256 = scmp.eq.s32.totalorder %s22, 0
    %p257 = por %p255, %p256
    %p258 = scmp.ne.s32.totalorder %s250, %s252
    %p259 = scmp.eq.s32.totalorder %s27, 1
    %p260 = por %p258, %p259
    %p261 = scmp.ne.s32.totalorder %s252, %s253
    %p262 = scmp.eq.s32.totalorder %s27, 0
    %p263 = por %p261, %p262
    %p264 = scmp.ne.s32.totalorder %s252, %s253
    %p265 = scmp.eq.s32.totalorder %s28, 1
    %p266 = por %p264, %p265
    %p268 = scmp.ne.s32.totalorder %s253, %s267
    %p269 = scmp.eq.s32.totalorder %s28, 0
    %p270 = por %p268, %p269
    %s272 = sadd.s32 %s271, 1
    %p275 = scmp.eq.s32.totalorder %s22, 1
    %p276 = scmp.ne.s32.totalorder %s271, %s273
    %p277 = scmp.eq.s32.totalorder %s22, 0
    %p278 = por %p276, %p277
    %p279 = scmp.ne.s32.totalorder %s271, %s273
    %p280 = scmp.eq.s32.totalorder %s27, 1
    %p281 = por %p279, %p280
    %p282 = scmp.ne.s32.totalorder %s273, %s274
    %p283 = scmp.eq.s32.totalorder %s27, 0
    %p284 = por %p282, %p283
    %p285 = scmp.ne.s32.totalorder %s273, %s274
    %p286 = scmp.eq.s32.totalorder %s28, 1
    %p287 = por %p285, %p286
    %p289 = scmp.ne.s32.totalorder %s274, %s288
    %p290 = scmp.eq.s32.totalorder %s28, 0
    %p291 = por %p289, %p290
    %s293 = sadd.s32 %s292, 1
    %p296 = scmp.eq.s32.totalorder %s22, 1
    %p297 = scmp.ne.s32.totalorder %s292, %s294
    %p298 = scmp.eq.s32.totalorder %s22, 0
    %p299 = por %p297, %p298
    %p300 = scmp.ne.s32.totalorder %s292, %s294
    %p301 = scmp.eq.s32.totalorder %s27, 1
    %p302 = por %p300, %p301
    %p303 = scmp.ne.s32.totalorder %s294, %s295
    %p304 = scmp.eq.s32.totalorder %s27, 0
    %p305 = por %p303, %p304
    %p306 = scmp.ne.s32.totalorder %s294, %s295
    %p307 = scmp.eq.s32.totalorder %s28, 1
    %p308 = por %p306, %p307
    %p310 = scmp.ne.s32.totalorder %s295, %s309
    %p311 = scmp.eq.s32.totalorder %s28, 0
    %p312 = por %p310, %p311
    %s314 = sadd.s32 %s313, 1
    %p317 = scmp.eq.s32.totalorder %s22, 1
    %p318 = scmp.ne.s32.totalorder %s313, %s315
    %p319 = scmp.eq.s32.totalorder %s22, 0
    %p320 = por %p318, %p319
    %p321 = scmp.ne.s32.totalorder %s313, %s315
    %p322 = scmp.eq.s32.totalorder %s27, 1
    %p323 = por %p321, %p322
    %p324 = scmp.ne.s32.totalorder %s315, %s316
    %p325 = scmp.eq.s32.totalorder %s27, 0
    %p326 = por %p324, %p325
    %p327 = scmp.ne.s32.totalorder %s315, %s316
    %p328 = scmp.eq.s32.totalorder %s28, 1
    %p329 = por %p327, %p328
    %p331 = scmp.ne.s32.totalorder %s316, %s330
    %p332 = scmp.eq.s32.totalorder %s28, 0
    %p333 = por %p331, %p332
    %s335 = sadd.s32 %s334, 1
    %p338 = scmp.eq.s32.totalorder %s22, 1
    %p339 = scmp.ne.s32.totalorder %s334, %s336
    %p340 = scmp.eq.s32.totalorder %s22, 0
    %p341 = por %p339, %p340
    %p342 = scmp.ne.s32.totalorder %s334, %s336
    %p343 = scmp.eq.s32.totalorder %s27, 1
    %p344 = por %p342, %p343
    %p345 = scmp.ne.s32.totalorder %s336, %s337
    %p346 = scmp.eq.s32.totalorder %s27, 0
    %p347 = por %p345, %p346
    %p348 = scmp.ne.s32.totalorder %s336, %s337
    %p349 = scmp.eq.s32.totalorder %s28, 1
    %p350 = por %p348, %p349
    %p352 = scmp.ne.s32.totalorder %s337, %s351
    %p353 = scmp.eq.s32.totalorder %s28, 0
    %p354 = por %p352, %p353
    %s356 = sadd.s32 %s355, 1
    %p359 = scmp.eq.s32.totalorder %s22, 1
    %p360 = scmp.ne.s32.totalorder %s355, %s357
    %p361 = scmp.eq.s32.totalorder %s22, 0
    %p362 = por %p360, %p361
    %p363 = scmp.ne.s32.totalorder %s355, %s357
    %p364 = scmp.eq.s32.totalorder %s27, 1
    %p365 = por %p363, %p364
    %p366 = scmp.ne.s32.totalorder %s357, %s358
    %p367 = scmp.eq.s32.totalorder %s27, 0
    %p368 = por %p366, %p367
    %p369 = scmp.ne.s32.totalorder %s357, %s358
    %p370 = scmp.eq.s32.totalorder %s28, 1
    %p371 = por %p369, %p370
    %p373 = scmp.ne.s32.totalorder %s358, %s372
    %p374 = scmp.eq.s32.totalorder %s28, 0
    %p375 = por %p373, %p374
    %s376 = ssub.s32 %s22, %s29
    %p377 = scmp.eq.s32.totalorder %s376, 0
    %s379 = sadd.s32 %s378, 1
    %s380 = scalar_select %p377, %s378, %s379
    %p383 = pneg %p377
    %p384 = scmp.eq.s32.totalorder %s22, 1
    %p385 = por %p383, %p384
    %p386 = scmp.ne.s32.totalorder %s378, %s381
    %p387 = scmp.eq.s32.totalorder %s22, 0
    %p388 = por %p386, %p387
    %p389 = scmp.ne.s32.totalorder %s378, %s381
    %p390 = scmp.eq.s32.totalorder %s27, 1
    %p391 = por %p389, %p390
    %p392 = scmp.ne.s32.totalorder %s381, %s382
    %p393 = scmp.eq.s32.totalorder %s27, 0
    %p394 = por %p392, %p393
    %p395 = scmp.ne.s32.totalorder %s381, %s382
    %p396 = scmp.eq.s32.totalorder %s28, 1
    %p397 = por %p395, %p396
    %p399 = scmp.ne.s32.totalorder %s382, %s398
    %p400 = scmp.eq.s32.totalorder %s28, 0
    %p401 = por %p399, %p400
    %p402 = scmp.le.s32.totalorder 1, %s22
    %p403 = scmp.lt.s32.totalorder %s22, 3
    %p404 = pnand %p402, %p403
    %p405 = pneg %p404
    // Predicated region
    $region9: #{inter_transformer_encoder_block.1} parent=5 // pred_check
      _
    $region10: #{inter_transformer_encoder_block.1} parent=5 // pred_check_branch
      %407 = sbr.rel (%p404) target = $region12
    $region11: #{inter_transformer_encoder_block.1} parent=5 // pred_region
      %s408 = ssub.s32 %s22, 1
      // Predicated region
      $region13: #{inter_transformer_encoder_block.1} parent=11 // pred_check
        %p409 = pneg %p95
      $region14: #{inter_transformer_encoder_block.1} parent=11 // pred_check_branch
        %411 = sbr.rel (%p409) target = $region16
      $region15: #{inter_transformer_encoder_block.1} parent=11 // pred_region
        _
      $region16: #{inter_transformer_encoder_block.1} parent=11 // pred_fallthru
        _
      // Predicated region
      $region17: #{inter_transformer_encoder_block.1} parent=11 // pred_check
        %p412 = pneg %p116
      $region18: #{inter_transformer_encoder_block.1} parent=11 // pred_check_branch
        %414 = sbr.rel (%p412) target = $region20
      $region19: #{inter_transformer_encoder_block.1} parent=11 // pred_region
        _
      $region20: #{inter_transformer_encoder_block.1} parent=11 // pred_fallthru
        _
      // Predicated region
      $region21: #{inter_transformer_encoder_block.1} parent=11 // pred_check
        %p415 = pneg %p137
      $region22: #{inter_transformer_encoder_block.1} parent=11 // pred_check_branch
        %417 = sbr.rel (%p415) target = $region24
      $region23: #{inter_transformer_encoder_block.1} parent=11 // pred_region
        _
      $region24: #{inter_transformer_encoder_block.1} parent=11 // pred_fallthru
        _
      // Predicated region
      $region25: #{inter_transformer_encoder_block.1} parent=11 // pred_check
        %p418 = pneg %p158
      $region26: #{inter_transformer_encoder_block.1} parent=11 // pred_check_branch
        %420 = sbr.rel (%p418) target = $region28
      $region27: #{inter_transformer_encoder_block.1} parent=11 // pred_region
        _
      $region28: #{inter_transformer_encoder_block.1} parent=11 // pred_fallthru
        _
      // Predicated region
      $region29: #{inter_transformer_encoder_block.1} parent=11 // pred_check
        %p421 = pneg %p179
      $region30: #{inter_transformer_encoder_block.1} parent=11 // pred_check_branch
        %423 = sbr.rel (%p421) target = $region32
      $region31: #{inter_transformer_encoder_block.1} parent=11 // pred_region
        _
      $region32: #{inter_transformer_encoder_block.1} parent=11 // pred_fallthru
        _
      // Predicated region
      $region33: #{inter_transformer_encoder_block.1} parent=11 // pred_check
        %p424 = pneg %p200
      $region34: #{inter_transformer_encoder_block.1} parent=11 // pred_check_branch
        %426 = sbr.rel (%p424) target = $region36
      $region35: #{inter_transformer_encoder_block.1} parent=11 // pred_region
        _
      $region36: #{inter_transformer_encoder_block.1} parent=11 // pred_fallthru
        _
      // Predicated region
      $region37: #{inter_transformer_encoder_block.1} parent=11 // pred_check
        %p427 = pneg %p221
      $region38: #{inter_transformer_encoder_block.1} parent=11 // pred_check_branch
        %429 = sbr.rel (%p427) target = $region40
      $region39: #{inter_transformer_encoder_block.1} parent=11 // pred_region
        _
      $region40: #{inter_transformer_encoder_block.1} parent=11 // pred_fallthru
        _
      // Predicated region
      $region41: #{inter_transformer_encoder_block.1} parent=11 // pred_check
        %p430 = pneg %p242
      $region42: #{inter_transformer_encoder_block.1} parent=11 // pred_check_branch
        %432 = sbr.rel (%p430) target = $region44
      $region43: #{inter_transformer_encoder_block.1} parent=11 // pred_region
        _
      $region44: #{inter_transformer_encoder_block.1} parent=11 // pred_fallthru
        _
      // Predicated region
      $region45: #{inter_transformer_encoder_block.1} parent=11 // pred_check
        %p433 = pneg %p263
      $region46: #{inter_transformer_encoder_block.1} parent=11 // pred_check_branch
        %435 = sbr.rel (%p433) target = $region48
      $region47: #{inter_transformer_encoder_block.1} parent=11 // pred_region
        _
      $region48: #{inter_transformer_encoder_block.1} parent=11 // pred_fallthru
        _
      // Predicated region
      $region49: #{inter_transformer_encoder_block.1} parent=11 // pred_check
        %p436 = pneg %p284
      $region50: #{inter_transformer_encoder_block.1} parent=11 // pred_check_branch
        %438 = sbr.rel (%p436) target = $region52
      $region51: #{inter_transformer_encoder_block.1} parent=11 // pred_region
        _
      $region52: #{inter_transformer_encoder_block.1} parent=11 // pred_fallthru
        _
      // Predicated region
      $region53: #{inter_transformer_encoder_block.1} parent=11 // pred_check
        %p439 = pneg %p305
      $region54: #{inter_transformer_encoder_block.1} parent=11 // pred_check_branch
        %441 = sbr.rel (%p439) target = $region56
      $region55: #{inter_transformer_encoder_block.1} parent=11 // pred_region
        _
      $region56: #{inter_transformer_encoder_block.1} parent=11 // pred_fallthru
        _
      // Predicated region
      $region57: #{inter_transformer_encoder_block.1} parent=11 // pred_check
        %p442 = pneg %p326
      $region58: #{inter_transformer_encoder_block.1} parent=11 // pred_check_branch
        %444 = sbr.rel (%p442) target = $region60
      $region59: #{inter_transformer_encoder_block.1} parent=11 // pred_region
        _
      $region60: #{inter_transformer_encoder_block.1} parent=11 // pred_fallthru
        _
      // Predicated region
      $region61: #{inter_transformer_encoder_block.1} parent=11 // pred_check
        %p445 = pneg %p347
      $region62: #{inter_transformer_encoder_block.1} parent=11 // pred_check_branch
        %447 = sbr.rel (%p445) target = $region64
      $region63: #{inter_transformer_encoder_block.1} parent=11 // pred_region
        _
      $region64: #{inter_transformer_encoder_block.1} parent=11 // pred_fallthru
        _
      // Predicated region
      $region65: #{inter_transformer_encoder_block.1} parent=11 // pred_check
        %p448 = pneg %p368
      $region66: #{inter_transformer_encoder_block.1} parent=11 // pred_check_branch
        %450 = sbr.rel (%p448) target = $region68
      $region67: #{inter_transformer_encoder_block.1} parent=11 // pred_region
        _
      $region68: #{inter_transformer_encoder_block.1} parent=11 // pred_fallthru
        _
    $region12: #{inter_transformer_encoder_block.1} parent=5 // pred_fallthru
      _
    %p451 = scmp.lt.s32.totalorder %s22, 2
    // Predicated region
    $region69: #{inter_transformer_encoder_block.1} parent=5 // pred_check
      %p452 = pneg %p451
    $region70: #{inter_transformer_encoder_block.1} parent=5 // pred_check_branch
      %454 = sbr.rel (%p452) target = $region72
    $region71: #{inter_transformer_encoder_block.1} parent=5 // pred_region
      // Predicated region
      $region73: #{inter_transformer_encoder_block.1} parent=71 // pred_check
        %p455 = pneg %p42
      $region74: #{inter_transformer_encoder_block.1} parent=71 // pred_check_branch
        %457 = sbr.rel (%p455) target = $region76
      $region75: #{inter_transformer_encoder_block.1} parent=71 // pred_region
        %p458 = scmp.lt.s32.totalorder %s22, 1
        %s459 = scalar_select %p458, %s22, 1
        %s460 = smul.addr %s459, 3
        %s461 = smul.addr %s460, 8
        %s462 = scalar_lea.vmem %s0, %s461
      $region76: #{inter_transformer_encoder_block.1} parent=71 // pred_fallthru
        _
      // Predicated region
      $region77: #{inter_transformer_encoder_block.1} parent=71 // pred_check
        %p463 = pneg %p68
      $region78: #{inter_transformer_encoder_block.1} parent=71 // pred_check_branch
        %465 = sbr.rel (%p463) target = $region80
      $region79: #{inter_transformer_encoder_block.1} parent=71 // pred_region
        %p466 = scmp.lt.s32.totalorder %s22, 1
        %s467 = scalar_select %p466, %s22, 1
        %s468 = smul.addr %s467, 2
        %s469 = smul.addr %s468, 8
        %s470 = scalar_lea.vmem %s1, %s469
      $region80: #{inter_transformer_encoder_block.1} parent=71 // pred_fallthru
        _
    $region72: #{inter_transformer_encoder_block.1} parent=5 // pred_fallthru
      _
    %p471 = scmp.le.s32.totalorder 1, %s22
    %p472 = scmp.lt.s32.totalorder %s22, 3
    %p473 = pnand %p471, %p472
    %p474 = pneg %p473
    // Predicated region
    $region81: #{inter_transformer_encoder_block.1} parent=5 // pred_check
      _
    $region82: #{inter_transformer_encoder_block.1} parent=5 // pred_check_branch
      %476 = sbr.rel (%p473) target = $region84
    $region83: #{inter_transformer_encoder_block.1} parent=5 // pred_region
      %s477 = ssub.s32 %s22, 1
      %p478 = scmp.lt.s32.totalorder %s27, 1
      %s479 = scalar_select %p478, %s27, 1
      %s480 = smul.addr %s479, 3
      %s481 = smul.addr %s480, 8
      %s482 = scalar_lea.vmem %s0, %s481
      %p483 = pneg %p48
      %p484 = pneg %p45
      %p485 = scmp.lt.s32.totalorder %s27, 1
      %s486 = scalar_select %p485, %s27, 1
      %s487 = smul.addr %s486, 2
      %s488 = smul.addr %s487, 8
      %s489 = scalar_lea.vmem %s1, %s488
      %p490 = pneg %p74
      %p491 = pneg %p71
      %p492 = pneg %p95
      %p493 = pneg %p92
      %p494 = pneg %p116
      %p495 = pneg %p113
      %p496 = pneg %p137
      %p497 = pneg %p134
      %p498 = pneg %p158
      %p499 = pneg %p155
      %p500 = pneg %p179
      %p501 = pneg %p176
      %p502 = pneg %p200
      %p503 = pneg %p197
      %p504 = pneg %p221
      %p505 = pneg %p218
      %p506 = pneg %p242
      %p507 = pneg %p239
      %p508 = pneg %p263
      %p509 = pneg %p260
      %p510 = pneg %p284
      %p511 = pneg %p281
      %p512 = pneg %p305
      %p513 = pneg %p302
      %p514 = pneg %p326
      %p515 = pneg %p323
      %p516 = pneg %p347
      %p517 = pneg %p344
      %p518 = pneg %p368
      %p519 = pneg %p365
      %p520 = pneg %p394
      %p521 = pneg %p391
      %p522 = scmp.lt.s32.totalorder %s27, 1
      %s523 = scalar_select %p522, %s27, 1
      %s524 = smul.addr %s523, 3
      %s525 = smul.addr %s524, 8
      %s526 = scalar_lea.vmem %s16, %s525
      %p527 = scmp.lt.s32.totalorder %s27, 1
      %s528 = scalar_select %p527, %s27, 1
      %s529 = smul.addr %s528, 3
      %s530 = smul.addr %s529, 8
      %s531 = scalar_lea.vmem %s0, %s530
      %p532 = scmp.lt.s32.totalorder %s27, 1
      %s533 = scalar_select %p532, %s27, 1
      %s534 = smul.addr %s533, 2
      %s535 = smul.addr %s534, 8
      %s536 = scalar_lea.vmem %s1, %s535
      %p537 = scmp.lt.s32.totalorder %s27, 1
      %s538 = scalar_select %p537, %s27, 1
      %s539 = smul.addr %s538, 3
      %s540 = smul.addr %s539, 8
      %s541 = scalar_lea.vmem %s16, %s540
      %v542 = vld [vmem:[%s531] sm:$0xff]
      %v543 = vld [vmem:[%s531 + $0x8] sm:$0xff]
      %v544 = vld [vmem:[%s531 + $0x10] sm:$0x1]
      %v545 = vld [vmem:[%s536] sm:$0xff]
      %v546 = vld [vmem:[%s536 + $0x8] sm:$0x1]
      %v547 = vld [vmem:[%s2] sm:$0x1]
      %v548 = vld [vmem:[%s3] sm:$0x1]
      %v549 = vld [vmem:[%s14] sm:$0xff]
      %v550 = vld [vmem:[%s14 + $0x8] sm:$0xff]
      %v551 = vld [vmem:[%s14 + $0x10] sm:$0xff]
      %v552 = vld [vmem:[%s14 + $0x18] sm:$0xff]
      %v553 = vld [vmem:[%s14 + $0x20] sm:$0xff]
      %v554 = vld [vmem:[%s14 + $0x28] sm:$0xff]
      %v555 = vld [vmem:[%s14 + $0x30] sm:$0xff]
      %v556 = vld [vmem:[%s14 + $0x38] sm:$0xff]
      %v557 = vld [vmem:[%s14 + $0x40] sm:$0xff]
      %v558 = vld [vmem:[%s14 + $0x48] sm:$0xff]
      %v559 = vld [vmem:[%s14 + $0x50] sm:$0xff]
      %v560 = vld [vmem:[%s14 + $0x58] sm:$0xff]
      %v561 = vld [vmem:[%s14 + $0x60] sm:$0xff]
      %v562 = vld [vmem:[%s14 + $0x68] sm:$0xff]
      %v563 = vld [vmem:[%s14 + $0x70] sm:$0xff]
      %v564 = vld [vmem:[%s14 + $0x78] sm:$0xff]
      %v566 = vrot.slane %v542, 1
      %vm567 = vcmask 523264
      %v568 = vsel %vm567, %v566, 0
      %570 = vmatprep.subr.mxu0 0.0
      %571 = vmatpush1.msra.mxu0 %v557
      %572 = vmatprep.subr.mxu0 0.0
      %573 = vmatpush1.msra.mxu0 %v558
      %574 = vmatprep.subr.mxu0 0.0
      %575 = vmatpush1.msra.mxu0 %v559
      %576 = vmatprep.subr.mxu0 0.0
      %577 = vmatpush1.msra.mxu0 %v560
      %578 = vmatprep.subr.mxu0 0.0
      %579 = vmatpush1.msra.mxu0 %v561
      %580 = vmatprep.subr.mxu0 0.0
      %581 = vmatpush1.msra.mxu0 %v562
      %582 = vmatprep.subr.mxu0 0.0
      %583 = vmatpush1.msra.mxu0 %v563
      %584 = vmatprep.subr.mxu0 0.0
      %585 = vmatpush1.msra.mxu0 %v564
      %586 = vmatprep.subr.mxu0 0.0
      %587 = vmatpush1.msra.mxu0 0.0
      %588 = vmatprep.subr.mxu0 0.0
      %589 = vmatpush1.msra.mxu0 0.0
      %590 = vmatprep.subr.mxu0 0.0
      %591 = vmatpush1.msra.mxu0 0.0
      %592 = vmatprep.subr.mxu0 0.0
      %593 = vmatpush1.msra.mxu0 0.0
      %594 = vmatprep.subr.mxu0 0.0
      %595 = vmatpush1.msra.mxu0 0.0
      %596 = vmatprep.subr.mxu0 0.0
      %597 = vmatpush1.msra.mxu0 0.0
      %598 = vmatprep.subr.mxu0 0.0
      %599 = vmatpush1.msra.mxu0 0.0
      %600 = vmatprep.subr.mxu0 0.0
      %601 = vmatpush1.msra.mxu0 0.0
      %602 = vmatprep.subr.mxu0 0.0
      %603 = vmatpush1.msra.mxu0 0.0
      %604 = vmatprep.subr.mxu0 0.0
      %605 = vmatpush1.msra.mxu0 0.0
      %606 = vmatprep.subr.mxu0 0.0
      %607 = vmatpush1.msra.mxu0 0.0
      %608 = vmatprep.subr.mxu0 0.0
      %609 = vmatpush1.msra.mxu0 0.0
      %610 = vmatprep.subr.mxu0 0.0
      %611 = vmatpush1.msra.mxu0 0.0
      %612 = vmatprep.subr.mxu0 0.0
      %613 = vmatpush1.msra.mxu0 0.0
      %614 = vmatprep.subr.mxu0 0.0
      %615 = vmatpush1.msra.mxu0 0.0
      %616 = vmatprep.subr.mxu0 0.0
      %617 = vmatpush1.msra.mxu0 0.0
      %618 = vmatprep.subr.mxu0 0.0
      %619 = vmatpush1.msra.mxu0 0.0
      %620 = vmatprep.subr.mxu0 0.0
      %621 = vmatpush1.msra.mxu0 0.0
      %622 = vmatprep.subr.mxu0 0.0
      %623 = vmatpush1.msra.mxu0 0.0
      %624 = vmatprep.subr.mxu0 0.0
      %625 = vmatpush1.msra.mxu0 0.0
      %626 = vmatprep.subr.mxu0 0.0
      %627 = vmatpush1.msra.mxu0 0.0
      %628 = vmatprep.subr.mxu0 0.0
      %629 = vmatpush1.msra.mxu0 0.0
      %630 = vmatprep.subr.mxu0 0.0
      %631 = vmatpush1.msra.mxu0 0.0
      %632 = vmatprep.subr.mxu0 0.0
      %633 = vmatpush1.msra.mxu0 0.0
      %634 = vmatprep.mubr.f32.mxu0 0.0
      %635 = vmatmul.mubr.f32.gmra.mrb[0].mxu0 %v568
      %v636 = vpop.f32.mrb[0].mxu0
      %v637 = vadd.f32 0.0, %v636
      %v638 = vpop.f32.mrb[0].mxu0
      %639 = vdwg.mxu0
      %v641 = vsel %vm567, %v545, 0
      %643 = vmatprep.subr.mxu0 0.0
      %644 = vmatpush1.msra.mxu0 %v549
      %645 = vmatprep.subr.mxu0 0.0
      %646 = vmatpush1.msra.mxu0 %v550
      %647 = vmatprep.subr.mxu0 0.0
      %648 = vmatpush1.msra.mxu0 %v551
      %649 = vmatprep.subr.mxu0 0.0
      %650 = vmatpush1.msra.mxu0 %v552
      %651 = vmatprep.subr.mxu0 0.0
      %652 = vmatpush1.msra.mxu0 %v553
      %653 = vmatprep.subr.mxu0 0.0
      %654 = vmatpush1.msra.mxu0 %v554
      %655 = vmatprep.subr.mxu0 0.0
      %656 = vmatpush1.msra.mxu0 %v555
      %657 = vmatprep.subr.mxu0 0.0
      %658 = vmatpush1.msra.mxu0 %v556
      %659 = vmatprep.subr.mxu0 0.0
      %660 = vmatpush1.msra.mxu0 0.0
      %661 = vmatprep.subr.mxu0 0.0
      %662 = vmatpush1.msra.mxu0 0.0
      %663 = vmatprep.subr.mxu0 0.0
      %664 = vmatpush1.msra.mxu0 0.0
      %665 = vmatprep.subr.mxu0 0.0
      %666 = vmatpush1.msra.mxu0 0.0
      %667 = vmatprep.subr.mxu0 0.0
      %668 = vmatpush1.msra.mxu0 0.0
      %669 = vmatprep.subr.mxu0 0.0
      %670 = vmatpush1.msra.mxu0 0.0
      %671 = vmatprep.subr.mxu0 0.0
      %672 = vmatpush1.msra.mxu0 0.0
      %673 = vmatprep.subr.mxu0 0.0
      %674 = vmatpush1.msra.mxu0 0.0
      %675 = vmatprep.subr.mxu0 0.0
      %676 = vmatpush1.msra.mxu0 0.0
      %677 = vmatprep.subr.mxu0 0.0
      %678 = vmatpush1.msra.mxu0 0.0
      %679 = vmatprep.subr.mxu0 0.0
      %680 = vmatpush1.msra.mxu0 0.0
      %681 = vmatprep.subr.mxu0 0.0
      %682 = vmatpush1.msra.mxu0 0.0
      %683 = vmatprep.subr.mxu0 0.0
      %684 = vmatpush1.msra.mxu0 0.0
      %685 = vmatprep.subr.mxu0 0.0
      %686 = vmatpush1.msra.mxu0 0.0
      %687 = vmatprep.subr.mxu0 0.0
      %688 = vmatpush1.msra.mxu0 0.0
      %689 = vmatprep.subr.mxu0 0.0
      %690 = vmatpush1.msra.mxu0 0.0
      %691 = vmatprep.subr.mxu0 0.0
      %692 = vmatpush1.msra.mxu0 0.0
      %693 = vmatprep.subr.mxu0 0.0
      %694 = vmatpush1.msra.mxu0 0.0
      %695 = vmatprep.subr.mxu0 0.0
      %696 = vmatpush1.msra.mxu0 0.0
      %697 = vmatprep.subr.mxu0 0.0
      %698 = vmatpush1.msra.mxu0 0.0
      %699 = vmatprep.subr.mxu0 0.0
      %700 = vmatpush1.msra.mxu0 0.0
      %701 = vmatprep.subr.mxu0 0.0
      %702 = vmatpush1.msra.mxu0 0.0
      %703 = vmatprep.subr.mxu0 0.0
      %704 = vmatpush1.msra.mxu0 0.0
      %705 = vmatprep.subr.mxu0 0.0
      %706 = vmatpush1.msra.mxu0 0.0
      %707 = vmatprep.mubr.f32.mxu0 0.0
      %708 = vmatmul.mubr.f32.gmra.mrb[0].mxu0 %v641
      %v709 = vpop.f32.mrb[0].mxu0
      %v710 = vadd.f32 %v637, %v709
      %v711 = vpop.f32.mrb[0].mxu0
      %712 = vdwg.mxu0
      %v713 = vld [vmem:[%s15] sm:$0x1]
      %v714 = vadd.f32 %v710, %v713
      %vm715 = vcmask 523265
      %v716 = vsel %vm715, %v542, 0.0
      %717 = vadd.xlane.f32.xlu0 %v716
      %v718 = vpop.xlane.xlu0 %717
      %v719 = vsel %vm567, %v543, 0.0
      %720 = vadd.xlane.f32.xlu0 %v719
      %v721 = vpop.xlane.xlu0 %720
      %vm722 = vcmask 516096
      %v723 = vsel %vm722, %v544, 0.0
      %724 = vadd.xlane.f32.xlu0 %v723
      %v725 = vpop.xlane.xlu0 %724
      %v726 = vrcp.pop 64.0
      %v727 = vmul.f32 %v718, %v726
      %v728 = vmul.f32 %v721, %v726
      %v729 = vmul.f32 %v725, %v726
      %v730 = vsub.f32 %v542, %v727
      %v731 = vsub.f32 %v543, %v728
      %v732 = vsub.f32 %v544, %v729
      %v733 = vmul.f32 %v730, %v730
      %v734 = vmul.f32 %v731, %v731
      %v735 = vmul.f32 %v732, %v732
      %v736 = vsel %vm715, %v733, 0.0
      %737 = vadd.xlane.f32.xlu0 %v736
      %v738 = vpop.xlane.xlu0 %737
      %v739 = vsel %vm567, %v734, 0.0
      %740 = vadd.xlane.f32.xlu0 %v739
      %v741 = vpop.xlane.xlu0 %740
      %v742 = vsel %vm722, %v735, 0.0
      %743 = vadd.xlane.f32.xlu0 %v742
      %v744 = vpop.xlane.xlu0 %743
      %v745 = vmul.f32 %v738, %v726
      %v746 = vmul.f32 %v741, %v726
      %v747 = vmul.f32 %v744, %v726
      %v748 = vadd.f32 %v745, 1e-05
      %v749 = vadd.f32 %v746, 1e-05
      %v750 = vadd.f32 %v747, 1e-05
      %v751 = vrsqrt.pop %v748
      %v752 = vrsqrt.pop %v749
      %v753 = vrsqrt.pop %v750
      %v754 = vmul.f32 %v730, %v751
      %v755 = vmul.f32 %v731, %v752
      %v756 = vmul.f32 %v732, %v753
      %v758 = vlaneseq
      %v759 = vshrl.u32 %v758, 7
      %v760 = vsub.s32 0, %v759
      %v761 = vrot.slane %v547, %v760
      %v763 = vmul.f32 %v754, %v761
      %v764 = vmul.f32 %v755, %v761
      %v765 = vmul.f32 %v756, %v761
      %v767 = vlaneseq
      %v768 = vshrl.u32 %v767, 7
      %v769 = vsub.s32 0, %v768
      %v770 = vrot.slane %v548, %v769
      %v772 = vadd.f32 %v763, %v770
      %v773 = vadd.f32 %v764, %v770
      %v774 = vadd.f32 %v765, %v770
      %v775 = vld [vmem:[%s4] sm:$0xff]
      %v776 = vld [vmem:[%s4 + $0x8] sm:$0xff]
      %v777 = vld [vmem:[%s4 + $0x10] sm:$0xff]
      %v778 = vld [vmem:[%s4 + $0x18] sm:$0xff]
      %v779 = vld [vmem:[%s4 + $0x20] sm:$0xff]
      %v780 = vld [vmem:[%s4 + $0x28] sm:$0xff]
      %v781 = vld [vmem:[%s4 + $0x30] sm:$0xff]
      %v782 = vld [vmem:[%s4 + $0x38] sm:$0xff]
      %v783 = vld [vmem:[%s5] sm:$0x1]
      %v785 = vlaneseq
      %v786 = vshrl.u32 %v785, 7
      %v787 = vsub.s32 0, %v786
      %v788 = vrot.slane %v783, %v787
      %vm793 = vcmask 1046528
      %v794 = vrot.slane %v772, 1
      %v795 = vrot.slane %v773, 1
      %v796 = vsel %vm793, %v794, %v795
      %v797 = vrot.slane %v774, 1
      %v798 = vsel %vm793, %v795, %v797
      %v799 = vsel %vm567, %v796, 0
      %v801 = vsel %vm567, %v798, 0
      %803 = vmatprep.subr.mxu0 0.0
      %804 = vmatpush1.msra.mxu0 %v775
      %805 = vmatprep.subr.mxu0 0.0
      %806 = vmatpush1.msra.mxu0 %v776
      %807 = vmatprep.subr.mxu0 0.0
      %808 = vmatpush1.msra.mxu0 %v777
      %809 = vmatprep.subr.mxu0 0.0
      %810 = vmatpush1.msra.mxu0 %v778
      %811 = vmatprep.subr.mxu0 0.0
      %812 = vmatpush1.msra.mxu0 %v779
      %813 = vmatprep.subr.mxu0 0.0
      %814 = vmatpush1.msra.mxu0 %v780
      %815 = vmatprep.subr.mxu0 0.0
      %816 = vmatpush1.msra.mxu0 %v781
      %817 = vmatprep.subr.mxu0 0.0
      %818 = vmatpush1.msra.mxu0 %v782
      %819 = vmatprep.subr.mxu0 0.0
      %820 = vmatpush1.msra.mxu0 0.0
      %821 = vmatprep.subr.mxu0 0.0
      %822 = vmatpush1.msra.mxu0 0.0
      %823 = vmatprep.subr.mxu0 0.0
      %824 = vmatpush1.msra.mxu0 0.0
      %825 = vmatprep.subr.mxu0 0.0
      %826 = vmatpush1.msra.mxu0 0.0
      %827 = vmatprep.subr.mxu0 0.0
      %828 = vmatpush1.msra.mxu0 0.0
      %829 = vmatprep.subr.mxu0 0.0
      %830 = vmatpush1.msra.mxu0 0.0
      %831 = vmatprep.subr.mxu0 0.0
      %832 = vmatpush1.msra.mxu0 0.0
      %833 = vmatprep.subr.mxu0 0.0
      %834 = vmatpush1.msra.mxu0 0.0
      %835 = vmatprep.subr.mxu0 0.0
      %836 = vmatpush1.msra.mxu0 0.0
      %837 = vmatprep.subr.mxu0 0.0
      %838 = vmatpush1.msra.mxu0 0.0
      %839 = vmatprep.subr.mxu0 0.0
      %840 = vmatpush1.msra.mxu0 0.0
      %841 = vmatprep.subr.mxu0 0.0
      %842 = vmatpush1.msra.mxu0 0.0
      %843 = vmatprep.subr.mxu0 0.0
      %844 = vmatpush1.msra.mxu0 0.0
      %845 = vmatprep.subr.mxu0 0.0
      %846 = vmatpush1.msra.mxu0 0.0
      %847 = vmatprep.subr.mxu0 0.0
      %848 = vmatpush1.msra.mxu0 0.0
      %849 = vmatprep.subr.mxu0 0.0
      %850 = vmatpush1.msra.mxu0 0.0
      %851 = vmatprep.subr.mxu0 0.0
      %852 = vmatpush1.msra.mxu0 0.0
      %853 = vmatprep.subr.mxu0 0.0
      %854 = vmatpush1.msra.mxu0 0.0
      %855 = vmatprep.subr.mxu0 0.0
      %856 = vmatpush1.msra.mxu0 0.0
      %857 = vmatprep.subr.mxu0 0.0
      %858 = vmatpush1.msra.mxu0 0.0
      %859 = vmatprep.subr.mxu0 0.0
      %860 = vmatpush1.msra.mxu0 0.0
      %861 = vmatprep.subr.mxu0 0.0
      %862 = vmatpush1.msra.mxu0 0.0
      %863 = vmatprep.subr.mxu0 0.0
      %864 = vmatpush1.msra.mxu0 0.0
      %865 = vmatprep.subr.mxu0 0.0
      %866 = vmatpush1.msra.mxu0 0.0
      %867 = vmatprep.mubr.f32.mxu0 0.0
      %868 = vmatmul.mubr.f32.gmra.mrb[0].mxu0 %v799
      %v869 = vpop.f32.mrb[0].mxu0
      %v870 = vadd.f32 %v788, %v869
      %v871 = vpop.f32.mrb[0].mxu0
      %872 = vmatprep.mubr.f32.mxu0 0.0
      %873 = vmatmul.mubr.f32.gmra.mrb[0].mxu0 %v801
      %v874 = vpop.f32.mrb[0].mxu0
      %v875 = vadd.f32 %v788, %v874
      %v876 = vpop.f32.mrb[0].mxu0
      %877 = vdwg.mxu0
      %v878 = vld [vmem:[%s6] sm:$0xff]
      %v879 = vld [vmem:[%s6 + $0x8] sm:$0xff]
      %v880 = vld [vmem:[%s6 + $0x10] sm:$0xff]
      %v881 = vld [vmem:[%s6 + $0x18] sm:$0xff]
      %v882 = vld [vmem:[%s6 + $0x20] sm:$0xff]
      %v883 = vld [vmem:[%s6 + $0x28] sm:$0xff]
      %v884 = vld [vmem:[%s6 + $0x30] sm:$0xff]
      %v885 = vld [vmem:[%s6 + $0x38] sm:$0xff]
      %v886 = vld [vmem:[%s7] sm:$0x1]
      %v888 = vlaneseq
      %v889 = vshrl.u32 %v888, 7
      %v890 = vsub.s32 0, %v889
      %v891 = vrot.slane %v886, %v890
      %v894 = vrot.slane %v545, 1
      %v895 = vrot.slane %v546, 1
      %v896 = vsel %vm793, %v894, %v895
      %v897 = vsel %vm567, %v896, 0
      %899 = vmatprep.subr.mxu0 0.0
      %900 = vmatpush1.msra.mxu0 %v878
      %901 = vmatprep.subr.mxu0 0.0
      %902 = vmatpush1.msra.mxu0 %v879
      %903 = vmatprep.subr.mxu0 0.0
      %904 = vmatpush1.msra.mxu0 %v880
      %905 = vmatprep.subr.mxu0 0.0
      %906 = vmatpush1.msra.mxu0 %v881
      %907 = vmatprep.subr.mxu0 0.0
      %908 = vmatpush1.msra.mxu0 %v882
      %909 = vmatprep.subr.mxu0 0.0
      %910 = vmatpush1.msra.mxu0 %v883
      %911 = vmatprep.subr.mxu0 0.0
      %912 = vmatpush1.msra.mxu0 %v884
      %913 = vmatprep.subr.mxu0 0.0
      %914 = vmatpush1.msra.mxu0 %v885
      %915 = vmatprep.subr.mxu0 0.0
      %916 = vmatpush1.msra.mxu0 0.0
      %917 = vmatprep.subr.mxu0 0.0
      %918 = vmatpush1.msra.mxu0 0.0
      %919 = vmatprep.subr.mxu0 0.0
      %920 = vmatpush1.msra.mxu0 0.0
      %921 = vmatprep.subr.mxu0 0.0
      %922 = vmatpush1.msra.mxu0 0.0
      %923 = vmatprep.subr.mxu0 0.0
      %924 = vmatpush1.msra.mxu0 0.0
      %925 = vmatprep.subr.mxu0 0.0
      %926 = vmatpush1.msra.mxu0 0.0
      %927 = vmatprep.subr.mxu0 0.0
      %928 = vmatpush1.msra.mxu0 0.0
      %929 = vmatprep.subr.mxu0 0.0
      %930 = vmatpush1.msra.mxu0 0.0
      %931 = vmatprep.subr.mxu0 0.0
      %932 = vmatpush1.msra.mxu0 0.0
      %933 = vmatprep.subr.mxu0 0.0
      %934 = vmatpush1.msra.mxu0 0.0
      %935 = vmatprep.subr.mxu0 0.0
      %936 = vmatpush1.msra.mxu0 0.0
      %937 = vmatprep.subr.mxu0 0.0
      %938 = vmatpush1.msra.mxu0 0.0
      %939 = vmatprep.subr.mxu0 0.0
      %940 = vmatpush1.msra.mxu0 0.0
      %941 = vmatprep.subr.mxu0 0.0
      %942 = vmatpush1.msra.mxu0 0.0
      %943 = vmatprep.subr.mxu0 0.0
      %944 = vmatpush1.msra.mxu0 0.0
      %945 = vmatprep.subr.mxu0 0.0
      %946 = vmatpush1.msra.mxu0 0.0
      %947 = vmatprep.subr.mxu0 0.0
      %948 = vmatpush1.msra.mxu0 0.0
      %949 = vmatprep.subr.mxu0 0.0
      %950 = vmatpush1.msra.mxu0 0.0
      %951 = vmatprep.subr.mxu0 0.0
      %952 = vmatpush1.msra.mxu0 0.0
      %953 = vmatprep.subr.mxu0 0.0
      %954 = vmatpush1.msra.mxu0 0.0
      %955 = vmatprep.subr.mxu0 0.0
      %956 = vmatpush1.msra.mxu0 0.0
      %957 = vmatprep.subr.mxu0 0.0
      %958 = vmatpush1.msra.mxu0 0.0
      %959 = vmatprep.subr.mxu0 0.0
      %960 = vmatpush1.msra.mxu0 0.0
      %961 = vmatprep.subr.mxu0 0.0
      %962 = vmatpush1.msra.mxu0 0.0
      %963 = vmatprep.mubr.f32.mxu0 0.0
      %964 = vmatmul.mubr.f32.gmra.mrb[0].mxu0 %v897
      %v965 = vpop.f32.mrb[0].mxu0
      %v966 = vadd.f32 %v891, %v965
      %v967 = vpop.f32.mrb[0].mxu0
      %968 = vdwg.mxu0
      %vm969 = vcmask 64512
      %v971 = vsel %vm969, %v870, 0
      %v974 = vsel %vm969, %v875, 0
      %v977 = vsel %vm969, %v966, 0
      %979 = vmatprep.subr.mxu0 0.0
      %980 = vmatpush1.xpose.msra.mxu0 %v977
      %981 = vmatprep.subr.mxu0 0.0
      %982 = vmatpush1.xpose.msra.mxu0 0.0
      %983 = vmatprep.subr.mxu0 0.0
      %984 = vmatpush1.xpose.msra.mxu0 0.0
      %985 = vmatprep.subr.mxu0 0.0
      %986 = vmatpush1.xpose.msra.mxu0 0.0
      %987 = vmatprep.subr.mxu0 0.0
      %988 = vmatpush1.xpose.msra.mxu0 0.0
      %989 = vmatprep.subr.mxu0 0.0
      %990 = vmatpush1.xpose.msra.mxu0 0.0
      %991 = vmatprep.subr.mxu0 0.0
      %992 = vmatpush1.xpose.msra.mxu0 0.0
      %993 = vmatprep.subr.mxu0 0.0
      %994 = vmatpush1.xpose.msra.mxu0 0.0
      %995 = vmatprep.subr.mxu0 0.0
      %996 = vmatpush1.xpose.msra.mxu0 0.0
      %997 = vmatprep.subr.mxu0 0.0
      %998 = vmatpush1.xpose.msra.mxu0 0.0
      %999 = vmatprep.subr.mxu0 0.0
      %1000 = vmatpush1.xpose.msra.mxu0 0.0
      %1001 = vmatprep.subr.mxu0 0.0
      %1002 = vmatpush1.xpose.msra.mxu0 0.0
      %1003 = vmatprep.subr.mxu0 0.0
      %1004 = vmatpush1.xpose.msra.mxu0 0.0
      %1005 = vmatprep.subr.mxu0 0.0
      %1006 = vmatpush1.xpose.msra.mxu0 0.0
      %1007 = vmatprep.subr.mxu0 0.0
      %1008 = vmatpush1.xpose.msra.mxu0 0.0
      %1009 = vmatprep.subr.mxu0 0.0
      %1010 = vmatpush1.xpose.msra.mxu0 0.0
      %1011 = vmatprep.subr.mxu0 0.0
      %1012 = vmatpush1.xpose.msra.mxu0 0.0
      %1013 = vmatprep.subr.mxu0 0.0
      %1014 = vmatpush1.xpose.msra.mxu0 0.0
      %1015 = vmatprep.subr.mxu0 0.0
      %1016 = vmatpush1.xpose.msra.mxu0 0.0
      %1017 = vmatprep.subr.mxu0 0.0
      %1018 = vmatpush1.xpose.msra.mxu0 0.0
      %1019 = vmatprep.subr.mxu0 0.0
      %1020 = vmatpush1.xpose.msra.mxu0 0.0
      %1021 = vmatprep.subr.mxu0 0.0
      %1022 = vmatpush1.xpose.msra.mxu0 0.0
      %1023 = vmatprep.subr.mxu0 0.0
      %1024 = vmatpush1.xpose.msra.mxu0 0.0
      %1025 = vmatprep.subr.mxu0 0.0
      %1026 = vmatpush1.xpose.msra.mxu0 0.0
      %1027 = vmatprep.subr.mxu0 0.0
      %1028 = vmatpush1.xpose.msra.mxu0 0.0
      %1029 = vmatprep.subr.mxu0 0.0
      %1030 = vmatpush1.xpose.msra.mxu0 0.0
      %1031 = vmatprep.subr.mxu0 0.0
      %1032 = vmatpush1.xpose.msra.mxu0 0.0
      %1033 = vmatprep.subr.mxu0 0.0
      %1034 = vmatpush1.xpose.msra.mxu0 0.0
      %1035 = vmatprep.subr.mxu0 0.0
      %1036 = vmatpush1.xpose.msra.mxu0 0.0
      %1037 = vmatprep.subr.mxu0 0.0
      %1038 = vmatpush1.xpose.msra.mxu0 0.0
      %1039 = vmatprep.subr.mxu0 0.0
      %1040 = vmatpush1.xpose.msra.mxu0 0.0
      %1041 = vmatprep.subr.mxu0 0.0
      %1042 = vmatpush1.xpose.msra.mxu0 0.0
      %1043 = vmatprep.mubr.f32.mxu0 0.0
      %1044 = vmatmul.mubr.f32.gmra.mrb[0].mxu0 %v971
      %v1045 = vpop.f32.mrb[0].mxu0
      %v1046 = vadd.f32 0.0, %v1045
      %v1047 = vpop.f32.mrb[0].mxu0
      %1048 = vmatprep.mubr.f32.mxu0 0.0
      %1049 = vmatmul.mubr.f32.gmra.mrb[0].mxu0 %v974
      %v1050 = vpop.f32.mrb[0].mxu0
      %v1051 = vadd.f32 0.0, %v1050
      %v1052 = vpop.f32.mrb[0].mxu0
      %1053 = vdwg.mxu0
      %v1054 = vsel %vm969, %v1046, -inf
      %1055 = vmax.xlane.f32.xlu0 %v1054
      %v1056 = vpop.xlane.xlu0 %1055
      %v1057 = vsel %vm969, %v1051, -inf
      %1058 = vmax.xlane.f32.xlu0 %v1057
      %v1059 = vpop.xlane.xlu0 %1058
      %v1060 = vsub.f32 %v1046, %v1056
      %v1061 = vsub.f32 %v1051, %v1059
      %v1062 = vmul.f32 %v1060, 1.442695
      %v1063 = vpow.pop %v1062
      %v1064 = vmul.f32 %v1061, 1.442695
      %v1065 = vpow.pop %v1064
      %v1066 = vsel %vm969, %v1063, 0.0
      %1067 = vadd.xlane.f32.xlu0 %v1066
      %v1068 = vpop.xlane.xlu0 %1067
      %v1069 = vsel %vm969, %v1065, 0.0
      %1070 = vadd.xlane.f32.xlu0 %v1069
      %v1071 = vpop.xlane.xlu0 %1070
      %v1072 = vrcp.pop %v1068
      %v1073 = vrcp.pop %v1071
      %v1074 = vmul.f32 %v1063, %v1072
      %v1075 = vmul.f32 %v1065, %v1073
      %1076 = vrot.lane.b32.xlu0 %v966, 64
      %v1077 = vpop.permute.xlu0 %1076
      %v1080 = vsel %vm969, %v1074, 0
      %v1083 = vsel %vm969, %v1075, 0
      %1085 = vmatprep.subr.mxu0 0.0
      %1086 = vmatpush1.msra.mxu0 %v1077
      %1087 = vmatprep.subr.mxu0 0.0
      %1088 = vmatpush1.msra.mxu0 0.0
      %1089 = vmatprep.subr.mxu0 0.0
      %1090 = vmatpush1.msra.mxu0 0.0
      %1091 = vmatprep.subr.mxu0 0.0
      %1092 = vmatpush1.msra.mxu0 0.0
      %1093 = vmatprep.subr.mxu0 0.0
      %1094 = vmatpush1.msra.mxu0 0.0
      %1095 = vmatprep.subr.mxu0 0.0
      %1096 = vmatpush1.msra.mxu0 0.0
      %1097 = vmatprep.subr.mxu0 0.0
      %1098 = vmatpush1.msra.mxu0 0.0
      %1099 = vmatprep.subr.mxu0 0.0
      %1100 = vmatpush1.msra.mxu0 0.0
      %1101 = vmatprep.subr.mxu0 0.0
      %1102 = vmatpush1.msra.mxu0 0.0
      %1103 = vmatprep.subr.mxu0 0.0
      %1104 = vmatpush1.msra.mxu0 0.0
      %1105 = vmatprep.subr.mxu0 0.0
      %1106 = vmatpush1.msra.mxu0 0.0
      %1107 = vmatprep.subr.mxu0 0.0
      %1108 = vmatpush1.msra.mxu0 0.0
      %1109 = vmatprep.subr.mxu0 0.0
      %1110 = vmatpush1.msra.mxu0 0.0
      %1111 = vmatprep.subr.mxu0 0.0
      %1112 = vmatpush1.msra.mxu0 0.0
      %1113 = vmatprep.subr.mxu0 0.0
      %1114 = vmatpush1.msra.mxu0 0.0
      %1115 = vmatprep.subr.mxu0 0.0
      %1116 = vmatpush1.msra.mxu0 0.0
      %1117 = vmatprep.subr.mxu0 0.0
      %1118 = vmatpush1.msra.mxu0 0.0
      %1119 = vmatprep.subr.mxu0 0.0
      %1120 = vmatpush1.msra.mxu0 0.0
      %1121 = vmatprep.subr.mxu0 0.0
      %1122 = vmatpush1.msra.mxu0 0.0
      %1123 = vmatprep.subr.mxu0 0.0
      %1124 = vmatpush1.msra.mxu0 0.0
      %1125 = vmatprep.subr.mxu0 0.0
      %1126 = vmatpush1.msra.mxu0 0.0
      %1127 = vmatprep.subr.mxu0 0.0
      %1128 = vmatpush1.msra.mxu0 0.0
      %1129 = vmatprep.subr.mxu0 0.0
      %1130 = vmatpush1.msra.mxu0 0.0
      %1131 = vmatprep.subr.mxu0 0.0
      %1132 = vmatpush1.msra.mxu0 0.0
      %1133 = vmatprep.subr.mxu0 0.0
      %1134 = vmatpush1.msra.mxu0 0.0
      %1135 = vmatprep.subr.mxu0 0.0
      %1136 = vmatpush1.msra.mxu0 0.0
      %1137 = vmatprep.subr.mxu0 0.0
      %1138 = vmatpush1.msra.mxu0 0.0
      %1139 = vmatprep.subr.mxu0 0.0
      %1140 = vmatpush1.msra.mxu0 0.0
      %1141 = vmatprep.subr.mxu0 0.0
      %1142 = vmatpush1.msra.mxu0 0.0
      %1143 = vmatprep.subr.mxu0 0.0
      %1144 = vmatpush1.msra.mxu0 0.0
      %1145 = vmatprep.subr.mxu0 0.0
      %1146 = vmatpush1.msra.mxu0 0.0
      %1147 = vmatprep.subr.mxu0 0.0
      %1148 = vmatpush1.msra.mxu0 0.0
      %1149 = vmatprep.mubr.f32.mxu0 0.0
      %1150 = vmatmul.mubr.f32.gmra.mrb[0].mxu0 %v1080
      %v1151 = vpop.f32.mrb[0].mxu0
      %v1152 = vadd.f32 0.0, %v1151
      %v1153 = vpop.f32.mrb[0].mxu0
      %1154 = vmatprep.mubr.f32.mxu0 0.0
      %1155 = vmatmul.mubr.f32.gmra.mrb[0].mxu0 %v1083
      %v1156 = vpop.f32.mrb[0].mxu0
      %v1157 = vadd.f32 0.0, %v1156
      %v1158 = vpop.f32.mrb[0].mxu0
      %1159 = vdwg.mxu0
      %1160 = vst.msk [vmem:[#allocation2] sm:$0xff] %vm969, %v1152
      %1161 = vst.msk [vmem:[#allocation2 + $0x8] sm:$0xff] %vm969, %v1157
      %1162 = vrot.lane.b32.xlu0 %v870, 120
      %v1163 = vpop.permute.xlu0 %1162
      %1164 = vrot.lane.b32.xlu0 %v875, 120
      %v1165 = vpop.permute.xlu0 %1164
      %1166 = vrot.lane.b32.xlu0 %v966, 120
      %v1167 = vpop.permute.xlu0 %1166
      %v1168 = vsel %vm969, %v1163, 0
      %v1170 = vsel %vm969, %v1165, 0
      %v1172 = vsel %vm969, %v1167, 0
      %1174 = vmatprep.subr.mxu0 0.0
      %1175 = vmatpush1.xpose.msra.mxu0 %v1172
      %1176 = vmatprep.subr.mxu0 0.0
      %1177 = vmatpush1.xpose.msra.mxu0 0.0
      %1178 = vmatprep.subr.mxu0 0.0
      %1179 = vmatpush1.xpose.msra.mxu0 0.0
      %1180 = vmatprep.subr.mxu0 0.0
      %1181 = vmatpush1.xpose.msra.mxu0 0.0
      %1182 = vmatprep.subr.mxu0 0.0
      %1183 = vmatpush1.xpose.msra.mxu0 0.0
      %1184 = vmatprep.subr.mxu0 0.0
      %1185 = vmatpush1.xpose.msra.mxu0 0.0
      %1186 = vmatprep.subr.mxu0 0.0
      %1187 = vmatpush1.xpose.msra.mxu0 0.0
      %1188 = vmatprep.subr.mxu0 0.0
      %1189 = vmatpush1.xpose.msra.mxu0 0.0
      %1190 = vmatprep.subr.mxu0 0.0
      %1191 = vmatpush1.xpose.msra.mxu0 0.0
      %1192 = vmatprep.subr.mxu0 0.0
      %1193 = vmatpush1.xpose.msra.mxu0 0.0
      %1194 = vmatprep.subr.mxu0 0.0
      %1195 = vmatpush1.xpose.msra.mxu0 0.0
      %1196 = vmatprep.subr.mxu0 0.0
      %1197 = vmatpush1.xpose.msra.mxu0 0.0
      %1198 = vmatprep.subr.mxu0 0.0
      %1199 = vmatpush1.xpose.msra.mxu0 0.0
      %1200 = vmatprep.subr.mxu0 0.0
      %1201 = vmatpush1.xpose.msra.mxu0 0.0
      %1202 = vmatprep.subr.mxu0 0.0
      %1203 = vmatpush1.xpose.msra.mxu0 0.0
      %1204 = vmatprep.subr.mxu0 0.0
      %1205 = vmatpush1.xpose.msra.mxu0 0.0
      %1206 = vmatprep.subr.mxu0 0.0
      %1207 = vmatpush1.xpose.msra.mxu0 0.0
      %1208 = vmatprep.subr.mxu0 0.0
      %1209 = vmatpush1.xpose.msra.mxu0 0.0
      %1210 = vmatprep.subr.mxu0 0.0
      %1211 = vmatpush1.xpose.msra.mxu0 0.0
      %1212 = vmatprep.subr.mxu0 0.0
      %1213 = vmatpush1.xpose.msra.mxu0 0.0
      %1214 = vmatprep.subr.mxu0 0.0
      %1215 = vmatpush1.xpose.msra.mxu0 0.0
      %1216 = vmatprep.subr.mxu0 0.0
      %1217 = vmatpush1.xpose.msra.mxu0 0.0
      %1218 = vmatprep.subr.mxu0 0.0
      %1219 = vmatpush1.xpose.msra.mxu0 0.0
      %1220 = vmatprep.subr.mxu0 0.0
      %1221 = vmatpush1.xpose.msra.mxu0 0.0
      %1222 = vmatprep.subr.mxu0 0.0
      %1223 = vmatpush1.xpose.msra.mxu0 0.0
      %1224 = vmatprep.subr.mxu0 0.0
      %1225 = vmatpush1.xpose.msra.mxu0 0.0
      %1226 = vmatprep.subr.mxu0 0.0
      %1227 = vmatpush1.xpose.msra.mxu0 0.0
      %1228 = vmatprep.subr.mxu0 0.0
      %1229 = vmatpush1.xpose.msra.mxu0 0.0
      %1230 = vmatprep.subr.mxu0 0.0
      %1231 = vmatpush1.xpose.msra.mxu0 0.0
      %1232 = vmatprep.subr.mxu0 0.0
      %1233 = vmatpush1.xpose.msra.mxu0 0.0
      %1234 = vmatprep.subr.mxu0 0.0
      %1235 = vmatpush1.xpose.msra.mxu0 0.0
      %1236 = vmatprep.subr.mxu0 0.0
      %1237 = vmatpush1.xpose.msra.mxu0 0.0
      %1238 = vmatprep.mubr.f32.mxu0 0.0
      %1239 = vmatmul.mubr.f32.gmra.mrb[0].mxu0 %v1168
      %v1240 = vpop.f32.mrb[0].mxu0
      %v1241 = vadd.f32 0.0, %v1240
      %v1242 = vpop.f32.mrb[0].mxu0
      %1243 = vmatprep.mubr.f32.mxu0 0.0
      %1244 = vmatmul.mubr.f32.gmra.mrb[0].mxu0 %v1170
      %v1245 = vpop.f32.mrb[0].mxu0
      %v1246 = vadd.f32 0.0, %v1245
      %v1247 = vpop.f32.mrb[0].mxu0
      %1248 = vdwg.mxu0
      %v1249 = vsel %vm969, %v1241, -inf
      %1250 = vmax.xlane.f32.xlu0 %v1249
      %v1251 = vpop.xlane.xlu0 %1250
      %v1252 = vsel %vm969, %v1246, -inf
      %1253 = vmax.xlane.f32.xlu0 %v1252
      %v1254 = vpop.xlane.xlu0 %1253
      %v1255 = vsub.f32 %v1241, %v1251
      %v1256 = vsub.f32 %v1246, %v1254
      %v1257 = vmul.f32 %v1255, 1.442695
      %v1258 = vpow.pop %v1257
      %v1259 = vmul.f32 %v1256, 1.442695
      %v1260 = vpow.pop %v1259
      %v1261 = vsel %vm969, %v1258, 0.0
      %1262 = vadd.xlane.f32.xlu0 %v1261
      %v1263 = vpop.xlane.xlu0 %1262
      %v1264 = vsel %vm969, %v1260, 0.0
      %1265 = vadd.xlane.f32.xlu0 %v1264
      %v1266 = vpop.xlane.xlu0 %1265
      %v1267 = vrcp.pop %v1263
      %v1268 = vrcp.pop %v1266
      %v1269 = vmul.f32 %v1258, %v1267
      %v1270 = vmul.f32 %v1260, %v1268
      %1271 = vrot.lane.b32.xlu0 %v966, 56
      %v1272 = vpop.permute.xlu0 %1271
      %v1275 = vsel %vm969, %v1269, 0
      %v1278 = vsel %vm969, %v1270, 0
      %1280 = vmatprep.subr.mxu0 0.0
      %1281 = vmatpush1.msra.mxu0 %v1272
      %1282 = vmatprep.subr.mxu0 0.0
      %1283 = vmatpush1.msra.mxu0 0.0
      %1284 = vmatprep.subr.mxu0 0.0
      %1285 = vmatpush1.msra.mxu0 0.0
      %1286 = vmatprep.subr.mxu0 0.0
      %1287 = vmatpush1.msra.mxu0 0.0
      %1288 = vmatprep.subr.mxu0 0.0
      %1289 = vmatpush1.msra.mxu0 0.0
      %1290 = vmatprep.subr.mxu0 0.0
      %1291 = vmatpush1.msra.mxu0 0.0
      %1292 = vmatprep.subr.mxu0 0.0
      %1293 = vmatpush1.msra.mxu0 0.0
      %1294 = vmatprep.subr.mxu0 0.0
      %1295 = vmatpush1.msra.mxu0 0.0
      %1296 = vmatprep.subr.mxu0 0.0
      %1297 = vmatpush1.msra.mxu0 0.0
      %1298 = vmatprep.subr.mxu0 0.0
      %1299 = vmatpush1.msra.mxu0 0.0
      %1300 = vmatprep.subr.mxu0 0.0
      %1301 = vmatpush1.msra.mxu0 0.0
      %1302 = vmatprep.subr.mxu0 0.0
      %1303 = vmatpush1.msra.mxu0 0.0
      %1304 = vmatprep.subr.mxu0 0.0
      %1305 = vmatpush1.msra.mxu0 0.0
      %1306 = vmatprep.subr.mxu0 0.0
      %1307 = vmatpush1.msra.mxu0 0.0
      %1308 = vmatprep.subr.mxu0 0.0
      %1309 = vmatpush1.msra.mxu0 0.0
      %1310 = vmatprep.subr.mxu0 0.0
      %1311 = vmatpush1.msra.mxu0 0.0
      %1312 = vmatprep.subr.mxu0 0.0
      %1313 = vmatpush1.msra.mxu0 0.0
      %1314 = vmatprep.subr.mxu0 0.0
      %1315 = vmatpush1.msra.mxu0 0.0
      %1316 = vmatprep.subr.mxu0 0.0
      %1317 = vmatpush1.msra.mxu0 0.0
      %1318 = vmatprep.subr.mxu0 0.0
      %1319 = vmatpush1.msra.mxu0 0.0
      %1320 = vmatprep.subr.mxu0 0.0
      %1321 = vmatpush1.msra.mxu0 0.0
      %1322 = vmatprep.subr.mxu0 0.0
      %1323 = vmatpush1.msra.mxu0 0.0
      %1324 = vmatprep.subr.mxu0 0.0
      %1325 = vmatpush1.msra.mxu0 0.0
      %1326 = vmatprep.subr.mxu0 0.0
      %1327 = vmatpush1.msra.mxu0 0.0
      %1328 = vmatprep.subr.mxu0 0.0
      %1329 = vmatpush1.msra.mxu0 0.0
      %1330 = vmatprep.subr.mxu0 0.0
      %1331 = vmatpush1.msra.mxu0 0.0
      %1332 = vmatprep.subr.mxu0 0.0
      %1333 = vmatpush1.msra.mxu0 0.0
      %1334 = vmatprep.subr.mxu0 0.0
      %1335 = vmatpush1.msra.mxu0 0.0
      %1336 = vmatprep.subr.mxu0 0.0
      %1337 = vmatpush1.msra.mxu0 0.0
      %1338 = vmatprep.subr.mxu0 0.0
      %1339 = vmatpush1.msra.mxu0 0.0
      %1340 = vmatprep.subr.mxu0 0.0
      %1341 = vmatpush1.msra.mxu0 0.0
      %1342 = vmatprep.subr.mxu0 0.0
      %1343 = vmatpush1.msra.mxu0 0.0
      %1344 = vmatprep.mubr.f32.mxu0 0.0
      %1345 = vmatmul.mubr.f32.gmra.mrb[0].mxu0 %v1275
      %v1346 = vpop.f32.mrb[0].mxu0
      %v1347 = vadd.f32 0.0, %v1346
      %v1348 = vpop.f32.mrb[0].mxu0
      %1349 = vmatprep.mubr.f32.mxu0 0.0
      %1350 = vmatmul.mubr.f32.gmra.mrb[0].mxu0 %v1278
      %v1351 = vpop.f32.mrb[0].mxu0
      %v1352 = vadd.f32 0.0, %v1351
      %v1353 = vpop.f32.mrb[0].mxu0
      %1354 = vdwg.mxu0
      %1357 = vrot.lane.b32.xlu0 %v1347, 8
      %v1358 = vpop.permute.xlu0 %1357
      %1359 = vrot.lane.b32.xlu0 %v1352, 8
      %v1360 = vpop.permute.xlu0 %1359
      %vm1363 = vcmask 130112
      %1364 = vst.msk [vmem:[#allocation2] sm:$0xff] %vm1363, %v1358
      %1365 = vst.msk [vmem:[#allocation2 + $0x8] sm:$0xff] %vm1363, %v1360
      %1366 = vrot.lane.b32.xlu0 %v870, 112
      %v1367 = vpop.permute.xlu0 %1366
      %1368 = vrot.lane.b32.xlu0 %v875, 112
      %v1369 = vpop.permute.xlu0 %1368
      %1370 = vrot.lane.b32.xlu0 %v966, 112
      %v1371 = vpop.permute.xlu0 %1370
      %v1372 = vsel %vm969, %v1367, 0
      %v1374 = vsel %vm969, %v1369, 0
      %v1376 = vsel %vm969, %v1371, 0
      %1378 = vmatprep.subr.mxu0 0.0
      %1379 = vmatpush1.xpose.msra.mxu0 %v1376
      %1380 = vmatprep.subr.mxu0 0.0
      %1381 = vmatpush1.xpose.msra.mxu0 0.0
      %1382 = vmatprep.subr.mxu0 0.0
      %1383 = vmatpush1.xpose.msra.mxu0 0.0
      %1384 = vmatprep.subr.mxu0 0.0
      %1385 = vmatpush1.xpose.msra.mxu0 0.0
      %1386 = vmatprep.subr.mxu0 0.0
      %1387 = vmatpush1.xpose.msra.mxu0 0.0
      %1388 = vmatprep.subr.mxu0 0.0
      %1389 = vmatpush1.xpose.msra.mxu0 0.0
      %1390 = vmatprep.subr.mxu0 0.0
      %1391 = vmatpush1.xpose.msra.mxu0 0.0
      %1392 = vmatprep.subr.mxu0 0.0
      %1393 = vmatpush1.xpose.msra.mxu0 0.0
      %1394 = vmatprep.subr.mxu0 0.0
      %1395 = vmatpush1.xpose.msra.mxu0 0.0
      %1396 = vmatprep.subr.mxu0 0.0
      %1397 = vmatpush1.xpose.msra.mxu0 0.0
      %1398 = vmatprep.subr.mxu0 0.0
      %1399 = vmatpush1.xpose.msra.mxu0 0.0
      %1400 = vmatprep.subr.mxu0 0.0
      %1401 = vmatpush1.xpose.msra.mxu0 0.0
      %1402 = vmatprep.subr.mxu0 0.0
      %1403 = vmatpush1.xpose.msra.mxu0 0.0
      %1404 = vmatprep.subr.mxu0 0.0
      %1405 = vmatpush1.xpose.msra.mxu0 0.0
      %1406 = vmatprep.subr.mxu0 0.0
      %1407 = vmatpush1.xpose.msra.mxu0 0.0
      %1408 = vmatprep.subr.mxu0 0.0
      %1409 = vmatpush1.xpose.msra.mxu0 0.0
      %1410 = vmatprep.subr.mxu0 0.0
      %1411 = vmatpush1.xpose.msra.mxu0 0.0
      %1412 = vmatprep.subr.mxu0 0.0
      %1413 = vmatpush1.xpose.msra.mxu0 0.0
      %1414 = vmatprep.subr.mxu0 0.0
      %1415 = vmatpush1.xpose.msra.mxu0 0.0
      %1416 = vmatprep.subr.mxu0 0.0
      %1417 = vmatpush1.xpose.msra.mxu0 0.0
      %1418 = vmatprep.subr.mxu0 0.0
      %1419 = vmatpush1.xpose.msra.mxu0 0.0
      %1420 = vmatprep.subr.mxu0 0.0
      %1421 = vmatpush1.xpose.msra.mxu0 0.0
      %1422 = vmatprep.subr.mxu0 0.0
      %1423 = vmatpush1.xpose.msra.mxu0 0.0
      %1424 = vmatprep.subr.mxu0 0.0
      %1425 = vmatpush1.xpose.msra.mxu0 0.0
      %1426 = vmatprep.subr.mxu0 0.0
      %1427 = vmatpush1.xpose.msra.mxu0 0.0
      %1428 = vmatprep.subr.mxu0 0.0
      %1429 = vmatpush1.xpose.msra.mxu0 0.0
      %1430 = vmatprep.subr.mxu0 0.0
      %1431 = vmatpush1.xpose.msra.mxu0 0.0
      %1432 = vmatprep.subr.mxu0 0.0
      %1433 = vmatpush1.xpose.msra.mxu0 0.0
      %1434 = vmatprep.subr.mxu0 0.0
      %1435 = vmatpush1.xpose.msra.mxu0 0.0
      %1436 = vmatprep.subr.mxu0 0.0
      %1437 = vmatpush1.xpose.msra.mxu0 0.0
      %1438 = vmatprep.subr.mxu0 0.0
      %1439 = vmatpush1.xpose.msra.mxu0 0.0
      %1440 = vmatprep.subr.mxu0 0.0
      %1441 = vmatpush1.xpose.msra.mxu0 0.0
      %1442 = vmatprep.mubr.f32.mxu0 0.0
      %1443 = vmatmul.mubr.f32.gmra.mrb[0].mxu0 %v1372
      %v1444 = vpop.f32.mrb[0].mxu0
      %v1445 = vadd.f32 0.0, %v1444
      %v1446 = vpop.f32.mrb[0].mxu0
      %1447 = vmatprep.mubr.f32.mxu0 0.0
      %1448 = vmatmul.mubr.f32.gmra.mrb[0].mxu0 %v1374
      %v1449 = vpop.f32.mrb[0].mxu0
      %v1450 = vadd.f32 0.0, %v1449
      %v1451 = vpop.f32.mrb[0].mxu0
      %1452 = vdwg.mxu0
      %v1453 = vsel %vm969, %v1445, -inf
      %1454 = vmax.xlane.f32.xlu0 %v1453
      %v1455 = vpop.xlane.xlu0 %1454
      %v1456 = vsel %vm969, %v1450, -inf
      %1457 = vmax.xlane.f32.xlu0 %v1456
      %v1458 = vpop.xlane.xlu0 %1457
      %v1459 = vsub.f32 %v1445, %v1455
      %v1460 = vsub.f32 %v1450, %v1458
      %v1461 = vmul.f32 %v1459, 1.442695
      %v1462 = vpow.pop %v1461
      %v1463 = vmul.f32 %v1460, 1.442695
      %v1464 = vpow.pop %v1463
      %v1465 = vsel %vm969, %v1462, 0.0
      %1466 = vadd.xlane.f32.xlu0 %v1465
      %v1467 = vpop.xlane.xlu0 %1466
      %v1468 = vsel %vm969, %v1464, 0.0
      %1469 = vadd.xlane.f32.xlu0 %v1468
      %v1470 = vpop.xlane.xlu0 %1469
      %v1471 = vrcp.pop %v1467
      %v1472 = vrcp.pop %v1470
      %v1473 = vmul.f32 %v1462, %v1471
      %v1474 = vmul.f32 %v1464, %v1472
      %1475 = vrot.lane.b32.xlu0 %v966, 48
      %v1476 = vpop.permute.xlu0 %1475
      %v1479 = vsel %vm969, %v1473, 0
      %v1482 = vsel %vm969, %v1474, 0
      %1484 = vmatprep.subr.mxu0 0.0
      %1485 = vmatpush1.msra.mxu0 %v1476
      %1486 = vmatprep.subr.mxu0 0.0
      %1487 = vmatpush1.msra.mxu0 0.0
      %1488 = vmatprep.subr.mxu0 0.0
      %1489 = vmatpush1.msra.mxu0 0.0
      %1490 = vmatprep.subr.mxu0 0.0
      %1491 = vmatpush1.msra.mxu0 0.0
      %1492 = vmatprep.subr.mxu0 0.0
      %1493 = vmatpush1.msra.mxu0 0.0
      %1494 = vmatprep.subr.mxu0 0.0
      %1495 = vmatpush1.msra.mxu0 0.0
      %1496 = vmatprep.subr.mxu0 0.0
      %1497 = vmatpush1.msra.mxu0 0.0
      %1498 = vmatprep.subr.mxu0 0.0
      %1499 = vmatpush1.msra.mxu0 0.0
      %1500 = vmatprep.subr.mxu0 0.0
      %1501 = vmatpush1.msra.mxu0 0.0
      %1502 = vmatprep.subr.mxu0 0.0
      %1503 = vmatpush1.msra.mxu0 0.0
      %1504 = vmatprep.subr.mxu0 0.0
      %1505 = vmatpush1.msra.mxu0 0.0
      %1506 = vmatprep.subr.mxu0 0.0
      %1507 = vmatpush1.msra.mxu0 0.0
      %1508 = vmatprep.subr.mxu0 0.0
      %1509 = vmatpush1.msra.mxu0 0.0
      %1510 = vmatprep.subr.mxu0 0.0
      %1511 = vmatpush1.msra.mxu0 0.0
      %1512 = vmatprep.subr.mxu0 0.0
      %1513 = vmatpush1.msra.mxu0 0.0
      %1514 = vmatprep.subr.mxu0 0.0
      %1515 = vmatpush1.msra.mxu0 0.0
      %1516 = vmatprep.subr.mxu0 0.0
      %1517 = vmatpush1.msra.mxu0 0.0
      %1518 = vmatprep.subr.mxu0 0.0
      %1519 = vmatpush1.msra.mxu0 0.0
      %1520 = vmatprep.subr.mxu0 0.0
      %1521 = vmatpush1.msra.mxu0 0.0
      %1522 = vmatprep.subr.mxu0 0.0
      %1523 = vmatpush1.msra.mxu0 0.0
      %1524 = vmatprep.subr.mxu0 0.0
      %1525 = vmatpush1.msra.mxu0 0.0
      %1526 = vmatprep.subr.mxu0 0.0
      %1527 = vmatpush1.msra.mxu0 0.0
      %1528 = vmatprep.subr.mxu0 0.0
      %1529 = vmatpush1.msra.mxu0 0.0
      %1530 = vmatprep.subr.mxu0 0.0
      %1531 = vmatpush1.msra.mxu0 0.0
      %1532 = vmatprep.subr.mxu0 0.0
      %1533 = vmatpush1.msra.mxu0 0.0
      %1534 = vmatprep.subr.mxu0 0.0
      %1535 = vmatpush1.msra.mxu0 0.0
      %1536 = vmatprep.subr.mxu0 0.0
      %1537 = vmatpush1.msra.mxu0 0.0
      %1538 = vmatprep.subr.mxu0 0.0
      %1539 = vmatpush1.msra.mxu0 0.0
      %1540 = vmatprep.subr.mxu0 0.0
      %1541 = vmatpush1.msra.mxu0 0.0
      %1542 = vmatprep.subr.mxu0 0.0
      %1543 = vmatpush1.msra.mxu0 0.0
      %1544 = vmatprep.subr.mxu0 0.0
      %1545 = vmatpush1.msra.mxu0 0.0
      %1546 = vmatprep.subr.mxu0 0.0
      %1547 = vmatpush1.msra.mxu0 0.0
      %1548 = vmatprep.mubr.f32.mxu0 0.0
      %1549 = vmatmul.mubr.f32.gmra.mrb[0].mxu0 %v1479
      %v1550 = vpop.f32.mrb[0].mxu0
      %v1551 = vadd.f32 0.0, %v1550
      %v1552 = vpop.f32.mrb[0].mxu0
      %1553 = vmatprep.mubr.f32.mxu0 0.0
      %1554 = vmatmul.mubr.f32.gmra.mrb[0].mxu0 %v1482
      %v1555 = vpop.f32.mrb[0].mxu0
      %v1556 = vadd.f32 0.0, %v1555
      %v1557 = vpop.f32.mrb[0].mxu0
      %1558 = vdwg.mxu0
      %1561 = vrot.lane.b32.xlu0 %v1551, 16
      %v1562 = vpop.permute.xlu0 %1561
      %1563 = vrot.lane.b32.xlu0 %v1556, 16
      %v1564 = vpop.permute.xlu0 %1563
      %vm1567 = vcmask 195712
      %1568 = vst.msk [vmem:[#allocation2] sm:$0xff] %vm1567, %v1562
      %1569 = vst.msk [vmem:[#allocation2 + $0x8] sm:$0xff] %vm1567, %v1564
      %1570 = vrot.lane.b32.xlu0 %v870, 104
      %v1571 = vpop.permute.xlu0 %1570
      %1572 = vrot.lane.b32.xlu0 %v875, 104
      %v1573 = vpop.permute.xlu0 %1572
      %1574 = vrot.lane.b32.xlu0 %v966, 104
      %v1575 = vpop.permute.xlu0 %1574
      %v1576 = vsel %vm969, %v1571, 0
      %v1578 = vsel %vm969, %v1573, 0
      %v1580 = vsel %vm969, %v1575, 0
      %1582 = vmatprep.subr.mxu0 0.0
      %1583 = vmatpush1.xpose.msra.mxu0 %v1580
      %1584 = vmatprep.subr.mxu0 0.0
      %1585 = vmatpush1.xpose.msra.mxu0 0.0
      %1586 = vmatprep.subr.mxu0 0.0
      %1587 = vmatpush1.xpose.msra.mxu0 0.0
      %1588 = vmatprep.subr.mxu0 0.0
      %1589 = vmatpush1.xpose.msra.mxu0 0.0
      %1590 = vmatprep.subr.mxu0 0.0
      %1591 = vmatpush1.xpose.msra.mxu0 0.0
      %1592 = vmatprep.subr.mxu0 0.0
      %1593 = vmatpush1.xpose.msra.mxu0 0.0
      %1594 = vmatprep.subr.mxu0 0.0
      %1595 = vmatpush1.xpose.msra.mxu0 0.0
      %1596 = vmatprep.subr.mxu0 0.0
      %1597 = vmatpush1.xpose.msra.mxu0 0.0
      %1598 = vmatprep.subr.mxu0 0.0
      %1599 = vmatpush1.xpose.msra.mxu0 0.0
      %1600 = vmatprep.subr.mxu0 0.0
      %1601 = vmatpush1.xpose.msra.mxu0 0.0
      %1602 = vmatprep.subr.mxu0 0.0
      %1603 = vmatpush1.xpose.msra.mxu0 0.0
      %1604 = vmatprep.subr.mxu0 0.0
      %1605 = vmatpush1.xpose.msra.mxu0 0.0
      %1606 = vmatprep.subr.mxu0 0.0
      %1607 = vmatpush1.xpose.msra.mxu0 0.0
      %1608 = vmatprep.subr.mxu0 0.0
      %1609 = vmatpush1.xpose.msra.mxu0 0.0
      %1610 = vmatprep.subr.mxu0 0.0
      %1611 = vmatpush1.xpose.msra.mxu0 0.0
      %1612 = vmatprep.subr.mxu0 0.0
      %1613 = vmatpush1.xpose.msra.mxu0 0.0
      %1614 = vmatprep.subr.mxu0 0.0
      %1615 = vmatpush1.xpose.msra.mxu0 0.0
      %1616 = vmatprep.subr.mxu0 0.0
      %1617 = vmatpush1.xpose.msra.mxu0 0.0
      %1618 = vmatprep.subr.mxu0 0.0
      %1619 = vmatpush1.xpose.msra.mxu0 0.0
      %1620 = vmatprep.subr.mxu0 0.0
      %1621 = vmatpush1.xpose.msra.mxu0 0.0
      %1622 = vmatprep.subr.mxu0 0.0
      %1623 = vmatpush1.xpose.msra.mxu0 0.0
      %1624 = vmatprep.subr.mxu0 0.0
      %1625 = vmatpush1.xpose.msra.mxu0 0.0
      %1626 = vmatprep.subr.mxu0 0.0
      %1627 = vmatpush1.xpose.msra.mxu0 0.0
      %1628 = vmatprep.subr.mxu0 0.0
      %1629 = vmatpush1.xpose.msra.mxu0 0.0
      %1630 = vmatprep.subr.mxu0 0.0
      %1631 = vmatpush1.xpose.msra.mxu0 0.0
      %1632 = vmatprep.subr.mxu0 0.0
      %1633 = vmatpush1.xpose.msra.mxu0 0.0
      %1634 = vmatprep.subr.mxu0 0.0
      %1635 = vmatpush1.xpose.msra.mxu0 0.0
      %1636 = vmatprep.subr.mxu0 0.0
      %1637 = vmatpush1.xpose.msra.mxu0 0.0
      %1638 = vmatprep.subr.mxu0 0.0
      %1639 = vmatpush1.xpose.msra.mxu0 0.0
      %1640 = vmatprep.subr.mxu0 0.0
      %1641 = vmatpush1.xpose.msra.mxu0 0.0
      %1642 = vmatprep.subr.mxu0 0.0
      %1643 = vmatpush1.xpose.msra.mxu0 0.0
      %1644 = vmatprep.subr.mxu0 0.0
      %1645 = vmatpush1.xpose.msra.mxu0 0.0
      %1646 = vmatprep.mubr.f32.mxu0 0.0
      %1647 = vmatmul.mubr.f32.gmra.mrb[0].mxu0 %v1576
      %v1648 = vpop.f32.mrb[0].mxu0
      %v1649 = vadd.f32 0.0, %v1648
      %v1650 = vpop.f32.mrb[0].mxu0
      %1651 = vmatprep.mubr.f32.mxu0 0.0
      %1652 = vmatmul.mubr.f32.gmra.mrb[0].mxu0 %v1578
      %v1653 = vpop.f32.mrb[0].mxu0
      %v1654 = vadd.f32 0.0, %v1653
      %v1655 = vpop.f32.mrb[0].mxu0
      %1656 = vdwg.mxu0
      %v1657 = vsel %vm969, %v1649, -inf
      %1658 = vmax.xlane.f32.xlu0 %v1657
      %v1659 = vpop.xlane.xlu0 %1658
      %v1660 = vsel %vm969, %v1654, -inf
      %1661 = vmax.xlane.f32.xlu0 %v1660
      %v1662 = vpop.xlane.xlu0 %1661
      %v1663 = vsub.f32 %v1649, %v1659
      %v1664 = vsub.f32 %v1654, %v1662
      %v1665 = vmul.f32 %v1663, 1.442695
      %v1666 = vpow.pop %v1665
      %v1667 = vmul.f32 %v1664, 1.442695
      %v1668 = vpow.pop %v1667
      %v1669 = vsel %vm969, %v1666, 0.0
      %1670 = vadd.xlane.f32.xlu0 %v1669
      %v1671 = vpop.xlane.xlu0 %1670
      %v1672 = vsel %vm969, %v1668, 0.0
      %1673 = vadd.xlane.f32.xlu0 %v1672
      %v1674 = vpop.xlane.xlu0 %1673
      %v1675 = vrcp.pop %v1671
      %v1676 = vrcp.pop %v1674
      %v1677 = vmul.f32 %v1666, %v1675
      %v1678 = vmul.f32 %v1668, %v1676
      %1679 = vrot.lane.b32.xlu0 %v966, 40
      %v1680 = vpop.permute.xlu0 %1679
      %v1683 = vsel %vm969, %v1677, 0
      %v1686 = vsel %vm969, %v1678, 0
      %1688 = vmatprep.subr.mxu0 0.0
      %1689 = vmatpush1.msra.mxu0 %v1680
      %1690 = vmatprep.subr.mxu0 0.0
      %1691 = vmatpush1.msra.mxu0 0.0
      %1692 = vmatprep.subr.mxu0 0.0
      %1693 = vmatpush1.msra.mxu0 0.0
      %1694 = vmatprep.subr.mxu0 0.0
      %1695 = vmatpush1.msra.mxu0 0.0
      %1696 = vmatprep.subr.mxu0 0.0
      %1697 = vmatpush1.msra.mxu0 0.0
      %1698 = vmatprep.subr.mxu0 0.0
      %1699 = vmatpush1.msra.mxu0 0.0
      %1700 = vmatprep.subr.mxu0 0.0
      %1701 = vmatpush1.msra.mxu0 0.0
      %1702 = vmatprep.subr.mxu0 0.0
      %1703 = vmatpush1.msra.mxu0 0.0
      %1704 = vmatprep.subr.mxu0 0.0
      %1705 = vmatpush1.msra.mxu0 0.0
      %1706 = vmatprep.subr.mxu0 0.0
      %1707 = vmatpush1.msra.mxu0 0.0
      %1708 = vmatprep.subr.mxu0 0.0
      %1709 = vmatpush1.msra.mxu0 0.0
      %1710 = vmatprep.subr.mxu0 0.0
      %1711 = vmatpush1.msra.mxu0 0.0
      %1712 = vmatprep.subr.mxu0 0.0
      %1713 = vmatpush1.msra.mxu0 0.0
      %1714 = vmatprep.subr.mxu0 0.0
      %1715 = vmatpush1.msra.mxu0 0.0
      %1716 = vmatprep.subr.mxu0 0.0
      %1717 = vmatpush1.msra.mxu0 0.0
      %1718 = vmatprep.subr.mxu0 0.0
      %1719 = vmatpush1.msra.mxu0 0.0
      %1720 = vmatprep.subr.mxu0 0.0
      %1721 = vmatpush1.msra.mxu0 0.0
      %1722 = vmatprep.subr.mxu0 0.0
      %1723 = vmatpush1.msra.mxu0 0.0
      %1724 = vmatprep.subr.mxu0 0.0
      %1725 = vmatpush1.msra.mxu0 0.0
      %1726 = vmatprep.subr.mxu0 0.0
      %1727 = vmatpush1.msra.mxu0 0.0
      %1728 = vmatprep.subr.mxu0 0.0
      %1729 = vmatpush1.msra.mxu0 0.0
      %1730 = vmatprep.subr.mxu0 0.0
      %1731 = vmatpush1.msra.mxu0 0.0
      %1732 = vmatprep.subr.mxu0 0.0
      %1733 = vmatpush1.msra.mxu0 0.0
      %1734 = vmatprep.subr.mxu0 0.0
      %1735 = vmatpush1.msra.mxu0 0.0
      %1736 = vmatprep.subr.mxu0 0.0
      %1737 = vmatpush1.msra.mxu0 0.0
      %1738 = vmatprep.subr.mxu0 0.0
      %1739 = vmatpush1.msra.mxu0 0.0
      %1740 = vmatprep.subr.mxu0 0.0
      %1741 = vmatpush1.msra.mxu0 0.0
      %1742 = vmatprep.subr.mxu0 0.0
      %1743 = vmatpush1.msra.mxu0 0.0
      %1744 = vmatprep.subr.mxu0 0.0
      %1745 = vmatpush1.msra.mxu0 0.0
      %1746 = vmatprep.subr.mxu0 0.0
      %1747 = vmatpush1.msra.mxu0 0.0
      %1748 = vmatprep.subr.mxu0 0.0
      %1749 = vmatpush1.msra.mxu0 0.0
      %1750 = vmatprep.subr.mxu0 0.0
      %1751 = vmatpush1.msra.mxu0 0.0
      %1752 = vmatprep.mubr.f32.mxu0 0.0
      %1753 = vmatmul.mubr.f32.gmra.mrb[0].mxu0 %v1683
      %v1754 = vpop.f32.mrb[0].mxu0
      %v1755 = vadd.f32 0.0, %v1754
      %v1756 = vpop.f32.mrb[0].mxu0
      %1757 = vmatprep.mubr.f32.mxu0 0.0
      %1758 = vmatmul.mubr.f32.gmra.mrb[0].mxu0 %v1686
      %v1759 = vpop.f32.mrb[0].mxu0
      %v1760 = vadd.f32 0.0, %v1759
      %v1761 = vpop.f32.mrb[0].mxu0
      %1762 = vdwg.mxu0
      %1765 = vrot.lane.b32.xlu0 %v1755, 24
      %v1766 = vpop.permute.xlu0 %1765
      %1767 = vrot.lane.b32.xlu0 %v1760, 24
      %v1768 = vpop.permute.xlu0 %1767
      %vm1771 = vcmask 261312
      %1772 = vst.msk [vmem:[#allocation2] sm:$0xff] %vm1771, %v1766
      %1773 = vst.msk [vmem:[#allocation2 + $0x8] sm:$0xff] %vm1771, %v1768
      %1774 = vrot.lane.b32.xlu0 %v870, 96
      %v1775 = vpop.permute.xlu0 %1774
      %1776 = vrot.lane.b32.xlu0 %v875, 96
      %v1777 = vpop.permute.xlu0 %1776
      %1778 = vrot.lane.b32.xlu0 %v966, 96
      %v1779 = vpop.permute.xlu0 %1778
      %v1780 = vsel %vm969, %v1775, 0
      %v1782 = vsel %vm969, %v1777, 0
      %v1784 = vsel %vm969, %v1779, 0
      %1786 = vmatprep.subr.mxu0 0.0
      %1787 = vmatpush1.xpose.msra.mxu0 %v1784
      %1788 = vmatprep.subr.mxu0 0.0
      %1789 = vmatpush1.xpose.msra.mxu0 0.0
      %1790 = vmatprep.subr.mxu0 0.0
      %1791 = vmatpush1.xpose.msra.mxu0 0.0
      %1792 = vmatprep.subr.mxu0 0.0
      %1793 = vmatpush1.xpose.msra.mxu0 0.0
      %1794 = vmatprep.subr.mxu0 0.0
      %1795 = vmatpush1.xpose.msra.mxu0 0.0
      %1796 = vmatprep.subr.mxu0 0.0
      %1797 = vmatpush1.xpose.msra.mxu0 0.0
      %1798 = vmatprep.subr.mxu0 0.0
      %1799 = vmatpush1.xpose.msra.mxu0 0.0
      %1800 = vmatprep.subr.mxu0 0.0
      %1801 = vmatpush1.xpose.msra.mxu0 0.0
      %1802 = vmatprep.subr.mxu0 0.0
      %1803 = vmatpush1.xpose.msra.mxu0 0.0
      %1804 = vmatprep.subr.mxu0 0.0
      %1805 = vmatpush1.xpose.msra.mxu0 0.0
      %1806 = vmatprep.subr.mxu0 0.0
      %1807 = vmatpush1.xpose.msra.mxu0 0.0
      %1808 = vmatprep.subr.mxu0 0.0
      %1809 = vmatpush1.xpose.msra.mxu0 0.0
      %1810 = vmatprep.subr.mxu0 0.0
      %1811 = vmatpush1.xpose.msra.mxu0 0.0
      %1812 = vmatprep.subr.mxu0 0.0
      %1813 = vmatpush1.xpose.msra.mxu0 0.0
      %1814 = vmatprep.subr.mxu0 0.0
      %1815 = vmatpush1.xpose.msra.mxu0 0.0
      %1816 = vmatprep.subr.mxu0 0.0
      %1817 = vmatpush1.xpose.msra.mxu0 0.0
      %1818 = vmatprep.subr.mxu0 0.0
      %1819 = vmatpush1.xpose.msra.mxu0 0.0
      %1820 = vmatprep.subr.mxu0 0.0
      %1821 = vmatpush1.xpose.msra.mxu0 0.0
      %1822 = vmatprep.subr.mxu0 0.0
      %1823 = vmatpush1.xpose.msra.mxu0 0.0
      %1824 = vmatprep.subr.mxu0 0.0
      %1825 = vmatpush1.xpose.msra.mxu0 0.0
      %1826 = vmatprep.subr.mxu0 0.0
      %1827 = vmatpush1.xpose.msra.mxu0 0.0
      %1828 = vmatprep.subr.mxu0 0.0
      %1829 = vmatpush1.xpose.msra.mxu0 0.0
      %1830 = vmatprep.subr.mxu0 0.0
      %1831 = vmatpush1.xpose.msra.mxu0 0.0
      %1832 = vmatprep.subr.mxu0 0.0
      %1833 = vmatpush1.xpose.msra.mxu0 0.0
      %1834 = vmatprep.subr.mxu0 0.0
      %1835 = vmatpush1.xpose.msra.mxu0 0.0
      %1836 = vmatprep.subr.mxu0 0.0
      %1837 = vmatpush1.xpose.msra.mxu0 0.0
      %1838 = vmatprep.subr.mxu0 0.0
      %1839 = vmatpush1.xpose.msra.mxu0 0.0
      %1840 = vmatprep.subr.mxu0 0.0
      %1841 = vmatpush1.xpose.msra.mxu0 0.0
      %1842 = vmatprep.subr.mxu0 0.0
      %1843 = vmatpush1.xpose.msra.mxu0 0.0
      %1844 = vmatprep.subr.mxu0 0.0
      %1845 = vmatpush1.xpose.msra.mxu0 0.0
      %1846 = vmatprep.subr.mxu0 0.0
      %1847 = vmatpush1.xpose.msra.mxu0 0.0
      %1848 = vmatprep.subr.mxu0 0.0
      %1849 = vmatpush1.xpose.msra.mxu0 0.0
      %1850 = vmatprep.mubr.f32.mxu0 0.0
      %1851 = vmatmul.mubr.f32.gmra.mrb[0].mxu0 %v1780
      %v1852 = vpop.f32.mrb[0].mxu0
      %v1853 = vadd.f32 0.0, %v1852
      %v1854 = vpop.f32.mrb[0].mxu0
      %1855 = vmatprep.mubr.f32.mxu0 0.0
      %1856 = vmatmul.mubr.f32.gmra.mrb[0].mxu0 %v1782
      %v1857 = vpop.f32.mrb[0].mxu0
      %v1858 = vadd.f32 0.0, %v1857
      %v1859 = vpop.f32.mrb[0].mxu0
      %1860 = vdwg.mxu0
      %v1861 = vsel %vm969, %v1853, -inf
      %1862 = vmax.xlane.f32.xlu0 %v1861
      %v1863 = vpop.xlane.xlu0 %1862
      %v1864 = vsel %vm969, %v1858, -inf
      %1865 = vmax.xlane.f32.xlu0 %v1864
      %v1866 = vpop.xlane.xlu0 %1865
      %v1867 = vsub.f32 %v1853, %v1863
      %v1868 = vsub.f32 %v1858, %v1866
      %v1869 = vmul.f32 %v1867, 1.442695
      %v1870 = vpow.pop %v1869
      %v1871 = vmul.f32 %v1868, 1.442695
      %v1872 = vpow.pop %v1871
      %v1873 = vsel %vm969, %v1870, 0.0
      %1874 = vadd.xlane.f32.xlu0 %v1873
      %v1875 = vpop.xlane.xlu0 %1874
      %v1876 = vsel %vm969, %v1872, 0.0
      %1877 = vadd.xlane.f32.xlu0 %v1876
      %v1878 = vpop.xlane.xlu0 %1877
      %v1879 = vrcp.pop %v1875
      %v1880 = vrcp.pop %v1878
      %v1881 = vmul.f32 %v1870, %v1879
      %v1882 = vmul.f32 %v1872, %v1880
      %1883 = vrot.lane.b32.xlu0 %v966, 32
      %v1884 = vpop.permute.xlu0 %1883
      %v1887 = vsel %vm969, %v1881, 0
      %v1890 = vsel %vm969, %v1882, 0
      %1892 = vmatprep.subr.mxu0 0.0
      %1893 = vmatpush1.msra.mxu0 %v1884
      %1894 = vmatprep.subr.mxu0 0.0
      %1895 = vmatpush1.msra.mxu0 0.0
      %1896 = vmatprep.subr.mxu0 0.0
      %1897 = vmatpush1.msra.mxu0 0.0
      %1898 = vmatprep.subr.mxu0 0.0
      %1899 = vmatpush1.msra.mxu0 0.0
      %1900 = vmatprep.subr.mxu0 0.0
      %1901 = vmatpush1.msra.mxu0 0.0
      %1902 = vmatprep.subr.mxu0 0.0
      %1903 = vmatpush1.msra.mxu0 0.0
      %1904 = vmatprep.subr.mxu0 0.0
      %1905 = vmatpush1.msra.mxu0 0.0
      %1906 = vmatprep.subr.mxu0 0.0
      %1907 = vmatpush1.msra.mxu0 0.0
      %1908 = vmatprep.subr.mxu0 0.0
      %1909 = vmatpush1.msra.mxu0 0.0
      %1910 = vmatprep.subr.mxu0 0.0
      %1911 = vmatpush1.msra.mxu0 0.0
      %1912 = vmatprep.subr.mxu0 0.0
      %1913 = vmatpush1.msra.mxu0 0.0
      %1914 = vmatprep.subr.mxu0 0.0
      %1915 = vmatpush1.msra.mxu0 0.0
      %1916 = vmatprep.subr.mxu0 0.0
      %1917 = vmatpush1.msra.mxu0 0.0
      %1918 = vmatprep.subr.mxu0 0.0
      %1919 = vmatpush1.msra.mxu0 0.0
      %1920 = vmatprep.subr.mxu0 0.0
      %1921 = vmatpush1.msra.mxu0 0.0
      %1922 = vmatprep.subr.mxu0 0.0
      %1923 = vmatpush1.msra.mxu0 0.0
      %1924 = vmatprep.subr.mxu0 0.0
      %1925 = vmatpush1.msra.mxu0 0.0
      %1926 = vmatprep.subr.mxu0 0.0
      %1927 = vmatpush1.msra.mxu0 0.0
      %1928 = vmatprep.subr.mxu0 0.0
      %1929 = vmatpush1.msra.mxu0 0.0
      %1930 = vmatprep.subr.mxu0 0.0
      %1931 = vmatpush1.msra.mxu0 0.0
      %1932 = vmatprep.subr.mxu0 0.0
      %1933 = vmatpush1.msra.mxu0 0.0
      %1934 = vmatprep.subr.mxu0 0.0
      %1935 = vmatpush1.msra.mxu0 0.0
      %1936 = vmatprep.subr.mxu0 0.0
      %1937 = vmatpush1.msra.mxu0 0.0
      %1938 = vmatprep.subr.mxu0 0.0
      %1939 = vmatpush1.msra.mxu0 0.0
      %1940 = vmatprep.subr.mxu0 0.0
      %1941 = vmatpush1.msra.mxu0 0.0
      %1942 = vmatprep.subr.mxu0 0.0
      %1943 = vmatpush1.msra.mxu0 0.0
      %1944 = vmatprep.subr.mxu0 0.0
      %1945 = vmatpush1.msra.mxu0 0.0
      %1946 = vmatprep.subr.mxu0 0.0
      %1947 = vmatpush1.msra.mxu0 0.0
      %1948 = vmatprep.subr.mxu0 0.0
      %1949 = vmatpush1.msra.mxu0 0.0
      %1950 = vmatprep.subr.mxu0 0.0
      %1951 = vmatpush1.msra.mxu0 0.0
      %1952 = vmatprep.subr.mxu0 0.0
      %1953 = vmatpush1.msra.mxu0 0.0
      %1954 = vmatprep.subr.mxu0 0.0
      %1955 = vmatpush1.msra.mxu0 0.0
      %1956 = vmatprep.mubr.f32.mxu0 0.0
      %1957 = vmatmul.mubr.f32.gmra.mrb[0].mxu0 %v1887
      %v1958 = vpop.f32.mrb[0].mxu0
      %v1959 = vadd.f32 0.0, %v1958
      %v1960 = vpop.f32.mrb[0].mxu0
      %1961 = vmatprep.mubr.f32.mxu0 0.0
      %1962 = vmatmul.mubr.f32.gmra.mrb[0].mxu0 %v1890
      %v1963 = vpop.f32.mrb[0].mxu0
      %v1964 = vadd.f32 0.0, %v1963
      %v1965 = vpop.f32.mrb[0].mxu0
      %1966 = vdwg.mxu0
      %1969 = vrot.lane.b32.xlu0 %v1959, 32
      %v1970 = vpop.permute.xlu0 %1969
      %1971 = vrot.lane.b32.xlu0 %v1964, 32
      %v1972 = vpop.permute.xlu0 %1971
      %vm1975 = vcmask 326912
      %1976 = vst.msk [vmem:[#allocation2] sm:$0xff] %vm1975, %v1970
      %1977 = vst.msk [vmem:[#allocation2 + $0x8] sm:$0xff] %vm1975, %v1972
      %1978 = vrot.lane.b32.xlu0 %v870, 88
      %v1979 = vpop.permute.xlu0 %1978
      %1980 = vrot.lane.b32.xlu0 %v875, 88
      %v1981 = vpop.permute.xlu0 %1980
      %1982 = vrot.lane.b32.xlu0 %v966, 88
      %v1983 = vpop.permute.xlu0 %1982
      %v1984 = vsel %vm969, %v1979, 0
      %v1986 = vsel %vm969, %v1981, 0
      %v1988 = vsel %vm969, %v1983, 0
      %1990 = vmatprep.subr.mxu0 0.0
      %1991 = vmatpush1.xpose.msra.mxu0 %v1988
      %1992 = vmatprep.subr.mxu0 0.0
      %1993 = vmatpush1.xpose.msra.mxu0 0.0
      %1994 = vmatprep.subr.mxu0 0.0
      %1995 = vmatpush1.xpose.msra.mxu0 0.0
      %1996 = vmatprep.subr.mxu0 0.0
      %1997 = vmatpush1.xpose.msra.mxu0 0.0
      %1998 = vmatprep.subr.mxu0 0.0
      %1999 = vmatpush1.xpose.msra.mxu0 0.0
      %2000 = vmatprep.subr.mxu0 0.0
      %2001 = vmatpush1.xpose.msra.mxu0 0.0
      %2002 = vmatprep.subr.mxu0 0.0
      %2003 = vmatpush1.xpose.msra.mxu0 0.0
      %2004 = vmatprep.subr.mxu0 0.0
      %2005 = vmatpush1.xpose.msra.mxu0 0.0
      %2006 = vmatprep.subr.mxu0 0.0
      %2007 = vmatpush1.xpose.msra.mxu0 0.0
      %2008 = vmatprep.subr.mxu0 0.0
      %2009 = vmatpush1.xpose.msra.mxu0 0.0
      %2010 = vmatprep.subr.mxu0 0.0
      %2011 = vmatpush1.xpose.msra.mxu0 0.0
      %2012 = vmatprep.subr.mxu0 0.0
      %2013 = vmatpush1.xpose.msra.mxu0 0.0
      %2014 = vmatprep.subr.mxu0 0.0
      %2015 = vmatpush1.xpose.msra.mxu0 0.0
      %2016 = vmatprep.subr.mxu0 0.0
      %2017 = vmatpush1.xpose.msra.mxu0 0.0
      %2018 = vmatprep.subr.mxu0 0.0
      %2019 = vmatpush1.xpose.msra.mxu0 0.0
      %2020 = vmatprep.subr.mxu0 0.0
      %2021 = vmatpush1.xpose.msra.mxu0 0.0
      %2022 = vmatprep.subr.mxu0 0.0
      %2023 = vmatpush1.xpose.msra.mxu0 0.0
      %2024 = vmatprep.subr.mxu0 0.0
      %2025 = vmatpush1.xpose.msra.mxu0 0.0
      %2026 = vmatprep.subr.mxu0 0.0
      %2027 = vmatpush1.xpose.msra.mxu0 0.0
      %2028 = vmatprep.subr.mxu0 0.0
      %2029 = vmatpush1.xpose.msra.mxu0 0.0
      %2030 = vmatprep.subr.mxu0 0.0
      %2031 = vmatpush1.xpose.msra.mxu0 0.0
      %2032 = vmatprep.subr.mxu0 0.0
      %2033 = vmatpush1.xpose.msra.mxu0 0.0
      %2034 = vmatprep.subr.mxu0 0.0
      %2035 = vmatpush1.xpose.msra.mxu0 0.0
      %2036 = vmatprep.subr.mxu0 0.0
      %2037 = vmatpush1.xpose.msra.mxu0 0.0
      %2038 = vmatprep.subr.mxu0 0.0
      %2039 = vmatpush1.xpose.msra.mxu0 0.0
      %2040 = vmatprep.subr.mxu0 0.0
      %2041 = vmatpush1.xpose.msra.mxu0 0.0
      %2042 = vmatprep.subr.mxu0 0.0
      %2043 = vmatpush1.xpose.msra.mxu0 0.0
      %2044 = vmatprep.subr.mxu0 0.0
      %2045 = vmatpush1.xpose.msra.mxu0 0.0
      %2046 = vmatprep.subr.mxu0 0.0
      %2047 = vmatpush1.xpose.msra.mxu0 0.0
      %2048 = vmatprep.subr.mxu0 0.0
      %2049 = vmatpush1.xpose.msra.mxu0 0.0
      %2050 = vmatprep.subr.mxu0 0.0
      %2051 = vmatpush1.xpose.msra.mxu0 0.0
      %2052 = vmatprep.subr.mxu0 0.0
      %2053 = vmatpush1.xpose.msra.mxu0 0.0
      %2054 = vmatprep.mubr.f32.mxu0 0.0
      %2055 = vmatmul.mubr.f32.gmra.mrb[0].mxu0 %v1984
      %v2056 = vpop.f32.mrb[0].mxu0
      %v2057 = vadd.f32 0.0, %v2056
      %v2058 = vpop.f32.mrb[0].mxu0
      %2059 = vmatprep.mubr.f32.mxu0 0.0
      %2060 = vmatmul.mubr.f32.gmra.mrb[0].mxu0 %v1986
      %v2061 = vpop.f32.mrb[0].mxu0
      %v2062 = vadd.f32 0.0, %v2061
      %v2063 = vpop.f32.mrb[0].mxu0
      %2064 = vdwg.mxu0
      %v2065 = vsel %vm969, %v2057, -inf
      %2066 = vmax.xlane.f32.xlu0 %v2065
      %v2067 = vpop.xlane.xlu0 %2066
      %v2068 = vsel %vm969, %v2062, -inf
      %2069 = vmax.xlane.f32.xlu0 %v2068
      %v2070 = vpop.xlane.xlu0 %2069
      %v2071 = vsub.f32 %v2057, %v2067
      %v2072 = vsub.f32 %v2062, %v2070
      %v2073 = vmul.f32 %v2071, 1.442695
      %v2074 = vpow.pop %v2073
      %v2075 = vmul.f32 %v2072, 1.442695
      %v2076 = vpow.pop %v2075
      %v2077 = vsel %vm969, %v2074, 0.0
      %2078 = vadd.xlane.f32.xlu0 %v2077
      %v2079 = vpop.xlane.xlu0 %2078
      %v2080 = vsel %vm969, %v2076, 0.0
      %2081 = vadd.xlane.f32.xlu0 %v2080
      %v2082 = vpop.xlane.xlu0 %2081
      %v2083 = vrcp.pop %v2079
      %v2084 = vrcp.pop %v2082
      %v2085 = vmul.f32 %v2074, %v2083
      %v2086 = vmul.f32 %v2076, %v2084
      %2087 = vrot.lane.b32.xlu0 %v966, 24
      %v2088 = vpop.permute.xlu0 %2087
      %v2091 = vsel %vm969, %v2085, 0
      %v2094 = vsel %vm969, %v2086, 0
      %2096 = vmatprep.subr.mxu0 0.0
      %2097 = vmatpush1.msra.mxu0 %v2088
      %2098 = vmatprep.subr.mxu0 0.0
      %2099 = vmatpush1.msra.mxu0 0.0
      %2100 = vmatprep.subr.mxu0 0.0
      %2101 = vmatpush1.msra.mxu0 0.0
      %2102 = vmatprep.subr.mxu0 0.0
      %2103 = vmatpush1.msra.mxu0 0.0
      %2104 = vmatprep.subr.mxu0 0.0
      %2105 = vmatpush1.msra.mxu0 0.0
      %2106 = vmatprep.subr.mxu0 0.0
      %2107 = vmatpush1.msra.mxu0 0.0
      %2108 = vmatprep.subr.mxu0 0.0
      %2109 = vmatpush1.msra.mxu0 0.0
      %2110 = vmatprep.subr.mxu0 0.0
      %2111 = vmatpush1.msra.mxu0 0.0
      %2112 = vmatprep.subr.mxu0 0.0
      %2113 = vmatpush1.msra.mxu0 0.0
      %2114 = vmatprep.subr.mxu0 0.0
      %2115 = vmatpush1.msra.mxu0 0.0
      %2116 = vmatprep.subr.mxu0 0.0
      %2117 = vmatpush1.msra.mxu0 0.0
      %2118 = vmatprep.subr.mxu0 0.0
      %2119 = vmatpush1.msra.mxu0 0.0
      %2120 = vmatprep.subr.mxu0 0.0
      %2121 = vmatpush1.msra.mxu0 0.0
      %2122 = vmatprep.subr.mxu0 0.0
      %2123 = vmatpush1.msra.mxu0 0.0
      %2124 = vmatprep.subr.mxu0 0.0
      %2125 = vmatpush1.msra.mxu0 0.0
      %2126 = vmatprep.subr.mxu0 0.0
      %2127 = vmatpush1.msra.mxu0 0.0
      %2128 = vmatprep.subr.mxu0 0.0
      %2129 = vmatpush1.msra.mxu0 0.0
      %2130 = vmatprep.subr.mxu0 0.0
      %2131 = vmatpush1.msra.mxu0 0.0
      %2132 = vmatprep.subr.mxu0 0.0
      %2133 = vmatpush1.msra.mxu0 0.0
      %2134 = vmatprep.subr.mxu0 0.0
      %2135 = vmatpush1.msra.mxu0 0.0
      %2136 = vmatprep.subr.mxu0 0.0
      %2137 = vmatpush1.msra.mxu0 0.0
      %2138 = vmatprep.subr.mxu0 0.0
      %2139 = vmatpush1.msra.mxu0 0.0
      %2140 = vmatprep.subr.mxu0 0.0
      %2141 = vmatpush1.msra.mxu0 0.0
      %2142 = vmatprep.subr.mxu0 0.0
      %2143 = vmatpush1.msra.mxu0 0.0
      %2144 = vmatprep.subr.mxu0 0.0
      %2145 = vmatpush1.msra.mxu0 0.0
      %2146 = vmatprep.subr.mxu0 0.0
      %2147 = vmatpush1.msra.mxu0 0.0
      %2148 = vmatprep.subr.mxu0 0.0
      %2149 = vmatpush1.msra.mxu0 0.0
      %2150 = vmatprep.subr.mxu0 0.0
      %2151 = vmatpush1.msra.mxu0 0.0
      %2152 = vmatprep.subr.mxu0 0.0
      %2153 = vmatpush1.msra.mxu0 0.0
      %2154 = vmatprep.subr.mxu0 0.0
      %2155 = vmatpush1.msra.mxu0 0.0
      %2156 = vmatprep.subr.mxu0 0.0
      %2157 = vmatpush1.msra.mxu0 0.0
      %2158 = vmatprep.subr.mxu0 0.0
      %2159 = vmatpush1.msra.mxu0 0.0
      %2160 = vmatprep.mubr.f32.mxu0 0.0
      %2161 = vmatmul.mubr.f32.gmra.mrb[0].mxu0 %v2091
      %v2162 = vpop.f32.mrb[0].mxu0
      %v2163 = vadd.f32 0.0, %v2162
      %v2164 = vpop.f32.mrb[0].mxu0
      %2165 = vmatprep.mubr.f32.mxu0 0.0
      %2166 = vmatmul.mubr.f32.gmra.mrb[0].mxu0 %v2094
      %v2167 = vpop.f32.mrb[0].mxu0
      %v2168 = vadd.f32 0.0, %v2167
      %v2169 = vpop.f32.mrb[0].mxu0
      %2170 = vdwg.mxu0
      %2173 = vrot.lane.b32.xlu0 %v2163, 40
      %v2174 = vpop.permute.xlu0 %2173
      %2175 = vrot.lane.b32.xlu0 %v2168, 40
      %v2176 = vpop.permute.xlu0 %2175
      %vm2179 = vcmask 392512
      %2180 = vst.msk [vmem:[#allocation2] sm:$0xff] %vm2179, %v2174
      %2181 = vst.msk [vmem:[#allocation2 + $0x8] sm:$0xff] %vm2179, %v2176
      %2182 = vrot.lane.b32.xlu0 %v870, 80
      %v2183 = vpop.permute.xlu0 %2182
      %2184 = vrot.lane.b32.xlu0 %v875, 80
      %v2185 = vpop.permute.xlu0 %2184
      %2186 = vrot.lane.b32.xlu0 %v966, 80
      %v2187 = vpop.permute.xlu0 %2186
      %v2188 = vsel %vm969, %v2183, 0
      %v2190 = vsel %vm969, %v2185, 0
      %v2192 = vsel %vm969, %v2187, 0
      %2194 = vmatprep.subr.mxu0 0.0
      %2195 = vmatpush1.xpose.msra.mxu0 %v2192
      %2196 = vmatprep.subr.mxu0 0.0
      %2197 = vmatpush1.xpose.msra.mxu0 0.0
      %2198 = vmatprep.subr.mxu0 0.0
      %2199 = vmatpush1.xpose.msra.mxu0 0.0
      %2200 = vmatprep.subr.mxu0 0.0
      %2201 = vmatpush1.xpose.msra.mxu0 0.0
      %2202 = vmatprep.subr.mxu0 0.0
      %2203 = vmatpush1.xpose.msra.mxu0 0.0
      %2204 = vmatprep.subr.mxu0 0.0
      %2205 = vmatpush1.xpose.msra.mxu0 0.0
      %2206 = vmatprep.subr.mxu0 0.0
      %2207 = vmatpush1.xpose.msra.mxu0 0.0
      %2208 = vmatprep.subr.mxu0 0.0
      %2209 = vmatpush1.xpose.msra.mxu0 0.0
      %2210 = vmatprep.subr.mxu0 0.0
      %2211 = vmatpush1.xpose.msra.mxu0 0.0
      %2212 = vmatprep.subr.mxu0 0.0
      %2213 = vmatpush1.xpose.msra.mxu0 0.0
      %2214 = vmatprep.subr.mxu0 0.0
      %2215 = vmatpush1.xpose.msra.mxu0 0.0
      %2216 = vmatprep.subr.mxu0 0.0
      %2217 = vmatpush1.xpose.msra.mxu0 0.0
      %2218 = vmatprep.subr.mxu0 0.0
      %2219 = vmatpush1.xpose.msra.mxu0 0.0
      %2220 = vmatprep.subr.mxu0 0.0
      %2221 = vmatpush1.xpose.msra.mxu0 0.0
      %2222 = vmatprep.subr.mxu0 0.0
      %2223 = vmatpush1.xpose.msra.mxu0 0.0
      %2224 = vmatprep.subr.mxu0 0.0
      %2225 = vmatpush1.xpose.msra.mxu0 0.0
      %2226 = vmatprep.subr.mxu0 0.0
      %2227 = vmatpush1.xpose.msra.mxu0 0.0
      %2228 = vmatprep.subr.mxu0 0.0
      %2229 = vmatpush1.xpose.msra.mxu0 0.0
      %2230 = vmatprep.subr.mxu0 0.0
      %2231 = vmatpush1.xpose.msra.mxu0 0.0
      %2232 = vmatprep.subr.mxu0 0.0
      %2233 = vmatpush1.xpose.msra.mxu0 0.0
      %2234 = vmatprep.subr.mxu0 0.0
      %2235 = vmatpush1.xpose.msra.mxu0 0.0
      %2236 = vmatprep.subr.mxu0 0.0
      %2237 = vmatpush1.xpose.msra.mxu0 0.0
      %2238 = vmatprep.subr.mxu0 0.0
      %2239 = vmatpush1.xpose.msra.mxu0 0.0
      %2240 = vmatprep.subr.mxu0 0.0
      %2241 = vmatpush1.xpose.msra.mxu0 0.0
      %2242 = vmatprep.subr.mxu0 0.0
      %2243 = vmatpush1.xpose.msra.mxu0 0.0
      %2244 = vmatprep.subr.mxu0 0.0
      %2245 = vmatpush1.xpose.msra.mxu0 0.0
      %2246 = vmatprep.subr.mxu0 0.0
      %2247 = vmatpush1.xpose.msra.mxu0 0.0
      %2248 = vmatprep.subr.mxu0 0.0
      %2249 = vmatpush1.xpose.msra.mxu0 0.0
      %2250 = vmatprep.subr.mxu0 0.0
      %2251 = vmatpush1.xpose.msra.mxu0 0.0
      %2252 = vmatprep.subr.mxu0 0.0
      %2253 = vmatpush1.xpose.msra.mxu0 0.0
      %2254 = vmatprep.subr.mxu0 0.0
      %2255 = vmatpush1.xpose.msra.mxu0 0.0
      %2256 = vmatprep.subr.mxu0 0.0
      %2257 = vmatpush1.xpose.msra.mxu0 0.0
      %2258 = vmatprep.mubr.f32.mxu0 0.0
      %2259 = vmatmul.mubr.f32.gmra.mrb[0].mxu0 %v2188
      %v2260 = vpop.f32.mrb[0].mxu0
      %v2261 = vadd.f32 0.0, %v2260
      %v2262 = vpop.f32.mrb[0].mxu0
      %2263 = vmatprep.mubr.f32.mxu0 0.0
      %2264 = vmatmul.mubr.f32.gmra.mrb[0].mxu0 %v2190
      %v2265 = vpop.f32.mrb[0].mxu0
      %v2266 = vadd.f32 0.0, %v2265
      %v2267 = vpop.f32.mrb[0].mxu0
      %2268 = vdwg.mxu0
      %v2269 = vsel %vm969, %v2261, -inf
      %2270 = vmax.xlane.f32.xlu0 %v2269
      %v2271 = vpop.xlane.xlu0 %2270
      %v2272 = vsel %vm969, %v2266, -inf
      %2273 = vmax.xlane.f32.xlu0 %v2272
      %v2274 = vpop.xlane.xlu0 %2273
      %v2275 = vsub.f32 %v2261, %v2271
      %v2276 = vsub.f32 %v2266, %v2274
      %v2277 = vmul.f32 %v2275, 1.442695
      %v2278 = vpow.pop %v2277
      %v2279 = vmul.f32 %v2276, 1.442695
      %v2280 = vpow.pop %v2279
      %v2281 = vsel %vm969, %v2278, 0.0
      %2282 = vadd.xlane.f32.xlu0 %v2281
      %v2283 = vpop.xlane.xlu0 %2282
      %v2284 = vsel %vm969, %v2280, 0.0
      %2285 = vadd.xlane.f32.xlu0 %v2284
      %v2286 = vpop.xlane.xlu0 %2285
      %v2287 = vrcp.pop %v2283
      %v2288 = vrcp.pop %v2286
      %v2289 = vmul.f32 %v2278, %v2287
      %v2290 = vmul.f32 %v2280, %v2288
      %2291 = vrot.lane.b32.xlu0 %v966, 16
      %v2292 = vpop.permute.xlu0 %2291
      %v2295 = vsel %vm969, %v2289, 0
      %v2298 = vsel %vm969, %v2290, 0
      %2300 = vmatprep.subr.mxu0 0.0
      %2301 = vmatpush1.msra.mxu0 %v2292
      %2302 = vmatprep.subr.mxu0 0.0
      %2303 = vmatpush1.msra.mxu0 0.0
      %2304 = vmatprep.subr.mxu0 0.0
      %2305 = vmatpush1.msra.mxu0 0.0
      %2306 = vmatprep.subr.mxu0 0.0
      %2307 = vmatpush1.msra.mxu0 0.0
      %2308 = vmatprep.subr.mxu0 0.0
      %2309 = vmatpush1.msra.mxu0 0.0
      %2310 = vmatprep.subr.mxu0 0.0
      %2311 = vmatpush1.msra.mxu0 0.0
      %2312 = vmatprep.subr.mxu0 0.0
      %2313 = vmatpush1.msra.mxu0 0.0
      %2314 = vmatprep.subr.mxu0 0.0
      %2315 = vmatpush1.msra.mxu0 0.0
      %2316 = vmatprep.subr.mxu0 0.0
      %2317 = vmatpush1.msra.mxu0 0.0
      %2318 = vmatprep.subr.mxu0 0.0
      %2319 = vmatpush1.msra.mxu0 0.0
      %2320 = vmatprep.subr.mxu0 0.0
      %2321 = vmatpush1.msra.mxu0 0.0
      %2322 = vmatprep.subr.mxu0 0.0
      %2323 = vmatpush1.msra.mxu0 0.0
      %2324 = vmatprep.subr.mxu0 0.0
      %2325 = vmatpush1.msra.mxu0 0.0
      %2326 = vmatprep.subr.mxu0 0.0
      %2327 = vmatpush1.msra.mxu0 0.0
      %2328 = vmatprep.subr.mxu0 0.0
      %2329 = vmatpush1.msra.mxu0 0.0
      %2330 = vmatprep.subr.mxu0 0.0
      %2331 = vmatpush1.msra.mxu0 0.0
      %2332 = vmatprep.subr.mxu0 0.0
      %2333 = vmatpush1.msra.mxu0 0.0
      %2334 = vmatprep.subr.mxu0 0.0
      %2335 = vmatpush1.msra.mxu0 0.0
      %2336 = vmatprep.subr.mxu0 0.0
      %2337 = vmatpush1.msra.mxu0 0.0
      %2338 = vmatprep.subr.mxu0 0.0
      %2339 = vmatpush1.msra.mxu0 0.0
      %2340 = vmatprep.subr.mxu0 0.0
      %2341 = vmatpush1.msra.mxu0 0.0
      %2342 = vmatprep.subr.mxu0 0.0
      %2343 = vmatpush1.msra.mxu0 0.0
      %2344 = vmatprep.subr.mxu0 0.0
      %2345 = vmatpush1.msra.mxu0 0.0
      %2346 = vmatprep.subr.mxu0 0.0
      %2347 = vmatpush1.msra.mxu0 0.0
      %2348 = vmatprep.subr.mxu0 0.0
      %2349 = vmatpush1.msra.mxu0 0.0
      %2350 = vmatprep.subr.mxu0 0.0
      %2351 = vmatpush1.msra.mxu0 0.0
      %2352 = vmatprep.subr.mxu0 0.0
      %2353 = vmatpush1.msra.mxu0 0.0
      %2354 = vmatprep.subr.mxu0 0.0
      %2355 = vmatpush1.msra.mxu0 0.0
      %2356 = vmatprep.subr.mxu0 0.0
      %2357 = vmatpush1.msra.mxu0 0.0
      %2358 = vmatprep.subr.mxu0 0.0
      %2359 = vmatpush1.msra.mxu0 0.0
      %2360 = vmatprep.subr.mxu0 0.0
      %2361 = vmatpush1.msra.mxu0 0.0
      %2362 = vmatprep.subr.mxu0 0.0
      %2363 = vmatpush1.msra.mxu0 0.0
      %2364 = vmatprep.mubr.f32.mxu0 0.0
      %2365 = vmatmul.mubr.f32.gmra.mrb[0].mxu0 %v2295
      %v2366 = vpop.f32.mrb[0].mxu0
      %v2367 = vadd.f32 0.0, %v2366
      %v2368 = vpop.f32.mrb[0].mxu0
      %2369 = vmatprep.mubr.f32.mxu0 0.0
      %2370 = vmatmul.mubr.f32.gmra.mrb[0].mxu0 %v2298
      %v2371 = vpop.f32.mrb[0].mxu0
      %v2372 = vadd.f32 0.0, %v2371
      %v2373 = vpop.f32.mrb[0].mxu0
      %2374 = vdwg.mxu0
      %2377 = vrot.lane.b32.xlu0 %v2367, 48
      %v2378 = vpop.permute.xlu0 %2377
      %2379 = vrot.lane.b32.xlu0 %v2372, 48
      %v2380 = vpop.permute.xlu0 %2379
      %vm2383 = vcmask 458112
      %2384 = vst.msk [vmem:[#allocation2] sm:$0xff] %vm2383, %v2378
      %2385 = vst.msk [vmem:[#allocation2 + $0x8] sm:$0xff] %vm2383, %v2380
      %2386 = vrot.lane.b32.xlu0 %v870, 72
      %v2387 = vpop.permute.xlu0 %2386
      %2388 = vrot.lane.b32.xlu0 %v875, 72
      %v2389 = vpop.permute.xlu0 %2388
      %2390 = vrot.lane.b32.xlu0 %v966, 72
      %v2391 = vpop.permute.xlu0 %2390
      %v2392 = vsel %vm969, %v2387, 0
      %v2394 = vsel %vm969, %v2389, 0
      %v2396 = vsel %vm969, %v2391, 0
      %2398 = vmatprep.subr.mxu0 0.0
      %2399 = vmatpush1.xpose.msra.mxu0 %v2396
      %2400 = vmatprep.subr.mxu0 0.0
      %2401 = vmatpush1.xpose.msra.mxu0 0.0
      %2402 = vmatprep.subr.mxu0 0.0
      %2403 = vmatpush1.xpose.msra.mxu0 0.0
      %2404 = vmatprep.subr.mxu0 0.0
      %2405 = vmatpush1.xpose.msra.mxu0 0.0
      %2406 = vmatprep.subr.mxu0 0.0
      %2407 = vmatpush1.xpose.msra.mxu0 0.0
      %2408 = vmatprep.subr.mxu0 0.0
      %2409 = vmatpush1.xpose.msra.mxu0 0.0
      %2410 = vmatprep.subr.mxu0 0.0
      %2411 = vmatpush1.xpose.msra.mxu0 0.0
      %2412 = vmatprep.subr.mxu0 0.0
      %2413 = vmatpush1.xpose.msra.mxu0 0.0
      %2414 = vmatprep.subr.mxu0 0.0
      %2415 = vmatpush1.xpose.msra.mxu0 0.0
      %2416 = vmatprep.subr.mxu0 0.0
      %2417 = vmatpush1.xpose.msra.mxu0 0.0
      %2418 = vmatprep.subr.mxu0 0.0
      %2419 = vmatpush1.xpose.msra.mxu0 0.0
      %2420 = vmatprep.subr.mxu0 0.0
      %2421 = vmatpush1.xpose.msra.mxu0 0.0
      %2422 = vmatprep.subr.mxu0 0.0
      %2423 = vmatpush1.xpose.msra.mxu0 0.0
      %2424 = vmatprep.subr.mxu0 0.0
      %2425 = vmatpush1.xpose.msra.mxu0 0.0
      %2426 = vmatprep.subr.mxu0 0.0
      %2427 = vmatpush1.xpose.msra.mxu0 0.0
      %2428 = vmatprep.subr.mxu0 0.0
      %2429 = vmatpush1.xpose.msra.mxu0 0.0
      %2430 = vmatprep.subr.mxu0 0.0
      %2431 = vmatpush1.xpose.msra.mxu0 0.0
      %2432 = vmatprep.subr.mxu0 0.0
      %2433 = vmatpush1.xpose.msra.mxu0 0.0
      %2434 = vmatprep.subr.mxu0 0.0
      %2435 = vmatpush1.xpose.msra.mxu0 0.0
      %2436 = vmatprep.subr.mxu0 0.0
      %2437 = vmatpush1.xpose.msra.mxu0 0.0
      %2438 = vmatprep.subr.mxu0 0.0
      %2439 = vmatpush1.xpose.msra.mxu0 0.0
      %2440 = vmatprep.subr.mxu0 0.0
      %2441 = vmatpush1.xpose.msra.mxu0 0.0
      %2442 = vmatprep.subr.mxu0 0.0
      %2443 = vmatpush1.xpose.msra.mxu0 0.0
      %2444 = vmatprep.subr.mxu0 0.0
      %2445 = vmatpush1.xpose.msra.mxu0 0.0
      %2446 = vmatprep.subr.mxu0 0.0
      %2447 = vmatpush1.xpose.msra.mxu0 0.0
      %2448 = vmatprep.subr.mxu0 0.0
      %2449 = vmatpush1.xpose.msra.mxu0 0.0
      %2450 = vmatprep.subr.mxu0 0.0
      %2451 = vmatpush1.xpose.msra.mxu0 0.0
      %2452 = vmatprep.subr.mxu0 0.0
      %2453 = vmatpush1.xpose.msra.mxu0 0.0
      %2454 = vmatprep.subr.mxu0 0.0
      %2455 = vmatpush1.xpose.msra.mxu0 0.0
      %2456 = vmatprep.subr.mxu0 0.0
      %2457 = vmatpush1.xpose.msra.mxu0 0.0
      %2458 = vmatprep.subr.mxu0 0.0
      %2459 = vmatpush1.xpose.msra.mxu0 0.0
      %2460 = vmatprep.subr.mxu0 0.0
      %2461 = vmatpush1.xpose.msra.mxu0 0.0
      %2462 = vmatprep.mubr.f32.mxu0 0.0
      %2463 = vmatmul.mubr.f32.gmra.mrb[0].mxu0 %v2392
      %v2464 = vpop.f32.mrb[0].mxu0
      %v2465 = vadd.f32 0.0, %v2464
      %v2466 = vpop.f32.mrb[0].mxu0
      %2467 = vmatprep.mubr.f32.mxu0 0.0
      %2468 = vmatmul.mubr.f32.gmra.mrb[0].mxu0 %v2394
      %v2469 = vpop.f32.mrb[0].mxu0
      %v2470 = vadd.f32 0.0, %v2469
      %v2471 = vpop.f32.mrb[0].mxu0
      %2472 = vdwg.mxu0
      %v2473 = vsel %vm969, %v2465, -inf
      %2474 = vmax.xlane.f32.xlu0 %v2473
      %v2475 = vpop.xlane.xlu0 %2474
      %v2476 = vsel %vm969, %v2470, -inf
      %2477 = vmax.xlane.f32.xlu0 %v2476
      %v2478 = vpop.xlane.xlu0 %2477
      %v2479 = vsub.f32 %v2465, %v2475
      %v2480 = vsub.f32 %v2470, %v2478
      %v2481 = vmul.f32 %v2479, 1.442695
      %v2482 = vpow.pop %v2481
      %v2483 = vmul.f32 %v2480, 1.442695
      %v2484 = vpow.pop %v2483
      %v2485 = vsel %vm969, %v2482, 0.0
      %2486 = vadd.xlane.f32.xlu0 %v2485
      %v2487 = vpop.xlane.xlu0 %2486
      %v2488 = vsel %vm969, %v2484, 0.0
      %2489 = vadd.xlane.f32.xlu0 %v2488
      %v2490 = vpop.xlane.xlu0 %2489
      %v2491 = vrcp.pop %v2487
      %v2492 = vrcp.pop %v2490
      %v2493 = vmul.f32 %v2482, %v2491
      %v2494 = vmul.f32 %v2484, %v2492
      %2495 = vrot.lane.b32.xlu0 %v966, 8
      %v2496 = vpop.permute.xlu0 %2495
      %v2499 = vsel %vm969, %v2493, 0
      %v2502 = vsel %vm969, %v2494, 0
      %2504 = vmatprep.subr.mxu0 0.0
      %2505 = vmatpush1.msra.mxu0 %v2496
      %2506 = vmatprep.subr.mxu0 0.0
      %2507 = vmatpush1.msra.mxu0 0.0
      %2508 = vmatprep.subr.mxu0 0.0
      %2509 = vmatpush1.msra.mxu0 0.0
      %2510 = vmatprep.subr.mxu0 0.0
      %2511 = vmatpush1.msra.mxu0 0.0
      %2512 = vmatprep.subr.mxu0 0.0
      %2513 = vmatpush1.msra.mxu0 0.0
      %2514 = vmatprep.subr.mxu0 0.0
      %2515 = vmatpush1.msra.mxu0 0.0
      %2516 = vmatprep.subr.mxu0 0.0
      %2517 = vmatpush1.msra.mxu0 0.0
      %2518 = vmatprep.subr.mxu0 0.0
      %2519 = vmatpush1.msra.mxu0 0.0
      %2520 = vmatprep.subr.mxu0 0.0
      %2521 = vmatpush1.msra.mxu0 0.0
      %2522 = vmatprep.subr.mxu0 0.0
      %2523 = vmatpush1.msra.mxu0 0.0
      %2524 = vmatprep.subr.mxu0 0.0
      %2525 = vmatpush1.msra.mxu0 0.0
      %2526 = vmatprep.subr.mxu0 0.0
      %2527 = vmatpush1.msra.mxu0 0.0
      %2528 = vmatprep.subr.mxu0 0.0
      %2529 = vmatpush1.msra.mxu0 0.0
      %2530 = vmatprep.subr.mxu0 0.0
      %2531 = vmatpush1.msra.mxu0 0.0
      %2532 = vmatprep.subr.mxu0 0.0
      %2533 = vmatpush1.msra.mxu0 0.0
      %2534 = vmatprep.subr.mxu0 0.0
      %2535 = vmatpush1.msra.mxu0 0.0
      %2536 = vmatprep.subr.mxu0 0.0
      %2537 = vmatpush1.msra.mxu0 0.0
      %2538 = vmatprep.subr.mxu0 0.0
      %2539 = vmatpush1.msra.mxu0 0.0
      %2540 = vmatprep.subr.mxu0 0.0
      %2541 = vmatpush1.msra.mxu0 0.0
      %2542 = vmatprep.subr.mxu0 0.0
      %2543 = vmatpush1.msra.mxu0 0.0
      %2544 = vmatprep.subr.mxu0 0.0
      %2545 = vmatpush1.msra.mxu0 0.0
      %2546 = vmatprep.subr.mxu0 0.0
      %2547 = vmatpush1.msra.mxu0 0.0
      %2548 = vmatprep.subr.mxu0 0.0
      %2549 = vmatpush1.msra.mxu0 0.0
      %2550 = vmatprep.subr.mxu0 0.0
      %2551 = vmatpush1.msra.mxu0 0.0
      %2552 = vmatprep.subr.mxu0 0.0
      %2553 = vmatpush1.msra.mxu0 0.0
      %2554 = vmatprep.subr.mxu0 0.0
      %2555 = vmatpush1.msra.mxu0 0.0
      %2556 = vmatprep.subr.mxu0 0.0
      %2557 = vmatpush1.msra.mxu0 0.0
      %2558 = vmatprep.subr.mxu0 0.0
      %2559 = vmatpush1.msra.mxu0 0.0
      %2560 = vmatprep.subr.mxu0 0.0
      %2561 = vmatpush1.msra.mxu0 0.0
      %2562 = vmatprep.subr.mxu0 0.0
      %2563 = vmatpush1.msra.mxu0 0.0
      %2564 = vmatprep.subr.mxu0 0.0
      %2565 = vmatpush1.msra.mxu0 0.0
      %2566 = vmatprep.subr.mxu0 0.0
      %2567 = vmatpush1.msra.mxu0 0.0
      %2568 = vmatprep.mubr.f32.mxu0 0.0
      %2569 = vmatmul.mubr.f32.gmra.mrb[0].mxu0 %v2499
      %v2570 = vpop.f32.mrb[0].mxu0
      %v2571 = vadd.f32 0.0, %v2570
      %v2572 = vpop.f32.mrb[0].mxu0
      %2573 = vmatprep.mubr.f32.mxu0 0.0
      %2574 = vmatmul.mubr.f32.gmra.mrb[0].mxu0 %v2502
      %v2575 = vpop.f32.mrb[0].mxu0
      %v2576 = vadd.f32 0.0, %v2575
      %v2577 = vpop.f32.mrb[0].mxu0
      %2578 = vdwg.mxu0
      %2581 = vrot.lane.b32.xlu0 %v2571, 56
      %v2582 = vpop.permute.xlu0 %2581
      %2583 = vrot.lane.b32.xlu0 %v2576, 56
      %v2584 = vpop.permute.xlu0 %2583
      %vm2587 = vcmask 523712
      %2588 = vst.msk [vmem:[#allocation2] sm:$0xff] %vm2587, %v2582
      %2589 = vst.msk [vmem:[#allocation2 + $0x8] sm:$0xff] %vm2587, %v2584
      %v2590 = vld [vmem:[#allocation2] sm:$0xff]
      %v2591 = vld [vmem:[#allocation2 + $0x8] sm:$0xff]
      %v2592 = vld [vmem:[%s8] sm:$0xff]
      %v2593 = vld [vmem:[%s8 + $0x8] sm:$0xff]
      %v2594 = vld [vmem:[%s8 + $0x10] sm:$0xff]
      %v2595 = vld [vmem:[%s8 + $0x18] sm:$0xff]
      %v2596 = vld [vmem:[%s8 + $0x20] sm:$0xff]
      %v2597 = vld [vmem:[%s8 + $0x28] sm:$0xff]
      %v2598 = vld [vmem:[%s8 + $0x30] sm:$0xff]
      %v2599 = vld [vmem:[%s8 + $0x38] sm:$0xff]
      %v2600 = vld [vmem:[%s9] sm:$0x1]
      %v2602 = vlaneseq
      %v2603 = vshrl.u32 %v2602, 7
      %v2604 = vsub.s32 0, %v2603
      %v2605 = vrot.slane %v2600, %v2604
      %v2608 = vsel %vm567, %v2590, 0
      %v2611 = vsel %vm567, %v2591, 0
      %2613 = vmatprep.subr.mxu0 0.0
      %2614 = vmatpush1.msra.mxu0 %v2592
      %2615 = vmatprep.subr.mxu0 0.0
      %2616 = vmatpush1.msra.mxu0 %v2593
      %2617 = vmatprep.subr.mxu0 0.0
      %2618 = vmatpush1.msra.mxu0 %v2594
      %2619 = vmatprep.subr.mxu0 0.0
      %2620 = vmatpush1.msra.mxu0 %v2595
      %2621 = vmatprep.subr.mxu0 0.0
      %2622 = vmatpush1.msra.mxu0 %v2596
      %2623 = vmatprep.subr.mxu0 0.0
      %2624 = vmatpush1.msra.mxu0 %v2597
      %2625 = vmatprep.subr.mxu0 0.0
      %2626 = vmatpush1.msra.mxu0 %v2598
      %2627 = vmatprep.subr.mxu0 0.0
      %2628 = vmatpush1.msra.mxu0 %v2599
      %2629 = vmatprep.subr.mxu0 0.0
      %2630 = vmatpush1.msra.mxu0 0.0
      %2631 = vmatprep.subr.mxu0 0.0
      %2632 = vmatpush1.msra.mxu0 0.0
      %2633 = vmatprep.subr.mxu0 0.0
      %2634 = vmatpush1.msra.mxu0 0.0
      %2635 = vmatprep.subr.mxu0 0.0
      %2636 = vmatpush1.msra.mxu0 0.0
      %2637 = vmatprep.subr.mxu0 0.0
      %2638 = vmatpush1.msra.mxu0 0.0
      %2639 = vmatprep.subr.mxu0 0.0
      %2640 = vmatpush1.msra.mxu0 0.0
      %2641 = vmatprep.subr.mxu0 0.0
      %2642 = vmatpush1.msra.mxu0 0.0
      %2643 = vmatprep.subr.mxu0 0.0
      %2644 = vmatpush1.msra.mxu0 0.0
      %2645 = vmatprep.subr.mxu0 0.0
      %2646 = vmatpush1.msra.mxu0 0.0
      %2647 = vmatprep.subr.mxu0 0.0
      %2648 = vmatpush1.msra.mxu0 0.0
      %2649 = vmatprep.subr.mxu0 0.0
      %2650 = vmatpush1.msra.mxu0 0.0
      %2651 = vmatprep.subr.mxu0 0.0
      %2652 = vmatpush1.msra.mxu0 0.0
      %2653 = vmatprep.subr.mxu0 0.0
      %2654 = vmatpush1.msra.mxu0 0.0
      %2655 = vmatprep.subr.mxu0 0.0
      %2656 = vmatpush1.msra.mxu0 0.0
      %2657 = vmatprep.subr.mxu0 0.0
      %2658 = vmatpush1.msra.mxu0 0.0
      %2659 = vmatprep.subr.mxu0 0.0
      %2660 = vmatpush1.msra.mxu0 0.0
      %2661 = vmatprep.subr.mxu0 0.0
      %2662 = vmatpush1.msra.mxu0 0.0
      %2663 = vmatprep.subr.mxu0 0.0
      %2664 = vmatpush1.msra.mxu0 0.0
      %2665 = vmatprep.subr.mxu0 0.0
      %2666 = vmatpush1.msra.mxu0 0.0
      %2667 = vmatprep.subr.mxu0 0.0
      %2668 = vmatpush1.msra.mxu0 0.0
      %2669 = vmatprep.subr.mxu0 0.0
      %2670 = vmatpush1.msra.mxu0 0.0
      %2671 = vmatprep.subr.mxu0 0.0
      %2672 = vmatpush1.msra.mxu0 0.0
      %2673 = vmatprep.subr.mxu0 0.0
      %2674 = vmatpush1.msra.mxu0 0.0
      %2675 = vmatprep.subr.mxu0 0.0
      %2676 = vmatpush1.msra.mxu0 0.0
      %2677 = vmatprep.mubr.f32.mxu0 0.0
      %2678 = vmatmul.mubr.f32.gmra.mrb[0].mxu0 %v2608
      %v2679 = vpop.f32.mrb[0].mxu0
      %v2680 = vadd.f32 %v2605, %v2679
      %v2681 = vpop.f32.mrb[0].mxu0
      %2682 = vmatprep.mubr.f32.mxu0 0.0
      %2683 = vmatmul.mubr.f32.gmra.mrb[0].mxu0 %v2611
      %v2684 = vpop.f32.mrb[0].mxu0
      %v2685 = vadd.f32 %v2605, %v2684
      %v2686 = vpop.f32.mrb[0].mxu0
      %2687 = vdwg.mxu0
      %vm2690 = vcmask 1040384
      %v2691 = vrot.slane %v2680, 7
      %v2692 = vrot.slane %v2685, 7
      %v2693 = vsel %vm2690, %v2691, %v2692
      %v2697 = vmul.f32 %v542, %v2691
      %v2698 = vmul.f32 %v543, %v2693
      %v2699 = vmul.f32 %v544, %v2692
      %v2700 = vsel %vm715, %v2697, 0.0
      %2701 = vadd.xlane.f32.xlu0 %v2700
      %v2702 = vpop.xlane.xlu0 %2701
      %v2703 = vsel %vm567, %v2698, 0.0
      %2704 = vadd.xlane.f32.xlu0 %v2703
      %v2705 = vpop.xlane.xlu0 %2704
      %v2706 = vsel %vm722, %v2699, 0.0
      %2707 = vadd.xlane.f32.xlu0 %v2706
      %v2708 = vpop.xlane.xlu0 %2707
      %v2709 = vmul.f32 %v2702, %v726
      %v2710 = vmul.f32 %v2705, %v726
      %v2711 = vmul.f32 %v2708, %v726
      %v2712 = vsub.f32 %v2697, %v2709
      %v2713 = vsub.f32 %v2698, %v2710
      %v2714 = vsub.f32 %v2699, %v2711
      %v2715 = vmul.f32 %v2712, %v2712
      %v2716 = vmul.f32 %v2713, %v2713
      %v2717 = vmul.f32 %v2714, %v2714
      %v2718 = vsel %vm715, %v2715, 0.0
      %2719 = vadd.xlane.f32.xlu0 %v2718
      %v2720 = vpop.xlane.xlu0 %2719
      %v2721 = vsel %vm567, %v2716, 0.0
      %2722 = vadd.xlane.f32.xlu0 %v2721
      %v2723 = vpop.xlane.xlu0 %2722
      %v2724 = vsel %vm722, %v2717, 0.0
      %2725 = vadd.xlane.f32.xlu0 %v2724
      %v2726 = vpop.xlane.xlu0 %2725
      %v2727 = vmul.f32 %v2720, %v726
      %v2728 = vmul.f32 %v2723, %v726
      %v2729 = vmul.f32 %v2726, %v726
      %v2730 = vadd.f32 %v2727, 1e-05
      %v2731 = vadd.f32 %v2728, 1e-05
      %v2732 = vadd.f32 %v2729, 1e-05
      %v2733 = vrsqrt.pop %v2730
      %v2734 = vrsqrt.pop %v2731
      %v2735 = vrsqrt.pop %v2732
      %v2736 = vmul.f32 %v2712, %v2733
      %v2737 = vmul.f32 %v2713, %v2734
      %v2738 = vmul.f32 %v2714, %v2735
      %v2739 = vmul.f32 %v2736, %v761
      %v2740 = vmul.f32 %v2737, %v761
      %v2741 = vmul.f32 %v2738, %v761
      %v2742 = vadd.f32 %v2739, %v770
      %v2743 = vadd.f32 %v2740, %v770
      %v2744 = vadd.f32 %v2741, %v770
      %v2745 = vld [vmem:[%s10] sm:$0xff]
      %v2746 = vld [vmem:[%s10 + $0x8] sm:$0xff]
      %v2747 = vld [vmem:[%s10 + $0x10] sm:$0xff]
      %v2748 = vld [vmem:[%s10 + $0x18] sm:$0xff]
      %v2749 = vld [vmem:[%s10 + $0x20] sm:$0xff]
      %v2750 = vld [vmem:[%s10 + $0x28] sm:$0xff]
      %v2751 = vld [vmem:[%s10 + $0x30] sm:$0xff]
      %v2752 = vld [vmem:[%s10 + $0x38] sm:$0xff]
      %v2753 = vld [vmem:[%s10 + $0x40] sm:$0xff]
      %v2754 = vld [vmem:[%s10 + $0x48] sm:$0xff]
      %v2755 = vld [vmem:[%s10 + $0x50] sm:$0xff]
      %v2756 = vld [vmem:[%s10 + $0x58] sm:$0xff]
      %v2757 = vld [vmem:[%s10 + $0x60] sm:$0xff]
      %v2758 = vld [vmem:[%s10 + $0x68] sm:$0xff]
      %v2759 = vld [vmem:[%s10 + $0x70] sm:$0xff]
      %v2760 = vld [vmem:[%s10 + $0x78] sm:$0xff]
      %v2761 = vld [vmem:[%s11] sm:$0x3]
      %v2763 = vlaneseq
      %v2764 = vshrl.u32 %v2763, 7
      %v2765 = vsub.s32 0, %v2764
      %v2766 = vrot.slane %v2761, %v2765
      %v2767 = vlaneseq
      %v2768 = vshrl.u32 %v2767, 7
      %v2769 = vsub.s32 1, %v2768
      %v2770 = vrot.slane %v2761, %v2769
      %v2776 = vrot.slane %v2742, 1
      %v2777 = vrot.slane %v2743, 1
      %v2778 = vsel %vm793, %v2776, %v2777
      %v2779 = vrot.slane %v2744, 1
      %v2780 = vsel %vm793, %v2777, %v2779
      %v2781 = vsel %vm567, %v2778, 0
      %v2783 = vsel %vm567, %v2780, 0
      %2785 = vmatprep.subr.mxu0 %v2746
      %2786 = vmatpush1.msra.mxu0 %v2745
      %2787 = vmatprep.subr.mxu0 %v2748
      %2788 = vmatpush1.msra.mxu0 %v2747
      %2789 = vmatprep.subr.mxu0 %v2750
      %2790 = vmatpush1.msra.mxu0 %v2749
      %2791 = vmatprep.subr.mxu0 %v2752
      %2792 = vmatpush1.msra.mxu0 %v2751
      %2793 = vmatprep.subr.mxu0 %v2754
      %2794 = vmatpush1.msra.mxu0 %v2753
      %2795 = vmatprep.subr.mxu0 %v2756
      %2796 = vmatpush1.msra.mxu0 %v2755
      %2797 = vmatprep.subr.mxu0 %v2758
      %2798 = vmatpush1.msra.mxu0 %v2757
      %2799 = vmatprep.subr.mxu0 %v2760
      %2800 = vmatpush1.msra.mxu0 %v2759
      %2801 = vmatprep.subr.mxu0 0.0
      %2802 = vmatpush1.msra.mxu0 0.0
      %2803 = vmatprep.subr.mxu0 0.0
      %2804 = vmatpush1.msra.mxu0 0.0
      %2805 = vmatprep.subr.mxu0 0.0
      %2806 = vmatpush1.msra.mxu0 0.0
      %2807 = vmatprep.subr.mxu0 0.0
      %2808 = vmatpush1.msra.mxu0 0.0
      %2809 = vmatprep.subr.mxu0 0.0
      %2810 = vmatpush1.msra.mxu0 0.0
      %2811 = vmatprep.subr.mxu0 0.0
      %2812 = vmatpush1.msra.mxu0 0.0
      %2813 = vmatprep.subr.mxu0 0.0
      %2814 = vmatpush1.msra.mxu0 0.0
      %2815 = vmatprep.subr.mxu0 0.0
      %2816 = vmatpush1.msra.mxu0 0.0
      %2817 = vmatprep.subr.mxu0 0.0
      %2818 = vmatpush1.msra.mxu0 0.0
      %2819 = vmatprep.subr.mxu0 0.0
      %2820 = vmatpush1.msra.mxu0 0.0
      %2821 = vmatprep.subr.mxu0 0.0
      %2822 = vmatpush1.msra.mxu0 0.0
      %2823 = vmatprep.subr.mxu0 0.0
      %2824 = vmatpush1.msra.mxu0 0.0
      %2825 = vmatprep.subr.mxu0 0.0
      %2826 = vmatpush1.msra.mxu0 0.0
      %2827 = vmatprep.subr.mxu0 0.0
      %2828 = vmatpush1.msra.mxu0 0.0
      %2829 = vmatprep.subr.mxu0 0.0
      %2830 = vmatpush1.msra.mxu0 0.0
      %2831 = vmatprep.subr.mxu0 0.0
      %2832 = vmatpush1.msra.mxu0 0.0
      %2833 = vmatprep.subr.mxu0 0.0
      %2834 = vmatpush1.msra.mxu0 0.0
      %2835 = vmatprep.subr.mxu0 0.0
      %2836 = vmatpush1.msra.mxu0 0.0
      %2837 = vmatprep.subr.mxu0 0.0
      %2838 = vmatpush1.msra.mxu0 0.0
      %2839 = vmatprep.subr.mxu0 0.0
      %2840 = vmatpush1.msra.mxu0 0.0
      %2841 = vmatprep.subr.mxu0 0.0
      %2842 = vmatpush1.msra.mxu0 0.0
      %2843 = vmatprep.subr.mxu0 0.0
      %2844 = vmatpush1.msra.mxu0 0.0
      %2845 = vmatprep.subr.mxu0 0.0
      %2846 = vmatpush1.msra.mxu0 0.0
      %2847 = vmatprep.subr.mxu0 0.0
      %2848 = vmatpush1.msra.mxu0 0.0
      %2849 = vmatprep.mubr.f32.mxu0 0.0
      %2850 = vmatmul.mubr.f32.gmra.mrb[0].mxu0 %v2781
      %v2851 = vpop.f32.mrb[0].mxu0
      %v2852 = vadd.f32 %v2766, %v2851
      %v2853 = vpop.f32.mrb[0].mxu0
      %v2854 = vadd.f32 %v2770, %v2853
      %2855 = vmatprep.mubr.f32.mxu0 0.0
      %2856 = vmatmul.mubr.f32.gmra.mrb[0].mxu0 %v2783
      %v2857 = vpop.f32.mrb[0].mxu0
      %v2858 = vadd.f32 %v2766, %v2857
      %v2859 = vpop.f32.mrb[0].mxu0
      %v2860 = vadd.f32 %v2770, %v2859
      %2861 = vdwg.mxu0
      %v2862 = vmul.f32 %v2852, 0.5
      %v2863 = vmul.f32 %v2854, 0.5
      %v2864 = vmul.f32 %v2858, 0.5
      %v2865 = vmul.f32 %v2860, 0.5
      %v2866 = vmul.f32 %v2852, 0.70710677
      %v2867 = vmul.f32 %v2854, 0.70710677
      %v2868 = vmul.f32 %v2858, 0.70710677
      %v2869 = vmul.f32 %v2860, 0.70710677
      %v2870 = vand.u32 2147483647, %v2866
      %v2871 = vand.u32 2147483647, %v2867
      %v2872 = vand.u32 2147483647, %v2868
      %v2873 = vand.u32 2147483647, %v2869
      %v2874 = vmul.f32 %v2870, 0.5
      %v2875 = vmul.f32 %v2871, 0.5
      %v2876 = vmul.f32 %v2872, 0.5
      %v2877 = vmul.f32 %v2873, 0.5
      %v2878 = vadd.f32 %v2874, 1.0
      %v2879 = vadd.f32 %v2875, 1.0
      %v2880 = vadd.f32 %v2876, 1.0
      %v2881 = vadd.f32 %v2877, 1.0
      %v2882 = vrcp.pop %v2878
      %v2883 = vmul.f32 1.0, %v2882
      %v2884 = vrcp.pop %v2879
      %v2885 = vmul.f32 1.0, %v2884
      %v2886 = vrcp.pop %v2880
      %v2887 = vmul.f32 1.0, %v2886
      %v2888 = vrcp.pop %v2881
      %v2889 = vmul.f32 1.0, %v2888
      %v2890 = vmul.f32 %v2883, 0.17087276
      %v2891 = vmul.f32 %v2885, 0.17087276
      %v2892 = vmul.f32 %v2887, 0.17087276
      %v2893 = vmul.f32 %v2889, 0.17087276
      %v2894 = vadd.f32 %v2890, -0.82215226
      %v2895 = vadd.f32 %v2891, -0.82215226
      %v2896 = vadd.f32 %v2892, -0.82215226
      %v2897 = vadd.f32 %v2893, -0.82215226
      %v2898 = vmul.f32 %v2883, %v2894
      %v2899 = vmul.f32 %v2885, %v2895
      %v2900 = vmul.f32 %v2887, %v2896
      %v2901 = vmul.f32 %v2889, %v2897
      %v2902 = vadd.f32 %v2898, 1.4885159
      %v2903 = vadd.f32 %v2899, 1.4885159
      %v2904 = vadd.f32 %v2900, 1.4885159
      %v2905 = vadd.f32 %v2901, 1.4885159
      %v2906 = vmul.f32 %v2883, %v2902
      %v2907 = vmul.f32 %v2885, %v2903
      %v2908 = vmul.f32 %v2887, %v2904
      %v2909 = vmul.f32 %v2889, %v2905
      %v2910 = vadd.f32 %v2906, -1.135204
      %v2911 = vadd.f32 %v2907, -1.135204
      %v2912 = vadd.f32 %v2908, -1.135204
      %v2913 = vadd.f32 %v2909, -1.135204
      %v2914 = vmul.f32 %v2883, %v2910
      %v2915 = vmul.f32 %v2885, %v2911
      %v2916 = vmul.f32 %v2887, %v2912
      %v2917 = vmul.f32 %v2889, %v2913
      %v2918 = vadd.f32 %v2914, 0.27886808
      %v2919 = vadd.f32 %v2915, 0.27886808
      %v2920 = vadd.f32 %v2916, 0.27886808
      %v2921 = vadd.f32 %v2917, 0.27886808
      %v2922 = vmul.f32 %v2883, %v2918
      %v2923 = vmul.f32 %v2885, %v2919
      %v2924 = vmul.f32 %v2887, %v2920
      %v2925 = vmul.f32 %v2889, %v2921
      %v2926 = vadd.f32 %v2922, -0.18628806
      %v2927 = vadd.f32 %v2923, -0.18628806
      %v2928 = vadd.f32 %v2924, -0.18628806
      %v2929 = vadd.f32 %v2925, -0.18628806
      %v2930 = vmul.f32 %v2883, %v2926
      %v2931 = vmul.f32 %v2885, %v2927
      %v2932 = vmul.f32 %v2887, %v2928
      %v2933 = vmul.f32 %v2889, %v2929
      %v2934 = vadd.f32 %v2930, 0.09678418
      %v2935 = vadd.f32 %v2931, 0.09678418
      %v2936 = vadd.f32 %v2932, 0.09678418
      %v2937 = vadd.f32 %v2933, 0.09678418
      %v2938 = vmul.f32 %v2883, %v2934
      %v2939 = vmul.f32 %v2885, %v2935
      %v2940 = vmul.f32 %v2887, %v2936
      %v2941 = vmul.f32 %v2889, %v2937
      %v2942 = vadd.f32 %v2938, 0.37409195
      %v2943 = vadd.f32 %v2939, 0.37409195
      %v2944 = vadd.f32 %v2940, 0.37409195
      %v2945 = vadd.f32 %v2941, 0.37409195
      %v2946 = vmul.f32 %v2883, %v2942
      %v2947 = vmul.f32 %v2885, %v2943
      %v2948 = vmul.f32 %v2887, %v2944
      %v2949 = vmul.f32 %v2889, %v2945
      %v2950 = vadd.f32 %v2946, 1.0000237
      %v2951 = vadd.f32 %v2947, 1.0000237
      %v2952 = vadd.f32 %v2948, 1.0000237
      %v2953 = vadd.f32 %v2949, 1.0000237
      %v2954 = vmul.f32 %v2883, %v2950
      %v2955 = vmul.f32 %v2885, %v2951
      %v2956 = vmul.f32 %v2887, %v2952
      %v2957 = vmul.f32 %v2889, %v2953
      %v2958 = vadd.f32 %v2954, -1.2655122
      %v2959 = vadd.f32 %v2955, -1.2655122
      %v2960 = vadd.f32 %v2956, -1.2655122
      %v2961 = vadd.f32 %v2957, -1.2655122
      %v2962 = vsub.f32 0.0, %v2870
      %v2963 = vsub.f32 0.0, %v2871
      %v2964 = vsub.f32 0.0, %v2872
      %v2965 = vsub.f32 0.0, %v2873
      %v2966 = vmul.f32 %v2962, %v2870
      %v2967 = vmul.f32 %v2963, %v2871
      %v2968 = vmul.f32 %v2964, %v2872
      %v2969 = vmul.f32 %v2965, %v2873
      %v2970 = vadd.f32 %v2966, %v2958
      %v2971 = vadd.f32 %v2967, %v2959
      %v2972 = vadd.f32 %v2968, %v2960
      %v2973 = vadd.f32 %v2969, %v2961
      %v2974 = vmul.f32 %v2970, 1.442695
      %v2975 = vpow.pop %v2974
      %v2976 = vmul.f32 %v2971, 1.442695
      %v2977 = vpow.pop %v2976
      %v2978 = vmul.f32 %v2972, 1.442695
      %v2979 = vpow.pop %v2978
      %v2980 = vmul.f32 %v2973, 1.442695
      %v2981 = vpow.pop %v2980
      %v2982 = vmul.f32 %v2883, %v2975
      %v2983 = vmul.f32 %v2885, %v2977
      %v2984 = vmul.f32 %v2887, %v2979
      %v2985 = vmul.f32 %v2889, %v2981
      %v2986 = vsub.f32 1.0, %v2982
      %v2987 = vsub.f32 1.0, %v2983
      %v2988 = vsub.f32 1.0, %v2984
      %v2989 = vsub.f32 1.0, %v2985
      %vm2990 = vcmp.ge.f32.partialorder %v2866, 0.0
      %vm2991 = vcmp.ge.f32.partialorder %v2867, 0.0
      %vm2992 = vcmp.ge.f32.partialorder %v2868, 0.0
      %vm2993 = vcmp.ge.f32.partialorder %v2869, 0.0
      %v2994 = vsub.f32 0.0, %v2986
      %v2995 = vsub.f32 0.0, %v2987
      %v2996 = vsub.f32 0.0, %v2988
      %v2997 = vsub.f32 0.0, %v2989
      %v2998 = vsel %vm2990, %v2986, %v2994
      %v2999 = vsel %vm2991, %v2987, %v2995
      %v3000 = vsel %vm2992, %v2988, %v2996
      %v3001 = vsel %vm2993, %v2989, %v2997
      %v3002 = vadd.f32 %v2998, 1.0
      %v3003 = vadd.f32 %v2999, 1.0
      %v3004 = vadd.f32 %v3000, 1.0
      %v3005 = vadd.f32 %v3001, 1.0
      %v3006 = vmul.f32 %v2862, %v3002
      %v3007 = vmul.f32 %v2863, %v3003
      %v3008 = vmul.f32 %v2864, %v3004
      %v3009 = vmul.f32 %v2865, %v3005
      %v3010 = vld [vmem:[%s12] sm:$0xff]
      %v3011 = vld [vmem:[%s12 + $0x8] sm:$0xff]
      %v3012 = vld [vmem:[%s12 + $0x10] sm:$0xff]
      %v3013 = vld [vmem:[%s12 + $0x18] sm:$0xff]
      %v3014 = vld [vmem:[%s12 + $0x20] sm:$0xff]
      %v3015 = vld [vmem:[%s12 + $0x28] sm:$0xff]
      %v3016 = vld [vmem:[%s12 + $0x30] sm:$0xff]
      %v3017 = vld [vmem:[%s12 + $0x38] sm:$0xff]
      %v3018 = vld [vmem:[%s12 + $0x40] sm:$0xff]
      %v3019 = vld [vmem:[%s12 + $0x48] sm:$0xff]
      %v3020 = vld [vmem:[%s12 + $0x50] sm:$0xff]
      %v3021 = vld [vmem:[%s12 + $0x58] sm:$0xff]
      %v3022 = vld [vmem:[%s12 + $0x60] sm:$0xff]
      %v3023 = vld [vmem:[%s12 + $0x68] sm:$0xff]
      %v3024 = vld [vmem:[%s12 + $0x70] sm:$0xff]
      %v3025 = vld [vmem:[%s12 + $0x78] sm:$0xff]
      %v3026 = vld [vmem:[%s12 + $0x80] sm:$0xff]
      %v3027 = vld [vmem:[%s12 + $0x88] sm:$0xff]
      %v3028 = vld [vmem:[%s12 + $0x90] sm:$0xff]
      %v3029 = vld [vmem:[%s12 + $0x98] sm:$0xff]
      %v3030 = vld [vmem:[%s12 + $0xa0] sm:$0xff]
      %v3031 = vld [vmem:[%s12 + $0xa8] sm:$0xff]
      %v3032 = vld [vmem:[%s12 + $0xb0] sm:$0xff]
      %v3033 = vld [vmem:[%s12 + $0xb8] sm:$0xff]
      %v3034 = vld [vmem:[%s12 + $0xc0] sm:$0xff]
      %v3035 = vld [vmem:[%s12 + $0xc8] sm:$0xff]
      %v3036 = vld [vmem:[%s12 + $0xd0] sm:$0xff]
      %v3037 = vld [vmem:[%s12 + $0xd8] sm:$0xff]
      %v3038 = vld [vmem:[%s12 + $0xe0] sm:$0xff]
      %v3039 = vld [vmem:[%s12 + $0xe8] sm:$0xff]
      %v3040 = vld [vmem:[%s12 + $0xf0] sm:$0xff]
      %v3041 = vld [vmem:[%s12 + $0xf8] sm:$0xff]
      %v3042 = vld [vmem:[%s13] sm:$0x1]
      %v3044 = vlaneseq
      %v3045 = vshrl.u32 %v3044, 7
      %v3046 = vsub.s32 0, %v3045
      %v3047 = vrot.slane %v3042, %v3046
      %3049 = vmatprep.subr.mxu0 0.0
      %3050 = vmatpush1.msra.mxu0 %v3010
      %3051 = vmatprep.subr.mxu0 0.0
      %3052 = vmatpush1.msra.mxu0 %v3011
      %3053 = vmatprep.subr.mxu0 0.0
      %3054 = vmatpush1.msra.mxu0 %v3012
      %3055 = vmatprep.subr.mxu0 0.0
      %3056 = vmatpush1.msra.mxu0 %v3013
      %3057 = vmatprep.subr.mxu0 0.0
      %3058 = vmatpush1.msra.mxu0 %v3014
      %3059 = vmatprep.subr.mxu0 0.0
      %3060 = vmatpush1.msra.mxu0 %v3015
      %3061 = vmatprep.subr.mxu0 0.0
      %3062 = vmatpush1.msra.mxu0 %v3016
      %3063 = vmatprep.subr.mxu0 0.0
      %3064 = vmatpush1.msra.mxu0 %v3017
      %3065 = vmatprep.subr.mxu0 0.0
      %3066 = vmatpush1.msra.mxu0 %v3018
      %3067 = vmatprep.subr.mxu0 0.0
      %3068 = vmatpush1.msra.mxu0 %v3019
      %3069 = vmatprep.subr.mxu0 0.0
      %3070 = vmatpush1.msra.mxu0 %v3020
      %3071 = vmatprep.subr.mxu0 0.0
      %3072 = vmatpush1.msra.mxu0 %v3021
      %3073 = vmatprep.subr.mxu0 0.0
      %3074 = vmatpush1.msra.mxu0 %v3022
      %3075 = vmatprep.subr.mxu0 0.0
      %3076 = vmatpush1.msra.mxu0 %v3023
      %3077 = vmatprep.subr.mxu0 0.0
      %3078 = vmatpush1.msra.mxu0 %v3024
      %3079 = vmatprep.subr.mxu0 0.0
      %3080 = vmatpush1.msra.mxu0 %v3025
      %3081 = vmatprep.subr.mxu0 0.0
      %3082 = vmatpush1.msra.mxu0 %v3026
      %3083 = vmatprep.subr.mxu0 0.0
      %3084 = vmatpush1.msra.mxu0 %v3027
      %3085 = vmatprep.subr.mxu0 0.0
      %3086 = vmatpush1.msra.mxu0 %v3028
      %3087 = vmatprep.subr.mxu0 0.0
      %3088 = vmatpush1.msra.mxu0 %v3029
      %3089 = vmatprep.subr.mxu0 0.0
      %3090 = vmatpush1.msra.mxu0 %v3030
      %3091 = vmatprep.subr.mxu0 0.0
      %3092 = vmatpush1.msra.mxu0 %v3031
      %3093 = vmatprep.subr.mxu0 0.0
      %3094 = vmatpush1.msra.mxu0 %v3032
      %3095 = vmatprep.subr.mxu0 0.0
      %3096 = vmatpush1.msra.mxu0 %v3033
      %3097 = vmatprep.subr.mxu0 0.0
      %3098 = vmatpush1.msra.mxu0 %v3034
      %3099 = vmatprep.subr.mxu0 0.0
      %3100 = vmatpush1.msra.mxu0 %v3035
      %3101 = vmatprep.subr.mxu0 0.0
      %3102 = vmatpush1.msra.mxu0 %v3036
      %3103 = vmatprep.subr.mxu0 0.0
      %3104 = vmatpush1.msra.mxu0 %v3037
      %3105 = vmatprep.subr.mxu0 0.0
      %3106 = vmatpush1.msra.mxu0 %v3038
      %3107 = vmatprep.subr.mxu0 0.0
      %3108 = vmatpush1.msra.mxu0 %v3039
      %3109 = vmatprep.subr.mxu0 0.0
      %3110 = vmatpush1.msra.mxu0 %v3040
      %3111 = vmatprep.subr.mxu0 0.0
      %3112 = vmatpush1.msra.mxu0 %v3041
      %3113 = vmatprep.mubr.f32.mxu0 %v3007
      %3114 = vmatmul.mubr.f32.gmra.mrb[0].mxu0 %v3006
      %v3115 = vpop.f32.mrb[0].mxu0
      %v3116 = vadd.f32 %v3047, %v3115
      %v3117 = vpop.f32.mrb[0].mxu0
      %3118 = vmatprep.mubr.f32.mxu0 %v3009
      %3119 = vmatmul.mubr.f32.gmra.mrb[0].mxu0 %v3008
      %v3120 = vpop.f32.mrb[0].mxu0
      %v3121 = vadd.f32 %v3047, %v3120
      %v3122 = vpop.f32.mrb[0].mxu0
      %3123 = vdwg.mxu0
      %v3127 = vrot.slane %v2697, 1
      %v3128 = vrot.slane %v2698, 1
      %v3129 = vsel %vm793, %v3127, %v3128
      %v3130 = vrot.slane %v2699, 1
      %v3131 = vsel %vm793, %v3128, %v3130
      %v3134 = vadd.f32 %v3116, %v3129
      %v3135 = vadd.f32 %v3121, %v3131
      %v3136 = vlaneseq
      %v3137 = vshrl.u32 %v3136, 7
      %v3138 = vsub.s32 0, %v3137
      %v3139 = vrot.slane %v714, %v3138
      %v3140 = vmul.f32 %v3134, %v3139
      %v3141 = vmul.f32 %v3135, %v3139
      %3143 = vrot.lane.b32.xlu0 %v3139, 64
      %v3144 = vpop.permute.xlu0 %3143
      %v3146 = vadd.f32 %v3140, %v3144
      %v3147 = vadd.f32 %v3141, %v3144
      %vm3148 = vcmask 517121
      %3149 = vst.msk [vmem:[%s541 - $0x1] sm:$0x2] %vm3148, %v542
      %3150 = vst.msk [vmem:[%s541 + $0x1] sm:$0xff] %vm567, %v3146
      %3151 = vst.msk [vmem:[%s541 + $0x9] sm:$0xff] %vm567, %v3147
      %p3152 = scmp.lt.s32.totalorder %s27, 1
      %s3153 = scalar_select %p3152, %s27, 1
      %s3154 = smul.addr %s3153, 3
      %s3155 = smul.addr %s3154, 8
      %s3156 = scalar_lea.vmem %s16, %s3155
      // Predicated region
      $region85: #{inter_transformer_encoder_block.1} parent=83 // pred_check
        %p3157 = pneg %p391
      $region86: #{inter_transformer_encoder_block.1} parent=83 // pred_check_branch
        %3159 = sbr.rel (%p3157) target = $region88
      $region87: #{inter_transformer_encoder_block.1} parent=83 // pred_region
        _
      $region88: #{inter_transformer_encoder_block.1} parent=83 // pred_fallthru
        _
    $region84: #{inter_transformer_encoder_block.1} parent=5 // pred_fallthru
      _
    %p3160 = scmp.le.s32.totalorder 2, %s22
    // Predicated region
    $region89: #{inter_transformer_encoder_block.1} parent=5 // pred_check
      %p3161 = pneg %p3160
    $region90: #{inter_transformer_encoder_block.1} parent=5 // pred_check_branch
      %3163 = sbr.rel (%p3161) target = $region92
    $region91: #{inter_transformer_encoder_block.1} parent=5 // pred_region
      %s3164 = ssub.s32 %s22, 2
      // Predicated region
      $region93: #{inter_transformer_encoder_block.1} parent=91 // pred_check
        %p3165 = pneg %p397
      $region94: #{inter_transformer_encoder_block.1} parent=91 // pred_check_branch
        %3167 = sbr.rel (%p3165) target = $region96
      $region95: #{inter_transformer_encoder_block.1} parent=91 // pred_region
        %p3168 = scmp.lt.s32.totalorder %s28, 1
        %s3169 = scalar_select %p3168, %s28, 1
        %s3170 = smul.addr %s3169, 3
        %s3171 = smul.addr %s3170, 8
        %s3172 = scalar_lea.vmem %s16, %s3171
      $region96: #{inter_transformer_encoder_block.1} parent=91 // pred_fallthru
        _
    $region92: #{inter_transformer_encoder_block.1} parent=5 // pred_fallthru
      _
  $region6: #{inter_transformer_encoder_block.1} parent=0 // loop_footer
    %s26 = sadd.s32 1, %s22
  $region7: #{inter_transformer_encoder_block.1} parent=0 // loop_footer_branch
    %21 = sbr.rel target = $region3
  $region8: #{inter_transformer_encoder_block.1} parent=0 // loop_exit
    _

</llo_original>
